<compile_context>
chip_gen: v6e
topology: v6e:2x2x1
jax: 0.10.0
libtpu: 0.0.40
codegen_flags: <defaults>
</compile_context>

<pallas_src>
import math
from functools import partial

import jax
import jax.numpy as jnp
from jax.experimental import pallas as pl
from jax.experimental.pallas import tpu as pltpu


def _round_up(x, m):
    return ((x + m - 1) // m) * m


# ----------------------------- Pallas GRU recurrence -----------------------------

def _gru_rec_kernel(gi_ref, whh_ref, bhhn_ref, out_ref, hfin_ref, h_scr,
                    *, tt, last_chunk, last_i):
    """GRU recurrence over one chunk of `tt` time steps for one batch block.

    gi_ref  : (TT, Bt, 3*Hp) f32  precomputed x_t @ W_ih^T + b_ih (+ b_hh r/z)
    whh_ref : (Hp, 3*Hp)          hidden->hidden weights (transposed, gate-padded)
    bhhn_ref: (1, Hp)             n-gate hidden bias (gate-padded)
    out_ref : (TT, Bt, Hp)        per-step hidden outputs
    hfin_ref: (Bt, Hp)            final hidden state (written at step T-1 only)
    h_scr   : (Bt, Hp) f32        VMEM-resident hidden carry across time chunks
    """
    c = pl.program_id(1)                      # time-chunk axis (sequential)

    @pl.when(c == 0)
    def _init():
        h_scr[...] = jnp.zeros_like(h_scr)

    h = h_scr[...]                            # (Bt, Hp) f32
    bt, hp = h.shape

    # Hoisted out of the unrolled time loop: one weight read and one bias
    # broadcast per chunk (not per step).
    whh = whh_ref[...]                        # (Hp, 3Hp)
    bhhn = jnp.broadcast_to(bhhn_ref[...], (bt, hp))

    for i in range(tt):                       # static unroll over the time chunk
        gi = gi_ref[i]                        # (Bt, 3Hp)
        gh = jnp.dot(h.astype(whh.dtype), whh,
                     preferred_element_type=jnp.float32)
        # Lane-aligned gate slices (each band is Hp = multiple of 128 wide).
        r = jax.nn.sigmoid(gi[:, 0 * hp:1 * hp] + gh[:, 0 * hp:1 * hp])
        z = jax.nn.sigmoid(gi[:, 1 * hp:2 * hp] + gh[:, 1 * hp:2 * hp])
        n = jnp.tanh(gi[:, 2 * hp:3 * hp] + r * (gh[:, 2 * hp:3 * hp] + bhhn))
        h = n + z * (h - n)                   # == (1-z)*n + z*h, one fewer VPU op
        out_ref[i] = h.astype(out_ref.dtype)

        if i == last_i:                       # statically known final step
            h_last = h

            @pl.when(c == last_chunk)
            def _write_final():
                hfin_ref[...] = h_last.astype(hfin_ref.dtype)

    h_scr[...] = h


def _vmem_bytes_estimate(tt, btile, hp, w_itemsize):
    gi = 2 * tt * btile * 3 * hp * 4          # GI chunk, double-buffered
    out = 2 * tt * btile * hp * 4             # output chunk, double-buffered
    whh = hp * 3 * hp * w_itemsize            # weights, single-buffered
    bhh = hp * 4                              # n-gate hidden bias
    hscr = btile * hp * 4                     # hidden carry scratch
    hfin = 2 * btile * hp * 4                 # final-state output block
    return gi + out + whh + bhh + hscr + hfin


def gru_layer_pallas(x_seq, w_ih, w_hh, b_ih, b_hh, *, time_chunk=32,
                     matmul_dtype=jnp.float32,
                     vmem_budget_bytes=48 * 1024 * 1024):
    """One GRU layer.

    x_seq : (T, B, I) f32
    w_ih  : (3H, I), w_hh : (3H, H), b_ih/b_hh : (3H,) (PyTorch layout, gates [r|z|n])
    Returns (outputs (T, B, H), final_hidden (B, H)).
    """
    T, B, I = x_seq.shape
    H = w_hh.shape[1]

    Hp = _round_up(H, 128)                    # lane-align every gate band / output dim
    Bp = _round_up(B, 8)                      # fill f32 sublanes / MXU rows

    # Batch blocks: expose a parallel grid axis so v7x's second TensorCore can
    # shard the recurrence over batch (neutral on single-TC v5e/v6e).
    if Bp >= 16 and (Bp // 2) % 8 == 0:
        Btile = Bp // 2
    else:
        Btile = Bp

    w_itemsize = jnp.dtype(matmul_dtype).itemsize

    # Cap the time chunk so the resident chunk fits the VMEM budget (v7x has
    # only 64 MiB physical VMEM per TC); prefer a TT that divides T.
    TT = max(1, min(time_chunk, T))
    while TT > 1 and _vmem_bytes_estimate(TT, Btile, Hp, w_itemsize) > vmem_budget_bytes:
        TT //= 2
    if T % TT != 0:
        for d in range(TT, 0, -1):
            if T % d == 0:
                if d >= max(1, TT // 2):
                    TT = d
                break
    Tp = _round_up(T, TT)

    w_ih = jnp.asarray(w_ih, jnp.float32)
    w_hh = jnp.asarray(w_hh, jnp.float32)
    b_ih = jnp.asarray(b_ih, jnp.float32)
    b_hh = jnp.asarray(b_hh, jnp.float32)

    # Gate-padded layouts: gate g occupies columns [g*Hp, g*Hp + H); the rest is
    # zero, which keeps the padded hidden columns exactly zero through the
    # recurrence (relies on h0 == 0). The r- and z-gate hidden biases are folded
    # into the hoisted input-projection bias; only the n-gate hidden bias stays
    # in-kernel (it must be inside the r* product).
    wih_p = jnp.zeros((I, 3 * Hp), jnp.float32)
    whh_p = jnp.zeros((Hp, 3 * Hp), jnp.float32)
    bih_p = jnp.zeros((3 * Hp,), jnp.float32)
    for g in range(3):
        wih_p = wih_p.at[:, g * Hp:g * Hp + H].set(w_ih[g * H:(g + 1) * H, :].T)
        whh_p = whh_p.at[:H, g * Hp:g * Hp + H].set(w_hh[g * H:(g + 1) * H, :].T)
        bias = b_ih[g * H:(g + 1) * H]
        if g < 2:
            bias = bias + b_hh[g * H:(g + 1) * H]
        bih_p = bih_p.at[g * Hp:g * Hp + H].set(bias)
    bhhn_p = jnp.zeros((1, Hp), jnp.float32).at[0, :H].set(b_hh[2 * H:3 * H])

    # --- Hoisted input projection. Pad the I-wide input BEFORE the matmul so we
    # --- never copy the 3*Hp-wide GI tensor through HBM just to pad it.
    x_p = jnp.pad(x_seq.astype(jnp.float32), ((0, Tp - T), (0, Bp - B), (0, 0)))
    gi_all = (x_p.reshape(Tp * Bp, I) @ wih_p + bih_p).reshape(Tp, Bp, 3 * Hp)

    whh_p = whh_p.astype(matmul_dtype)

    kernel = partial(_gru_rec_kernel, tt=TT,
                     last_chunk=(T - 1) // TT, last_i=(T - 1) % TT)

    vmem_limit = _vmem_bytes_estimate(TT, Btile, Hp, w_itemsize)
    vmem_limit = min(int(vmem_limit * 1.25) + (2 << 20), 56 << 20)
    vmem_limit = max(vmem_limit, 16 << 20)

    def build(single_buffer_consts):
        const_kw = ({"pipeline_mode": pl.Buffered(1)}
                    if single_buffer_consts else {})
        return pl.pallas_call(
            kernel,
            grid_spec=pltpu.PrefetchScalarGridSpec(
                num_scalar_prefetch=0,
                grid=(Bp // Btile, Tp // TT),
                in_specs=[
                    pl.BlockSpec((TT, Btile, 3 * Hp), lambda b, c: (c, b, 0)),
                    pl.BlockSpec((Hp, 3 * Hp), lambda b, c: (0, 0), **const_kw),
                    pl.BlockSpec((1, Hp), lambda b, c: (0, 0), **const_kw),
                ],
                out_specs=[
                    pl.BlockSpec((TT, Btile, Hp), lambda b, c: (c, b, 0)),
                    pl.BlockSpec((Btile, Hp), lambda b, c: (b, 0)),
                ],
                scratch_shapes=[pltpu.VMEM((Btile, Hp), jnp.float32)],
            ),
            out_shape=(
                jax.ShapeDtypeStruct((Tp, Bp, Hp), jnp.float32),
                jax.ShapeDtypeStruct((Bp, Hp), jnp.float32),
            ),
            compiler_params=pltpu.CompilerParams(
                dimension_semantics=("parallel", "arbitrary"),
                vmem_limit_bytes=vmem_limit),
        )

    try:
        out_p, hfin_p = build(True)(gi_all, whh_p, bhhn_p)
    except Exception:
        # Fallback without single-buffered constants (correctness over VMEM).
        out_p, hfin_p = build(False)(gi_all, whh_p, bhhn_p)

    return out_p[:T, :B, :H], hfin_p[:B, :H]


# --------------------------- Seq2SeqEncoder forward --------------------------

def seq2seq_encoder_forward(x_tokens, emb_table, gru_params, *, time_chunk=32,
                            matmul_dtype=jnp.float32):
    """x_tokens: (batch, seq) int32.

    Returns (outputs (seq, batch, H), state (num_layers, batch, H)) — matching
    torch: embs = embedding(x.t()); outputs, state = GRU(embs)."""
    x_t = x_tokens.T                                 # (seq, batch)
    embs = jnp.take(emb_table, x_t, axis=0)          # (seq, batch, embed) [XLA gather]
    layer_in = embs
    states = []
    for (w_ih, w_hh, b_ih, b_hh) in gru_params:
        layer_out, h_fin = gru_layer_pallas(layer_in, w_ih, w_hh, b_ih, b_hh,
                                            time_chunk=time_chunk,
                                            matmul_dtype=matmul_dtype)
        states.append(h_fin)
        layer_in = layer_out
        # TODO(synk): inter-layer dropout (dropout=0.0 default, so omitted).
    return layer_in, jnp.stack(states, axis=0)


# ------------------------------ parameter init -------------------------------

def _xavier_uniform(key, shape):
    fan_out, fan_in = shape
    a = math.sqrt(6.0 / (fan_in + fan_out))
    return jax.random.uniform(key, shape, jnp.float32, -a, a)


def init_params(key, vocab_size, embed_size, num_hiddens, num_layers):
    keys = jax.random.split(key, 1 + 4 * num_layers)
    emb_table = jax.random.normal(keys[0], (vocab_size, embed_size), jnp.float32)
    gru_params = []
    bound = 1.0 / math.sqrt(num_hiddens)
    for layer in range(num_layers):
        in_size = embed_size if layer == 0 else num_hiddens
        k = keys[1 + 4 * layer: 1 + 4 * (layer + 1)]
        w_ih = _xavier_uniform(k[0], (3 * num_hiddens, in_size))
        w_hh = _xavier_uniform(k[1], (3 * num_hiddens, num_hiddens))
        b_ih = jax.random.uniform(k[2], (3 * num_hiddens,), jnp.float32, -bound, bound)
        b_hh = jax.random.uniform(k[3], (3 * num_hiddens,), jnp.float32, -bound, bound)
        gru_params.append((w_ih, w_hh, b_ih, b_hh))
    return emb_table, gru_params


# ------------------------------ pure-JAX reference ----------------------------

def _gru_layer_ref(x_seq, w_ih, w_hh, b_ih, b_hh):
    """PyTorch nn.GRU semantics: n = tanh(gi_n + r * gh_n)."""
    H = w_hh.shape[1]

    def step(h, x):
        gi = x @ w_ih.T + b_ih
        gh = h @ w_hh.T + b_hh
        r = jax.nn.sigmoid(gi[:, :H] + gh[:, :H])
        z = jax.nn.sigmoid(gi[:, H:2 * H] + gh[:, H:2 * H])
        n = jnp.tanh(gi[:, 2 * H:] + r * gh[:, 2 * H:])
        h_new = (1.0 - z) * n + z * h
        return h_new, h_new

    h0 = jnp.zeros((x_seq.shape[1], H), jnp.float32)
    h_fin, outs = jax.lax.scan(step, h0, x_seq)
    return outs, h_fin


def seq2seq_encoder_ref(x_tokens, emb_table, gru_params):
    embs = jnp.take(emb_table, x_tokens.T, axis=0)
    layer_in = embs
    states = []
    for (w_ih, w_hh, b_ih, b_hh) in gru_params:
        layer_in, h_fin = _gru_layer_ref(layer_in, w_ih, w_hh, b_ih, b_hh)
        states.append(h_fin)
    return layer_in, jnp.stack(states, axis=0)


# ------------------------------------ main ------------------------------------

if __name__ == "__main__":
    vocab_size, embed_size, num_hiddens, num_layers = 50, 16, 32, 2
    batch, seq = 2, 8

    key = jax.random.PRNGKey(0)
    k_tok, k_par = jax.random.split(key)
    x = jax.random.randint(k_tok, (batch, seq), 0, vocab_size, dtype=jnp.int32)
    emb_table, gru_params = init_params(k_par, vocab_size, embed_size,
                                        num_hiddens, num_layers)

    ref_out, ref_state = seq2seq_encoder_ref(x, emb_table, gru_params)

    # f32 recurrent-matmul path: tight tolerance.
    outputs, state = seq2seq_encoder_forward(x, emb_table, gru_params)
    outputs, state = jax.block_until_ready((outputs, state))
    assert outputs.shape == (seq, batch, num_hiddens)
    assert state.shape == (num_layers, batch, num_hiddens)
    assert jnp.allclose(outputs, ref_out, atol=1e-4, rtol=1e-4)
    assert jnp.allclose(state, ref_state, atol=1e-4, rtol=1e-4)

    # bf16 MXU path (perf config for v5e/v6e/v7x): looser tolerance.
    outputs_b, state_b = seq2seq_encoder_forward(x, emb_table, gru_params,
                                                 matmul_dtype=jnp.bfloat16)
    outputs_b, state_b = jax.block_until_ready((outputs_b, state_b))
    assert jnp.allclose(outputs_b, ref_out, atol=5e-2, rtol=5e-2)
    assert jnp.allclose(state_b, ref_state, atol=5e-2, rtol=5e-2)

    print("KERNEL_OK")
</pallas_src>

<mosaic_0001>
module attributes {stable_mosaic.version = 11 : i64} {
  func.func @_gru_rec_kernel(%arg0: i32, %arg1: i32, %arg2: memref<8x8x384xf32, #tpu.memory_space<vmem>>, %arg3: memref<128x384xf32, #tpu.memory_space<vmem>>, %arg4: memref<1x128xf32, #tpu.memory_space<vmem>>, %arg5: memref<8x8x128xf32, #tpu.memory_space<vmem>>, %arg6: memref<8x128xf32, #tpu.memory_space<vmem>>, %arg7: memref<8x128xf32, #tpu.memory_space<vmem>>) attributes {dimension_semantics = [#tpu.dimension_semantics<parallel>, #tpu.dimension_semantics<arbitrary>], iteration_bounds = array<i64: 1, 1>, scalar_prefetch = 0 : i64, scratch_operands = 1 : i64, tpu.core_type = #tpu.core_type<tc>, window_params = [{transform_indices = @transform_0, window_bounds = array<i64: 8, 8, 384>}, {pipeline_mode = #tpu.pipeline_mode<synchronous>, transform_indices = @transform_1, window_bounds = array<i64: 128, 384>}, {pipeline_mode = #tpu.pipeline_mode<synchronous>, transform_indices = @transform_2, window_bounds = array<i64: 1, 128>}, {transform_indices = @transform_3, window_bounds = array<i64: 8, 8, 128>}, {transform_indices = @transform_4, window_bounds = array<i64: 8, 128>}]} {
    %c0_i32 = arith.constant 0 : i32
    %0 = arith.cmpi eq, %arg1, %c0_i32 : i32
    %1 = arith.extui %0 : i1 to i32
    %c0_i32_0 = arith.constant 0 : i32
    %2 = arith.cmpi ne, %1, %c0_i32_0 : i32
    scf.if %2 {
      %cst_74 = arith.constant 0.000000e+00 : f32
      %260 = vector.broadcast %cst_74 : f32 to vector<8x128xf32>
      %c0_75 = arith.constant 0 : index
      %c0_76 = arith.constant 0 : index
      %261 = vector.load %arg7[%c0_75, %c0_76] : memref<8x128xf32, #tpu.memory_space<vmem>>, vector<8x128xf32>
      tpu.vector_store %arg7[%c0_75, %c0_76], %260 {strides = array<i32>} : memref<8x128xf32, #tpu.memory_space<vmem>>, vector<8x128xf32>,
    } else {
    }
    %c0 = arith.constant 0 : index
    %c0_1 = arith.constant 0 : index
    %3 = vector.load %arg7[%c0, %c0_1] : memref<8x128xf32, #tpu.memory_space<vmem>>, vector<8x128xf32>
    %c0_2 = arith.constant 0 : index
    %c0_3 = arith.constant 0 : index
    %4 = vector.load %arg3[%c0_2, %c0_3] : memref<128x384xf32, #tpu.memory_space<vmem>>, vector<128x384xf32>
    %c0_4 = arith.constant 0 : index
    %c0_5 = arith.constant 0 : index
    %5 = vector.load %arg4[%c0_4, %c0_5] : memref<1x128xf32, #tpu.memory_space<vmem>>, vector<1x128xf32>
    %6 = vector.shape_cast %5 : vector<1x128xf32> to vector<1x128xf32>
    %7 = vector.broadcast %6 : vector<1x128xf32> to vector<8x128xf32>
    %c0_6 = arith.constant 0 : index
    %c0_7 = arith.constant 0 : index
    %c0_8 = arith.constant 0 : index
    %8 = vector.load %arg2[%c0_6, %c0_7, %c0_8] : memref<8x8x384xf32, #tpu.memory_space<vmem>>, vector<1x8x384xf32>
    %9 = vector.shape_cast %8 : vector<1x8x384xf32> to vector<8x384xf32>
    %cst = arith.constant dense<0.000000e+00> : vector<8x384xf32>
    %10 = tpu.matmul %3, %4, %cst {dimension_numbers = #tpu.dot_dimension_numbers<[1], [0], [0], [1], [0, 0, 1, 1], [], []>} : vector<8x128xf32>, vector<128x384xf32>, vector<8x384xf32> -> vector<8x384xf32>
    %11 = vector.extract_strided_slice %9 {offsets = [0, 0], sizes = [8, 128], strides = [1, 1]} : vector<8x384xf32> to vector<8x128xf32>
    %12 = vector.extract_strided_slice %10 {offsets = [0, 0], sizes = [8, 128], strides = [1, 1]} : vector<8x384xf32> to vector<8x128xf32>
    %13 = arith.addf %11, %12 : vector<8x128xf32>
    %14 = arith.negf %13 : vector<8x128xf32>
    %15 = math.exp %14 : vector<8x128xf32>
    %cst_9 = arith.constant 1.000000e+00 : f32
    %16 = vector.broadcast %cst_9 : f32 to vector<8x128xf32>
    %17 = arith.addf %16, %15 : vector<8x128xf32>
    %18 = arith.divf %16, %17 : vector<8x128xf32>
    %19 = vector.extract_strided_slice %9 {offsets = [0, 128], sizes = [8, 128], strides = [1, 1]} : vector<8x384xf32> to vector<8x128xf32>
    %20 = vector.extract_strided_slice %10 {offsets = [0, 128], sizes = [8, 128], strides = [1, 1]} : vector<8x384xf32> to vector<8x128xf32>
    %21 = arith.addf %19, %20 : vector<8x128xf32>
    %22 = arith.negf %21 : vector<8x128xf32>
    %23 = math.exp %22 : vector<8x128xf32>
    %cst_10 = arith.constant 1.000000e+00 : f32
    %24 = vector.broadcast %cst_10 : f32 to vector<8x128xf32>
    %25 = arith.addf %24, %23 : vector<8x128xf32>
    %26 = arith.divf %24, %25 : vector<8x128xf32>
    %27 = vector.extract_strided_slice %9 {offsets = [0, 256], sizes = [8, 128], strides = [1, 1]} : vector<8x384xf32> to vector<8x128xf32>
    %28 = vector.extract_strided_slice %10 {offsets = [0, 256], sizes = [8, 128], strides = [1, 1]} : vector<8x384xf32> to vector<8x128xf32>
    %29 = arith.addf %28, %7 : vector<8x128xf32>
    %30 = arith.mulf %18, %29 : vector<8x128xf32>
    %31 = arith.addf %27, %30 : vector<8x128xf32>
    %32 = math.tanh %31 : vector<8x128xf32>
    %33 = arith.subf %3, %32 : vector<8x128xf32>
    %34 = arith.mulf %26, %33 : vector<8x128xf32>
    %35 = arith.addf %32, %34 : vector<8x128xf32>
    %c0_11 = arith.constant 0 : index
    %c0_12 = arith.constant 0 : index
    %c0_13 = arith.constant 0 : index
    %36 = vector.load %arg5[%c0_11, %c0_12, %c0_13] : memref<8x8x128xf32, #tpu.memory_space<vmem>>, vector<1x8x128xf32>
    %37 = vector.shape_cast %36 : vector<1x8x128xf32> to vector<8x128xf32>
    %38 = vector.shape_cast %35 : vector<8x128xf32> to vector<1x8x128xf32>
    tpu.vector_store %arg5[%c0_11, %c0_12, %c0_13], %38 {strides = array<i32>} : memref<8x8x128xf32, #tpu.memory_space<vmem>>, vector<1x8x128xf32>,
    %c1 = arith.constant 1 : index
    %c0_14 = arith.constant 0 : index
    %c0_15 = arith.constant 0 : index
    %39 = vector.load %arg2[%c1, %c0_14, %c0_15] : memref<8x8x384xf32, #tpu.memory_space<vmem>>, vector<1x8x384xf32>
    %40 = vector.shape_cast %39 : vector<1x8x384xf32> to vector<8x384xf32>
    %cst_16 = arith.constant dense<0.000000e+00> : vector<8x384xf32>
    %41 = tpu.matmul %35, %4, %cst_16 {dimension_numbers = #tpu.dot_dimension_numbers<[1], [0], [0], [1], [0, 0, 1, 1], [], []>} : vector<8x128xf32>, vector<128x384xf32>, vector<8x384xf32> -> vector<8x384xf32>
    %42 = vector.extract_strided_slice %40 {offsets = [0, 0], sizes = [8, 128], strides = [1, 1]} : vector<8x384xf32> to vector<8x128xf32>
    %43 = vector.extract_strided_slice %41 {offsets = [0, 0], sizes = [8, 128], strides = [1, 1]} : vector<8x384xf32> to vector<8x128xf32>
    %44 = arith.addf %42, %43 : vector<8x128xf32>
    %45 = arith.negf %44 : vector<8x128xf32>
    %46 = math.exp %45 : vector<8x128xf32>
    %cst_17 = arith.constant 1.000000e+00 : f32
    %47 = vector.broadcast %cst_17 : f32 to vector<8x128xf32>
    %48 = arith.addf %47, %46 : vector<8x128xf32>
    %49 = arith.divf %47, %48 : vector<8x128xf32>
    %50 = vector.extract_strided_slice %40 {offsets = [0, 128], sizes = [8, 128], strides = [1, 1]} : vector<8x384xf32> to vector<8x128xf32>
    %51 = vector.extract_strided_slice %41 {offsets = [0, 128], sizes = [8, 128], strides = [1, 1]} : vector<8x384xf32> to vector<8x128xf32>
    %52 = arith.addf %50, %51 : vector<8x128xf32>
    %53 = arith.negf %52 : vector<8x128xf32>
    %54 = math.exp %53 : vector<8x128xf32>
    %cst_18 = arith.constant 1.000000e+00 : f32
    %55 = vector.broadcast %cst_18 : f32 to vector<8x128xf32>
    %56 = arith.addf %55, %54 : vector<8x128xf32>
    %57 = arith.divf %55, %56 : vector<8x128xf32>
    %58 = vector.extract_strided_slice %40 {offsets = [0, 256], sizes = [8, 128], strides = [1, 1]} : vector<8x384xf32> to vector<8x128xf32>
    %59 = vector.extract_strided_slice %41 {offsets = [0, 256], sizes = [8, 128], strides = [1, 1]} : vector<8x384xf32> to vector<8x128xf32>
    %60 = arith.addf %59, %7 : vector<8x128xf32>
    %61 = arith.mulf %49, %60 : vector<8x128xf32>
    %62 = arith.addf %58, %61 : vector<8x128xf32>
    %63 = math.tanh %62 : vector<8x128xf32>
    %64 = arith.subf %35, %63 : vector<8x128xf32>
    %65 = arith.mulf %57, %64 : vector<8x128xf32>
    %66 = arith.addf %63, %65 : vector<8x128xf32>
    %c1_19 = arith.constant 1 : index
    %c0_20 = arith.constant 0 : index
    %c0_21 = arith.constant 0 : index
    %67 = vector.load %arg5[%c1_19, %c0_20, %c0_21] : memref<8x8x128xf32, #tpu.memory_space<vmem>>, vector<1x8x128xf32>
    %68 = vector.shape_cast %67 : vector<1x8x128xf32> to vector<8x128xf32>
    %69 = vector.shape_cast %66 : vector<8x128xf32> to vector<1x8x128xf32>
    tpu.vector_store %arg5[%c1_19, %c0_20, %c0_21], %69 {strides = array<i32>} : memref<8x8x128xf32, #tpu.memory_space<vmem>>, vector<1x8x128xf32>,
    %c2 = arith.constant 2 : index
    %c0_22 = arith.constant 0 : index
    %c0_23 = arith.constant 0 : index
    %70 = vector.load %arg2[%c2, %c0_22, %c0_23] : memref<8x8x384xf32, #tpu.memory_space<vmem>>, vector<1x8x384xf32>
    %71 = vector.shape_cast %70 : vector<1x8x384xf32> to vector<8x384xf32>
    %cst_24 = arith.constant dense<0.000000e+00> : vector<8x384xf32>
    %72 = tpu.matmul %66, %4, %cst_24 {dimension_numbers = #tpu.dot_dimension_numbers<[1], [0], [0], [1], [0, 0, 1, 1], [], []>} : vector<8x128xf32>, vector<128x384xf32>, vector<8x384xf32> -> vector<8x384xf32>
    %73 = vector.extract_strided_slice %71 {offsets = [0, 0], sizes = [8, 128], strides = [1, 1]} : vector<8x384xf32> to vector<8x128xf32>
    %74 = vector.extract_strided_slice %72 {offsets = [0, 0], sizes = [8, 128], strides = [1, 1]} : vector<8x384xf32> to vector<8x128xf32>
    %75 = arith.addf %73, %74 : vector<8x128xf32>
    %76 = arith.negf %75 : vector<8x128xf32>
    %77 = math.exp %76 : vector<8x128xf32>
    %cst_25 = arith.constant 1.000000e+00 : f32
    %78 = vector.broadcast %cst_25 : f32 to vector<8x128xf32>
    %79 = arith.addf %78, %77 : vector<8x128xf32>
    %80 = arith.divf %78, %79 : vector<8x128xf32>
    %81 = vector.extract_strided_slice %71 {offsets = [0, 128], sizes = [8, 128], strides = [1, 1]} : vector<8x384xf32> to vector<8x128xf32>
    %82 = vector.extract_strided_slice %72 {offsets = [0, 128], sizes = [8, 128], strides = [1, 1]} : vector<8x384xf32> to vector<8x128xf32>
    %83 = arith.addf %81, %82 : vector<8x128xf32>
    %84 = arith.negf %83 : vector<8x128xf32>
    %85 = math.exp %84 : vector<8x128xf32>
    %cst_26 = arith.constant 1.000000e+00 : f32
    %86 = vector.broadcast %cst_26 : f32 to vector<8x128xf32>
    %87 = arith.addf %86, %85 : vector<8x128xf32>
    %88 = arith.divf %86, %87 : vector<8x128xf32>
    %89 = vector.extract_strided_slice %71 {offsets = [0, 256], sizes = [8, 128], strides = [1, 1]} : vector<8x384xf32> to vector<8x128xf32>
    %90 = vector.extract_strided_slice %72 {offsets = [0, 256], sizes = [8, 128], strides = [1, 1]} : vector<8x384xf32> to vector<8x128xf32>
    %91 = arith.addf %90, %7 : vector<8x128xf32>
    %92 = arith.mulf %80, %91 : vector<8x128xf32>
    %93 = arith.addf %89, %92 : vector<8x128xf32>
    %94 = math.tanh %93 : vector<8x128xf32>
    %95 = arith.subf %66, %94 : vector<8x128xf32>
    %96 = arith.mulf %88, %95 : vector<8x128xf32>
    %97 = arith.addf %94, %96 : vector<8x128xf32>
    %c2_27 = arith.constant 2 : index
    %c0_28 = arith.constant 0 : index
    %c0_29 = arith.constant 0 : index
    %98 = vector.load %arg5[%c2_27, %c0_28, %c0_29] : memref<8x8x128xf32, #tpu.memory_space<vmem>>, vector<1x8x128xf32>
    %99 = vector.shape_cast %98 : vector<1x8x128xf32> to vector<8x128xf32>
    %100 = vector.shape_cast %97 : vector<8x128xf32> to vector<1x8x128xf32>
    tpu.vector_store %arg5[%c2_27, %c0_28, %c0_29], %100 {strides = array<i32>} : memref<8x8x128xf32, #tpu.memory_space<vmem>>, vector<1x8x128xf32>,
    %c3 = arith.constant 3 : index
    %c0_30 = arith.constant 0 : index
    %c0_31 = arith.constant 0 : index
    %101 = vector.load %arg2[%c3, %c0_30, %c0_31] : memref<8x8x384xf32, #tpu.memory_space<vmem>>, vector<1x8x384xf32>
    %102 = vector.shape_cast %101 : vector<1x8x384xf32> to vector<8x384xf32>
    %cst_32 = arith.constant dense<0.000000e+00> : vector<8x384xf32>
    %103 = tpu.matmul %97, %4, %cst_32 {dimension_numbers = #tpu.dot_dimension_numbers<[1], [0], [0], [1], [0, 0, 1, 1], [], []>} : vector<8x128xf32>, vector<128x384xf32>, vector<8x384xf32> -> vector<8x384xf32>
    %104 = vector.extract_strided_slice %102 {offsets = [0, 0], sizes = [8, 128], strides = [1, 1]} : vector<8x384xf32> to vector<8x128xf32>
    %105 = vector.extract_strided_slice %103 {offsets = [0, 0], sizes = [8, 128], strides = [1, 1]} : vector<8x384xf32> to vector<8x128xf32>
    %106 = arith.addf %104, %105 : vector<8x128xf32>
    %107 = arith.negf %106 : vector<8x128xf32>
    %108 = math.exp %107 : vector<8x128xf32>
    %cst_33 = arith.constant 1.000000e+00 : f32
    %109 = vector.broadcast %cst_33 : f32 to vector<8x128xf32>
    %110 = arith.addf %109, %108 : vector<8x128xf32>
    %111 = arith.divf %109, %110 : vector<8x128xf32>
    %112 = vector.extract_strided_slice %102 {offsets = [0, 128], sizes = [8, 128], strides = [1, 1]} : vector<8x384xf32> to vector<8x128xf32>
    %113 = vector.extract_strided_slice %103 {offsets = [0, 128], sizes = [8, 128], strides = [1, 1]} : vector<8x384xf32> to vector<8x128xf32>
    %114 = arith.addf %112, %113 : vector<8x128xf32>
    %115 = arith.negf %114 : vector<8x128xf32>
    %116 = math.exp %115 : vector<8x128xf32>
    %cst_34 = arith.constant 1.000000e+00 : f32
    %117 = vector.broadcast %cst_34 : f32 to vector<8x128xf32>
    %118 = arith.addf %117, %116 : vector<8x128xf32>
    %119 = arith.divf %117, %118 : vector<8x128xf32>
    %120 = vector.extract_strided_slice %102 {offsets = [0, 256], sizes = [8, 128], strides = [1, 1]} : vector<8x384xf32> to vector<8x128xf32>
    %121 = vector.extract_strided_slice %103 {offsets = [0, 256], sizes = [8, 128], strides = [1, 1]} : vector<8x384xf32> to vector<8x128xf32>
    %122 = arith.addf %121, %7 : vector<8x128xf32>
    %123 = arith.mulf %111, %122 : vector<8x128xf32>
    %124 = arith.addf %120, %123 : vector<8x128xf32>
    %125 = math.tanh %124 : vector<8x128xf32>
    %126 = arith.subf %97, %125 : vector<8x128xf32>
    %127 = arith.mulf %119, %126 : vector<8x128xf32>
    %128 = arith.addf %125, %127 : vector<8x128xf32>
    %c3_35 = arith.constant 3 : index
    %c0_36 = arith.constant 0 : index
    %c0_37 = arith.constant 0 : index
    %129 = vector.load %arg5[%c3_35, %c0_36, %c0_37] : memref<8x8x128xf32, #tpu.memory_space<vmem>>, vector<1x8x128xf32>
    %130 = vector.shape_cast %129 : vector<1x8x128xf32> to vector<8x128xf32>
    %131 = vector.shape_cast %128 : vector<8x128xf32> to vector<1x8x128xf32>
    tpu.vector_store %arg5[%c3_35, %c0_36, %c0_37], %131 {strides = array<i32>} : memref<8x8x128xf32, #tpu.memory_space<vmem>>, vector<1x8x128xf32>,
    %c4 = arith.constant 4 : index
    %c0_38 = arith.constant 0 : index
    %c0_39 = arith.constant 0 : index
    %132 = vector.load %arg2[%c4, %c0_38, %c0_39] : memref<8x8x384xf32, #tpu.memory_space<vmem>>, vector<1x8x384xf32>
    %133 = vector.shape_cast %132 : vector<1x8x384xf32> to vector<8x384xf32>
    %cst_40 = arith.constant dense<0.000000e+00> : vector<8x384xf32>
    %134 = tpu.matmul %128, %4, %cst_40 {dimension_numbers = #tpu.dot_dimension_numbers<[1], [0], [0], [1], [0, 0, 1, 1], [], []>} : vector<8x128xf32>, vector<128x384xf32>, vector<8x384xf32> -> vector<8x384xf32>
    %135 = vector.extract_strided_slice %133 {offsets = [0, 0], sizes = [8, 128], strides = [1, 1]} : vector<8x384xf32> to vector<8x128xf32>
    %136 = vector.extract_strided_slice %134 {offsets = [0, 0], sizes = [8, 128], strides = [1, 1]} : vector<8x384xf32> to vector<8x128xf32>
    %137 = arith.addf %135, %136 : vector<8x128xf32>
    %138 = arith.negf %137 : vector<8x128xf32>
    %139 = math.exp %138 : vector<8x128xf32>
    %cst_41 = arith.constant 1.000000e+00 : f32
    %140 = vector.broadcast %cst_41 : f32 to vector<8x128xf32>
    %141 = arith.addf %140, %139 : vector<8x128xf32>
    %142 = arith.divf %140, %141 : vector<8x128xf32>
    %143 = vector.extract_strided_slice %133 {offsets = [0, 128], sizes = [8, 128], strides = [1, 1]} : vector<8x384xf32> to vector<8x128xf32>
    %144 = vector.extract_strided_slice %134 {offsets = [0, 128], sizes = [8, 128], strides = [1, 1]} : vector<8x384xf32> to vector<8x128xf32>
    %145 = arith.addf %143, %144 : vector<8x128xf32>
    %146 = arith.negf %145 : vector<8x128xf32>
    %147 = math.exp %146 : vector<8x128xf32>
    %cst_42 = arith.constant 1.000000e+00 : f32
    %148 = vector.broadcast %cst_42 : f32 to vector<8x128xf32>
    %149 = arith.addf %148, %147 : vector<8x128xf32>
    %150 = arith.divf %148, %149 : vector<8x128xf32>
    %151 = vector.extract_strided_slice %133 {offsets = [0, 256], sizes = [8, 128], strides = [1, 1]} : vector<8x384xf32> to vector<8x128xf32>
    %152 = vector.extract_strided_slice %134 {offsets = [0, 256], sizes = [8, 128], strides = [1, 1]} : vector<8x384xf32> to vector<8x128xf32>
    %153 = arith.addf %152, %7 : vector<8x128xf32>
    %154 = arith.mulf %142, %153 : vector<8x128xf32>
    %155 = arith.addf %151, %154 : vector<8x128xf32>
    %156 = math.tanh %155 : vector<8x128xf32>
    %157 = arith.subf %128, %156 : vector<8x128xf32>
    %158 = arith.mulf %150, %157 : vector<8x128xf32>
    %159 = arith.addf %156, %158 : vector<8x128xf32>
    %c4_43 = arith.constant 4 : index
    %c0_44 = arith.constant 0 : index
    %c0_45 = arith.constant 0 : index
    %160 = vector.load %arg5[%c4_43, %c0_44, %c0_45] : memref<8x8x128xf32, #tpu.memory_space<vmem>>, vector<1x8x128xf32>
    %161 = vector.shape_cast %160 : vector<1x8x128xf32> to vector<8x128xf32>
    %162 = vector.shape_cast %159 : vector<8x128xf32> to vector<1x8x128xf32>
    tpu.vector_store %arg5[%c4_43, %c0_44, %c0_45], %162 {strides = array<i32>} : memref<8x8x128xf32, #tpu.memory_space<vmem>>, vector<1x8x128xf32>,
    %c5 = arith.constant 5 : index
    %c0_46 = arith.constant 0 : index
    %c0_47 = arith.constant 0 : index
    %163 = vector.load %arg2[%c5, %c0_46, %c0_47] : memref<8x8x384xf32, #tpu.memory_space<vmem>>, vector<1x8x384xf32>
    %164 = vector.shape_cast %163 : vector<1x8x384xf32> to vector<8x384xf32>
    %cst_48 = arith.constant dense<0.000000e+00> : vector<8x384xf32>
    %165 = tpu.matmul %159, %4, %cst_48 {dimension_numbers = #tpu.dot_dimension_numbers<[1], [0], [0], [1], [0, 0, 1, 1], [], []>} : vector<8x128xf32>, vector<128x384xf32>, vector<8x384xf32> -> vector<8x384xf32>
    %166 = vector.extract_strided_slice %164 {offsets = [0, 0], sizes = [8, 128], strides = [1, 1]} : vector<8x384xf32> to vector<8x128xf32>
    %167 = vector.extract_strided_slice %165 {offsets = [0, 0], sizes = [8, 128], strides = [1, 1]} : vector<8x384xf32> to vector<8x128xf32>
    %168 = arith.addf %166, %167 : vector<8x128xf32>
    %169 = arith.negf %168 : vector<8x128xf32>
    %170 = math.exp %169 : vector<8x128xf32>
    %cst_49 = arith.constant 1.000000e+00 : f32
    %171 = vector.broadcast %cst_49 : f32 to vector<8x128xf32>
    %172 = arith.addf %171, %170 : vector<8x128xf32>
    %173 = arith.divf %171, %172 : vector<8x128xf32>
    %174 = vector.extract_strided_slice %164 {offsets = [0, 128], sizes = [8, 128], strides = [1, 1]} : vector<8x384xf32> to vector<8x128xf32>
    %175 = vector.extract_strided_slice %165 {offsets = [0, 128], sizes = [8, 128], strides = [1, 1]} : vector<8x384xf32> to vector<8x128xf32>
    %176 = arith.addf %174, %175 : vector<8x128xf32>
    %177 = arith.negf %176 : vector<8x128xf32>
    %178 = math.exp %177 : vector<8x128xf32>
    %cst_50 = arith.constant 1.000000e+00 : f32
    %179 = vector.broadcast %cst_50 : f32 to vector<8x128xf32>
    %180 = arith.addf %179, %178 : vector<8x128xf32>
    %181 = arith.divf %179, %180 : vector<8x128xf32>
    %182 = vector.extract_strided_slice %164 {offsets = [0, 256], sizes = [8, 128], strides = [1, 1]} : vector<8x384xf32> to vector<8x128xf32>
    %183 = vector.extract_strided_slice %165 {offsets = [0, 256], sizes = [8, 128], strides = [1, 1]} : vector<8x384xf32> to vector<8x128xf32>
    %184 = arith.addf %183, %7 : vector<8x128xf32>
    %185 = arith.mulf %173, %184 : vector<8x128xf32>
    %186 = arith.addf %182, %185 : vector<8x128xf32>
    %187 = math.tanh %186 : vector<8x128xf32>
    %188 = arith.subf %159, %187 : vector<8x128xf32>
    %189 = arith.mulf %181, %188 : vector<8x128xf32>
    %190 = arith.addf %187, %189 : vector<8x128xf32>
    %c5_51 = arith.constant 5 : index
    %c0_52 = arith.constant 0 : index
    %c0_53 = arith.constant 0 : index
    %191 = vector.load %arg5[%c5_51, %c0_52, %c0_53] : memref<8x8x128xf32, #tpu.memory_space<vmem>>, vector<1x8x128xf32>
    %192 = vector.shape_cast %191 : vector<1x8x128xf32> to vector<8x128xf32>
    %193 = vector.shape_cast %190 : vector<8x128xf32> to vector<1x8x128xf32>
    tpu.vector_store %arg5[%c5_51, %c0_52, %c0_53], %193 {strides = array<i32>} : memref<8x8x128xf32, #tpu.memory_space<vmem>>, vector<1x8x128xf32>,
    %c6 = arith.constant 6 : index
    %c0_54 = arith.constant 0 : index
    %c0_55 = arith.constant 0 : index
    %194 = vector.load %arg2[%c6, %c0_54, %c0_55] : memref<8x8x384xf32, #tpu.memory_space<vmem>>, vector<1x8x384xf32>
    %195 = vector.shape_cast %194 : vector<1x8x384xf32> to vector<8x384xf32>
    %cst_56 = arith.constant dense<0.000000e+00> : vector<8x384xf32>
    %196 = tpu.matmul %190, %4, %cst_56 {dimension_numbers = #tpu.dot_dimension_numbers<[1], [0], [0], [1], [0, 0, 1, 1], [], []>} : vector<8x128xf32>, vector<128x384xf32>, vector<8x384xf32> -> vector<8x384xf32>
    %197 = vector.extract_strided_slice %195 {offsets = [0, 0], sizes = [8, 128], strides = [1, 1]} : vector<8x384xf32> to vector<8x128xf32>
    %198 = vector.extract_strided_slice %196 {offsets = [0, 0], sizes = [8, 128], strides = [1, 1]} : vector<8x384xf32> to vector<8x128xf32>
    %199 = arith.addf %197, %198 : vector<8x128xf32>
    %200 = arith.negf %199 : vector<8x128xf32>
    %201 = math.exp %200 : vector<8x128xf32>
    %cst_57 = arith.constant 1.000000e+00 : f32
    %202 = vector.broadcast %cst_57 : f32 to vector<8x128xf32>
    %203 = arith.addf %202, %201 : vector<8x128xf32>
    %204 = arith.divf %202, %203 : vector<8x128xf32>
    %205 = vector.extract_strided_slice %195 {offsets = [0, 128], sizes = [8, 128], strides = [1, 1]} : vector<8x384xf32> to vector<8x128xf32>
    %206 = vector.extract_strided_slice %196 {offsets = [0, 128], sizes = [8, 128], strides = [1, 1]} : vector<8x384xf32> to vector<8x128xf32>
    %207 = arith.addf %205, %206 : vector<8x128xf32>
    %208 = arith.negf %207 : vector<8x128xf32>
    %209 = math.exp %208 : vector<8x128xf32>
    %cst_58 = arith.constant 1.000000e+00 : f32
    %210 = vector.broadcast %cst_58 : f32 to vector<8x128xf32>
    %211 = arith.addf %210, %209 : vector<8x128xf32>
    %212 = arith.divf %210, %211 : vector<8x128xf32>
    %213 = vector.extract_strided_slice %195 {offsets = [0, 256], sizes = [8, 128], strides = [1, 1]} : vector<8x384xf32> to vector<8x128xf32>
    %214 = vector.extract_strided_slice %196 {offsets = [0, 256], sizes = [8, 128], strides = [1, 1]} : vector<8x384xf32> to vector<8x128xf32>
    %215 = arith.addf %214, %7 : vector<8x128xf32>
    %216 = arith.mulf %204, %215 : vector<8x128xf32>
    %217 = arith.addf %213, %216 : vector<8x128xf32>
    %218 = math.tanh %217 : vector<8x128xf32>
    %219 = arith.subf %190, %218 : vector<8x128xf32>
    %220 = arith.mulf %212, %219 : vector<8x128xf32>
    %221 = arith.addf %218, %220 : vector<8x128xf32>
    %c6_59 = arith.constant 6 : index
    %c0_60 = arith.constant 0 : index
    %c0_61 = arith.constant 0 : index
    %222 = vector.load %arg5[%c6_59, %c0_60, %c0_61] : memref<8x8x128xf32, #tpu.memory_space<vmem>>, vector<1x8x128xf32>
    %223 = vector.shape_cast %222 : vector<1x8x128xf32> to vector<8x128xf32>
    %224 = vector.shape_cast %221 : vector<8x128xf32> to vector<1x8x128xf32>
    tpu.vector_store %arg5[%c6_59, %c0_60, %c0_61], %224 {strides = array<i32>} : memref<8x8x128xf32, #tpu.memory_space<vmem>>, vector<1x8x128xf32>,
    %c7 = arith.constant 7 : index
    %c0_62 = arith.constant 0 : index
    %c0_63 = arith.constant 0 : index
    %225 = vector.load %arg2[%c7, %c0_62, %c0_63] : memref<8x8x384xf32, #tpu.memory_space<vmem>>, vector<1x8x384xf32>
    %226 = vector.shape_cast %225 : vector<1x8x384xf32> to vector<8x384xf32>
    %cst_64 = arith.constant dense<0.000000e+00> : vector<8x384xf32>
    %227 = tpu.matmul %221, %4, %cst_64 {dimension_numbers = #tpu.dot_dimension_numbers<[1], [0], [0], [1], [0, 0, 1, 1], [], []>} : vector<8x128xf32>, vector<128x384xf32>, vector<8x384xf32> -> vector<8x384xf32>
    %228 = vector.extract_strided_slice %226 {offsets = [0, 0], sizes = [8, 128], strides = [1, 1]} : vector<8x384xf32> to vector<8x128xf32>
    %229 = vector.extract_strided_slice %227 {offsets = [0, 0], sizes = [8, 128], strides = [1, 1]} : vector<8x384xf32> to vector<8x128xf32>
    %230 = arith.addf %228, %229 : vector<8x128xf32>
    %231 = arith.negf %230 : vector<8x128xf32>
    %232 = math.exp %231 : vector<8x128xf32>
    %cst_65 = arith.constant 1.000000e+00 : f32
    %233 = vector.broadcast %cst_65 : f32 to vector<8x128xf32>
    %234 = arith.addf %233, %232 : vector<8x128xf32>
    %235 = arith.divf %233, %234 : vector<8x128xf32>
    %236 = vector.extract_strided_slice %226 {offsets = [0, 128], sizes = [8, 128], strides = [1, 1]} : vector<8x384xf32> to vector<8x128xf32>
    %237 = vector.extract_strided_slice %227 {offsets = [0, 128], sizes = [8, 128], strides = [1, 1]} : vector<8x384xf32> to vector<8x128xf32>
    %238 = arith.addf %236, %237 : vector<8x128xf32>
    %239 = arith.negf %238 : vector<8x128xf32>
    %240 = math.exp %239 : vector<8x128xf32>
    %cst_66 = arith.constant 1.000000e+00 : f32
    %241 = vector.broadcast %cst_66 : f32 to vector<8x128xf32>
    %242 = arith.addf %241, %240 : vector<8x128xf32>
    %243 = arith.divf %241, %242 : vector<8x128xf32>
    %244 = vector.extract_strided_slice %226 {offsets = [0, 256], sizes = [8, 128], strides = [1, 1]} : vector<8x384xf32> to vector<8x128xf32>
    %245 = vector.extract_strided_slice %227 {offsets = [0, 256], sizes = [8, 128], strides = [1, 1]} : vector<8x384xf32> to vector<8x128xf32>
    %246 = arith.addf %245, %7 : vector<8x128xf32>
    %247 = arith.mulf %235, %246 : vector<8x128xf32>
    %248 = arith.addf %244, %247 : vector<8x128xf32>
    %249 = math.tanh %248 : vector<8x128xf32>
    %250 = arith.subf %221, %249 : vector<8x128xf32>
    %251 = arith.mulf %243, %250 : vector<8x128xf32>
    %252 = arith.addf %249, %251 : vector<8x128xf32>
    %c7_67 = arith.constant 7 : index
    %c0_68 = arith.constant 0 : index
    %c0_69 = arith.constant 0 : index
    %253 = vector.load %arg5[%c7_67, %c0_68, %c0_69] : memref<8x8x128xf32, #tpu.memory_space<vmem>>, vector<1x8x128xf32>
    %254 = vector.shape_cast %253 : vector<1x8x128xf32> to vector<8x128xf32>
    %255 = vector.shape_cast %252 : vector<8x128xf32> to vector<1x8x128xf32>
    tpu.vector_store %arg5[%c7_67, %c0_68, %c0_69], %255 {strides = array<i32>} : memref<8x8x128xf32, #tpu.memory_space<vmem>>, vector<1x8x128xf32>,
    %c0_i32_70 = arith.constant 0 : i32
    %256 = arith.cmpi eq, %arg1, %c0_i32_70 : i32
    %257 = arith.extui %256 : i1 to i32
    %c0_i32_71 = arith.constant 0 : i32
    %258 = arith.cmpi ne, %257, %c0_i32_71 : i32
    scf.if %258 {
      %c0_74 = arith.constant 0 : index
      %c0_75 = arith.constant 0 : index
      %260 = vector.load %arg6[%c0_74, %c0_75] : memref<8x128xf32, #tpu.memory_space<vmem>>, vector<8x128xf32>
      tpu.vector_store %arg6[%c0_74, %c0_75], %252 {strides = array<i32>} : memref<8x128xf32, #tpu.memory_space<vmem>>, vector<8x128xf32>,
    } else {
    }
    %c0_72 = arith.constant 0 : index
    %c0_73 = arith.constant 0 : index
    %259 = vector.load %arg7[%c0_72, %c0_73] : memref<8x128xf32, #tpu.memory_space<vmem>>, vector<8x128xf32>
    tpu.vector_store %arg7[%c0_72, %c0_73], %252 {strides = array<i32>} : memref<8x128xf32, #tpu.memory_space<vmem>>, vector<8x128xf32>,
    return
  }
  func.func @transform_0(%arg0: i32, %arg1: i32) -> (i32, i32, i32) {
    %c0_i32 = arith.constant 0 : i32
    %c0_i32_0 = arith.constant 0 : i32
    return %arg1, %arg0, %c0_i32 : i32, i32, i32
  }
  func.func @transform_1(%arg0: i32, %arg1: i32) -> (i32, i32) {
    %c0_i32 = arith.constant 0 : i32
    %c0_i32_0 = arith.constant 0 : i32
    %c0_i32_1 = arith.constant 0 : i32
    return %c0_i32, %c0_i32_0 : i32, i32
  }
  func.func @transform_2(%arg0: i32, %arg1: i32) -> (i32, i32) {
    %c0_i32 = arith.constant 0 : i32
    %c0_i32_0 = arith.constant 0 : i32
    %c0_i32_1 = arith.constant 0 : i32
    return %c0_i32, %c0_i32_0 : i32, i32
  }
  func.func @transform_3(%arg0: i32, %arg1: i32) -> (i32, i32, i32) {
    %c0_i32 = arith.constant 0 : i32
    %c0_i32_0 = arith.constant 0 : i32
    return %arg1, %arg0, %c0_i32 : i32, i32, i32
  }
  func.func @transform_4(%arg0: i32, %arg1: i32) -> (i32, i32) {
    %c0_i32 = arith.constant 0 : i32
    %c0_i32_0 = arith.constant 0 : i32
    return %arg0, %c0_i32 : i32, i32
  }
}

module attributes {stable_mosaic.version = 11 : i64} {
  func.func @_gru_rec_kernel(%arg0: i32, %arg1: i32, %arg2: memref<8x8x384xf32, #tpu.memory_space<vmem>>, %arg3: memref<128x384xf32, #tpu.memory_space<vmem>>, %arg4: memref<1x128xf32, #tpu.memory_space<vmem>>, %arg5: memref<8x8x128xf32, #tpu.memory_space<vmem>>, %arg6: memref<8x128xf32, #tpu.memory_space<vmem>>, %arg7: memref<8x128xf32, #tpu.memory_space<vmem>>) attributes {dimension_semantics = [#tpu.dimension_semantics<parallel>, #tpu.dimension_semantics<arbitrary>], iteration_bounds = array<i64: 1, 1>, scalar_prefetch = 0 : i64, scratch_operands = 1 : i64, tpu.core_type = #tpu.core_type<tc>, window_params = [{transform_indices = @transform_0, window_bounds = array<i64: 8, 8, 384>}, {pipeline_mode = #tpu.pipeline_mode<synchronous>, transform_indices = @transform_1, window_bounds = array<i64: 128, 384>}, {pipeline_mode = #tpu.pipeline_mode<synchronous>, transform_indices = @transform_2, window_bounds = array<i64: 1, 128>}, {transform_indices = @transform_3, window_bounds = array<i64: 8, 8, 128>}, {transform_indices = @transform_4, window_bounds = array<i64: 8, 128>}]} {
    %c0_i32 = arith.constant 0 : i32
    %0 = arith.cmpi eq, %arg1, %c0_i32 : i32
    %1 = arith.extui %0 : i1 to i32
    %c0_i32_0 = arith.constant 0 : i32
    %2 = arith.cmpi ne, %1, %c0_i32_0 : i32
    scf.if %2 {
      %cst_74 = arith.constant 0.000000e+00 : f32
      %260 = vector.broadcast %cst_74 : f32 to vector<8x128xf32>
      %c0_75 = arith.constant 0 : index
      %c0_76 = arith.constant 0 : index
      %261 = vector.load %arg7[%c0_75, %c0_76] : memref<8x128xf32, #tpu.memory_space<vmem>>, vector<8x128xf32>
      tpu.vector_store %arg7[%c0_75, %c0_76], %260 {strides = array<i32>} : memref<8x128xf32, #tpu.memory_space<vmem>>, vector<8x128xf32>,
    } else {
    }
    %c0 = arith.constant 0 : index
    %c0_1 = arith.constant 0 : index
    %3 = vector.load %arg7[%c0, %c0_1] : memref<8x128xf32, #tpu.memory_space<vmem>>, vector<8x128xf32>
    %c0_2 = arith.constant 0 : index
    %c0_3 = arith.constant 0 : index
    %4 = vector.load %arg3[%c0_2, %c0_3] : memref<128x384xf32, #tpu.memory_space<vmem>>, vector<128x384xf32>
    %c0_4 = arith.constant 0 : index
    %c0_5 = arith.constant 0 : index
    %5 = vector.load %arg4[%c0_4, %c0_5] : memref<1x128xf32, #tpu.memory_space<vmem>>, vector<1x128xf32>
    %6 = vector.shape_cast %5 : vector<1x128xf32> to vector<1x128xf32>
    %7 = vector.broadcast %6 : vector<1x128xf32> to vector<8x128xf32>
    %c0_6 = arith.constant 0 : index
    %c0_7 = arith.constant 0 : index
    %c0_8 = arith.constant 0 : index
    %8 = vector.load %arg2[%c0_6, %c0_7, %c0_8] : memref<8x8x384xf32, #tpu.memory_space<vmem>>, vector<1x8x384xf32>
    %9 = vector.shape_cast %8 : vector<1x8x384xf32> to vector<8x384xf32>
    %cst = arith.constant dense<0.000000e+00> : vector<8x384xf32>
    %10 = tpu.matmul %3, %4, %cst {dimension_numbers = #tpu.dot_dimension_numbers<[1], [0], [0], [1], [0, 0, 1, 1], [], []>} : vector<8x128xf32>, vector<128x384xf32>, vector<8x384xf32> -> vector<8x384xf32>
    %11 = vector.extract_strided_slice %9 {offsets = [0, 0], sizes = [8, 128], strides = [1, 1]} : vector<8x384xf32> to vector<8x128xf32>
    %12 = vector.extract_strided_slice %10 {offsets = [0, 0], sizes = [8, 128], strides = [1, 1]} : vector<8x384xf32> to vector<8x128xf32>
    %13 = arith.addf %11, %12 : vector<8x128xf32>
    %14 = arith.negf %13 : vector<8x128xf32>
    %15 = math.exp %14 : vector<8x128xf32>
    %cst_9 = arith.constant 1.000000e+00 : f32
    %16 = vector.broadcast %cst_9 : f32 to vector<8x128xf32>
    %17 = arith.addf %16, %15 : vector<8x128xf32>
    %18 = arith.divf %16, %17 : vector<8x128xf32>
    %19 = vector.extract_strided_slice %9 {offsets = [0, 128], sizes = [8, 128], strides = [1, 1]} : vector<8x384xf32> to vector<8x128xf32>
    %20 = vector.extract_strided_slice %10 {offsets = [0, 128], sizes = [8, 128], strides = [1, 1]} : vector<8x384xf32> to vector<8x128xf32>
    %21 = arith.addf %19, %20 : vector<8x128xf32>
    %22 = arith.negf %21 : vector<8x128xf32>
    %23 = math.exp %22 : vector<8x128xf32>
    %cst_10 = arith.constant 1.000000e+00 : f32
    %24 = vector.broadcast %cst_10 : f32 to vector<8x128xf32>
    %25 = arith.addf %24, %23 : vector<8x128xf32>
    %26 = arith.divf %24, %25 : vector<8x128xf32>
    %27 = vector.extract_strided_slice %9 {offsets = [0, 256], sizes = [8, 128], strides = [1, 1]} : vector<8x384xf32> to vector<8x128xf32>
    %28 = vector.extract_strided_slice %10 {offsets = [0, 256], sizes = [8, 128], strides = [1, 1]} : vector<8x384xf32> to vector<8x128xf32>
    %29 = arith.addf %28, %7 : vector<8x128xf32>
    %30 = arith.mulf %18, %29 : vector<8x128xf32>
    %31 = arith.addf %27, %30 : vector<8x128xf32>
    %32 = math.tanh %31 : vector<8x128xf32>
    %33 = arith.subf %3, %32 : vector<8x128xf32>
    %34 = arith.mulf %26, %33 : vector<8x128xf32>
    %35 = arith.addf %32, %34 : vector<8x128xf32>
    %c0_11 = arith.constant 0 : index
    %c0_12 = arith.constant 0 : index
    %c0_13 = arith.constant 0 : index
    %36 = vector.load %arg5[%c0_11, %c0_12, %c0_13] : memref<8x8x128xf32, #tpu.memory_space<vmem>>, vector<1x8x128xf32>
    %37 = vector.shape_cast %36 : vector<1x8x128xf32> to vector<8x128xf32>
    %38 = vector.shape_cast %35 : vector<8x128xf32> to vector<1x8x128xf32>
    tpu.vector_store %arg5[%c0_11, %c0_12, %c0_13], %38 {strides = array<i32>} : memref<8x8x128xf32, #tpu.memory_space<vmem>>, vector<1x8x128xf32>,
    %c1 = arith.constant 1 : index
    %c0_14 = arith.constant 0 : index
    %c0_15 = arith.constant 0 : index
    %39 = vector.load %arg2[%c1, %c0_14, %c0_15] : memref<8x8x384xf32, #tpu.memory_space<vmem>>, vector<1x8x384xf32>
    %40 = vector.shape_cast %39 : vector<1x8x384xf32> to vector<8x384xf32>
    %cst_16 = arith.constant dense<0.000000e+00> : vector<8x384xf32>
    %41 = tpu.matmul %35, %4, %cst_16 {dimension_numbers = #tpu.dot_dimension_numbers<[1], [0], [0], [1], [0, 0, 1, 1], [], []>} : vector<8x128xf32>, vector<128x384xf32>, vector<8x384xf32> -> vector<8x384xf32>
    %42 = vector.extract_strided_slice %40 {offsets = [0, 0], sizes = [8, 128], strides = [1, 1]} : vector<8x384xf32> to vector<8x128xf32>
    %43 = vector.extract_strided_slice %41 {offsets = [0, 0], sizes = [8, 128], strides = [1, 1]} : vector<8x384xf32> to vector<8x128xf32>
    %44 = arith.addf %42, %43 : vector<8x128xf32>
    %45 = arith.negf %44 : vector<8x128xf32>
    %46 = math.exp %45 : vector<8x128xf32>
    %cst_17 = arith.constant 1.000000e+00 : f32
    %47 = vector.broadcast %cst_17 : f32 to vector<8x128xf32>
    %48 = arith.addf %47, %46 : vector<8x128xf32>
    %49 = arith.divf %47, %48 : vector<8x128xf32>
    %50 = vector.extract_strided_slice %40 {offsets = [0, 128], sizes = [8, 128], strides = [1, 1]} : vector<8x384xf32> to vector<8x128xf32>
    %51 = vector.extract_strided_slice %41 {offsets = [0, 128], sizes = [8, 128], strides = [1, 1]} : vector<8x384xf32> to vector<8x128xf32>
    %52 = arith.addf %50, %51 : vector<8x128xf32>
    %53 = arith.negf %52 : vector<8x128xf32>
    %54 = math.exp %53 : vector<8x128xf32>
    %cst_18 = arith.constant 1.000000e+00 : f32
    %55 = vector.broadcast %cst_18 : f32 to vector<8x128xf32>
    %56 = arith.addf %55, %54 : vector<8x128xf32>
    %57 = arith.divf %55, %56 : vector<8x128xf32>
    %58 = vector.extract_strided_slice %40 {offsets = [0, 256], sizes = [8, 128], strides = [1, 1]} : vector<8x384xf32> to vector<8x128xf32>
    %59 = vector.extract_strided_slice %41 {offsets = [0, 256], sizes = [8, 128], strides = [1, 1]} : vector<8x384xf32> to vector<8x128xf32>
    %60 = arith.addf %59, %7 : vector<8x128xf32>
    %61 = arith.mulf %49, %60 : vector<8x128xf32>
    %62 = arith.addf %58, %61 : vector<8x128xf32>
    %63 = math.tanh %62 : vector<8x128xf32>
    %64 = arith.subf %35, %63 : vector<8x128xf32>
    %65 = arith.mulf %57, %64 : vector<8x128xf32>
    %66 = arith.addf %63, %65 : vector<8x128xf32>
    %c1_19 = arith.constant 1 : index
    %c0_20 = arith.constant 0 : index
    %c0_21 = arith.constant 0 : index
    %67 = vector.load %arg5[%c1_19, %c0_20, %c0_21] : memref<8x8x128xf32, #tpu.memory_space<vmem>>, vector<1x8x128xf32>
    %68 = vector.shape_cast %67 : vector<1x8x128xf32> to vector<8x128xf32>
    %69 = vector.shape_cast %66 : vector<8x128xf32> to vector<1x8x128xf32>
    tpu.vector_store %arg5[%c1_19, %c0_20, %c0_21], %69 {strides = array<i32>} : memref<8x8x128xf32, #tpu.memory_space<vmem>>, vector<1x8x128xf32>,
    %c2 = arith.constant 2 : index
    %c0_22 = arith.constant 0 : index
    %c0_23 = arith.constant 0 : index
    %70 = vector.load %arg2[%c2, %c0_22, %c0_23] : memref<8x8x384xf32, #tpu.memory_space<vmem>>, vector<1x8x384xf32>
    %71 = vector.shape_cast %70 : vector<1x8x384xf32> to vector<8x384xf32>
    %cst_24 = arith.constant dense<0.000000e+00> : vector<8x384xf32>
    %72 = tpu.matmul %66, %4, %cst_24 {dimension_numbers = #tpu.dot_dimension_numbers<[1], [0], [0], [1], [0, 0, 1, 1], [], []>} : vector<8x128xf32>, vector<128x384xf32>, vector<8x384xf32> -> vector<8x384xf32>
    %73 = vector.extract_strided_slice %71 {offsets = [0, 0], sizes = [8, 128], strides = [1, 1]} : vector<8x384xf32> to vector<8x128xf32>
    %74 = vector.extract_strided_slice %72 {offsets = [0, 0], sizes = [8, 128], strides = [1, 1]} : vector<8x384xf32> to vector<8x128xf32>
    %75 = arith.addf %73, %74 : vector<8x128xf32>
    %76 = arith.negf %75 : vector<8x128xf32>
    %77 = math.exp %76 : vector<8x128xf32>
    %cst_25 = arith.constant 1.000000e+00 : f32
    %78 = vector.broadcast %cst_25 : f32 to vector<8x128xf32>
    %79 = arith.addf %78, %77 : vector<8x128xf32>
    %80 = arith.divf %78, %79 : vector<8x128xf32>
    %81 = vector.extract_strided_slice %71 {offsets = [0, 128], sizes = [8, 128], strides = [1, 1]} : vector<8x384xf32> to vector<8x128xf32>
    %82 = vector.extract_strided_slice %72 {offsets = [0, 128], sizes = [8, 128], strides = [1, 1]} : vector<8x384xf32> to vector<8x128xf32>
    %83 = arith.addf %81, %82 : vector<8x128xf32>
    %84 = arith.negf %83 : vector<8x128xf32>
    %85 = math.exp %84 : vector<8x128xf32>
    %cst_26 = arith.constant 1.000000e+00 : f32
    %86 = vector.broadcast %cst_26 : f32 to vector<8x128xf32>
    %87 = arith.addf %86, %85 : vector<8x128xf32>
    %88 = arith.divf %86, %87 : vector<8x128xf32>
    %89 = vector.extract_strided_slice %71 {offsets = [0, 256], sizes = [8, 128], strides = [1, 1]} : vector<8x384xf32> to vector<8x128xf32>
    %90 = vector.extract_strided_slice %72 {offsets = [0, 256], sizes = [8, 128], strides = [1, 1]} : vector<8x384xf32> to vector<8x128xf32>
    %91 = arith.addf %90, %7 : vector<8x128xf32>
    %92 = arith.mulf %80, %91 : vector<8x128xf32>
    %93 = arith.addf %89, %92 : vector<8x128xf32>
    %94 = math.tanh %93 : vector<8x128xf32>
    %95 = arith.subf %66, %94 : vector<8x128xf32>
    %96 = arith.mulf %88, %95 : vector<8x128xf32>
    %97 = arith.addf %94, %96 : vector<8x128xf32>
    %c2_27 = arith.constant 2 : index
    %c0_28 = arith.constant 0 : index
    %c0_29 = arith.constant 0 : index
    %98 = vector.load %arg5[%c2_27, %c0_28, %c0_29] : memref<8x8x128xf32, #tpu.memory_space<vmem>>, vector<1x8x128xf32>
    %99 = vector.shape_cast %98 : vector<1x8x128xf32> to vector<8x128xf32>
    %100 = vector.shape_cast %97 : vector<8x128xf32> to vector<1x8x128xf32>
    tpu.vector_store %arg5[%c2_27, %c0_28, %c0_29], %100 {strides = array<i32>} : memref<8x8x128xf32, #tpu.memory_space<vmem>>, vector<1x8x128xf32>,
    %c3 = arith.constant 3 : index
    %c0_30 = arith.constant 0 : index
    %c0_31 = arith.constant 0 : index
    %101 = vector.load %arg2[%c3, %c0_30, %c0_31] : memref<8x8x384xf32, #tpu.memory_space<vmem>>, vector<1x8x384xf32>
    %102 = vector.shape_cast %101 : vector<1x8x384xf32> to vector<8x384xf32>
    %cst_32 = arith.constant dense<0.000000e+00> : vector<8x384xf32>
    %103 = tpu.matmul %97, %4, %cst_32 {dimension_numbers = #tpu.dot_dimension_numbers<[1], [0], [0], [1], [0, 0, 1, 1], [], []>} : vector<8x128xf32>, vector<128x384xf32>, vector<8x384xf32> -> vector<8x384xf32>
    %104 = vector.extract_strided_slice %102 {offsets = [0, 0], sizes = [8, 128], strides = [1, 1]} : vector<8x384xf32> to vector<8x128xf32>
    %105 = vector.extract_strided_slice %103 {offsets = [0, 0], sizes = [8, 128], strides = [1, 1]} : vector<8x384xf32> to vector<8x128xf32>
    %106 = arith.addf %104, %105 : vector<8x128xf32>
    %107 = arith.negf %106 : vector<8x128xf32>
    %108 = math.exp %107 : vector<8x128xf32>
    %cst_33 = arith.constant 1.000000e+00 : f32
    %109 = vector.broadcast %cst_33 : f32 to vector<8x128xf32>
    %110 = arith.addf %109, %108 : vector<8x128xf32>
    %111 = arith.divf %109, %110 : vector<8x128xf32>
    %112 = vector.extract_strided_slice %102 {offsets = [0, 128], sizes = [8, 128], strides = [1, 1]} : vector<8x384xf32> to vector<8x128xf32>
    %113 = vector.extract_strided_slice %103 {offsets = [0, 128], sizes = [8, 128], strides = [1, 1]} : vector<8x384xf32> to vector<8x128xf32>
    %114 = arith.addf %112, %113 : vector<8x128xf32>
    %115 = arith.negf %114 : vector<8x128xf32>
    %116 = math.exp %115 : vector<8x128xf32>
    %cst_34 = arith.constant 1.000000e+00 : f32
    %117 = vector.broadcast %cst_34 : f32 to vector<8x128xf32>
    %118 = arith.addf %117, %116 : vector<8x128xf32>
    %119 = arith.divf %117, %118 : vector<8x128xf32>
    %120 = vector.extract_strided_slice %102 {offsets = [0, 256], sizes = [8, 128], strides = [1, 1]} : vector<8x384xf32> to vector<8x128xf32>
    %121 = vector.extract_strided_slice %103 {offsets = [0, 256], sizes = [8, 128], strides = [1, 1]} : vector<8x384xf32> to vector<8x128xf32>
    %122 = arith.addf %121, %7 : vector<8x128xf32>
    %123 = arith.mulf %111, %122 : vector<8x128xf32>
    %124 = arith.addf %120, %123 : vector<8x128xf32>
    %125 = math.tanh %124 : vector<8x128xf32>
    %126 = arith.subf %97, %125 : vector<8x128xf32>
    %127 = arith.mulf %119, %126 : vector<8x128xf32>
    %128 = arith.addf %125, %127 : vector<8x128xf32>
    %c3_35 = arith.constant 3 : index
    %c0_36 = arith.constant 0 : index
    %c0_37 = arith.constant 0 : index
    %129 = vector.load %arg5[%c3_35, %c0_36, %c0_37] : memref<8x8x128xf32, #tpu.memory_space<vmem>>, vector<1x8x128xf32>
    %130 = vector.shape_cast %129 : vector<1x8x128xf32> to vector<8x128xf32>
    %131 = vector.shape_cast %128 : vector<8x128xf32> to vector<1x8x128xf32>
    tpu.vector_store %arg5[%c3_35, %c0_36, %c0_37], %131 {strides = array<i32>} : memref<8x8x128xf32, #tpu.memory_space<vmem>>, vector<1x8x128xf32>,
    %c4 = arith.constant 4 : index
    %c0_38 = arith.constant 0 : index
    %c0_39 = arith.constant 0 : index
    %132 = vector.load %arg2[%c4, %c0_38, %c0_39] : memref<8x8x384xf32, #tpu.memory_space<vmem>>, vector<1x8x384xf32>
    %133 = vector.shape_cast %132 : vector<1x8x384xf32> to vector<8x384xf32>
    %cst_40 = arith.constant dense<0.000000e+00> : vector<8x384xf32>
    %134 = tpu.matmul %128, %4, %cst_40 {dimension_numbers = #tpu.dot_dimension_numbers<[1], [0], [0], [1], [0, 0, 1, 1], [], []>} : vector<8x128xf32>, vector<128x384xf32>, vector<8x384xf32> -> vector<8x384xf32>
    %135 = vector.extract_strided_slice %133 {offsets = [0, 0], sizes = [8, 128], strides = [1, 1]} : vector<8x384xf32> to vector<8x128xf32>
    %136 = vector.extract_strided_slice %134 {offsets = [0, 0], sizes = [8, 128], strides = [1, 1]} : vector<8x384xf32> to vector<8x128xf32>
    %137 = arith.addf %135, %136 : vector<8x128xf32>
    %138 = arith.negf %137 : vector<8x128xf32>
    %139 = math.exp %138 : vector<8x128xf32>
    %cst_41 = arith.constant 1.000000e+00 : f32
    %140 = vector.broadcast %cst_41 : f32 to vector<8x128xf32>
    %141 = arith.addf %140, %139 : vector<8x128xf32>
    %142 = arith.divf %140, %141 : vector<8x128xf32>
    %143 = vector.extract_strided_slice %133 {offsets = [0, 128], sizes = [8, 128], strides = [1, 1]} : vector<8x384xf32> to vector<8x128xf32>
    %144 = vector.extract_strided_slice %134 {offsets = [0, 128], sizes = [8, 128], strides = [1, 1]} : vector<8x384xf32> to vector<8x128xf32>
    %145 = arith.addf %143, %144 : vector<8x128xf32>
    %146 = arith.negf %145 : vector<8x128xf32>
    %147 = math.exp %146 : vector<8x128xf32>
    %cst_42 = arith.constant 1.000000e+00 : f32
    %148 = vector.broadcast %cst_42 : f32 to vector<8x128xf32>
    %149 = arith.addf %148, %147 : vector<8x128xf32>
    %150 = arith.divf %148, %149 : vector<8x128xf32>
    %151 = vector.extract_strided_slice %133 {offsets = [0, 256], sizes = [8, 128], strides = [1, 1]} : vector<8x384xf32> to vector<8x128xf32>
    %152 = vector.extract_strided_slice %134 {offsets = [0, 256], sizes = [8, 128], strides = [1, 1]} : vector<8x384xf32> to vector<8x128xf32>
    %153 = arith.addf %152, %7 : vector<8x128xf32>
    %154 = arith.mulf %142, %153 : vector<8x128xf32>
    %155 = arith.addf %151, %154 : vector<8x128xf32>
    %156 = math.tanh %155 : vector<8x128xf32>
    %157 = arith.subf %128, %156 : vector<8x128xf32>
    %158 = arith.mulf %150, %157 : vector<8x128xf32>
    %159 = arith.addf %156, %158 : vector<8x128xf32>
    %c4_43 = arith.constant 4 : index
    %c0_44 = arith.constant 0 : index
    %c0_45 = arith.constant 0 : index
    %160 = vector.load %arg5[%c4_43, %c0_44, %c0_45] : memref<8x8x128xf32, #tpu.memory_space<vmem>>, vector<1x8x128xf32>
    %161 = vector.shape_cast %160 : vector<1x8x128xf32> to vector<8x128xf32>
    %162 = vector.shape_cast %159 : vector<8x128xf32> to vector<1x8x128xf32>
    tpu.vector_store %arg5[%c4_43, %c0_44, %c0_45], %162 {strides = array<i32>} : memref<8x8x128xf32, #tpu.memory_space<vmem>>, vector<1x8x128xf32>,
    %c5 = arith.constant 5 : index
    %c0_46 = arith.constant 0 : index
    %c0_47 = arith.constant 0 : index
    %163 = vector.load %arg2[%c5, %c0_46, %c0_47] : memref<8x8x384xf32, #tpu.memory_space<vmem>>, vector<1x8x384xf32>
    %164 = vector.shape_cast %163 : vector<1x8x384xf32> to vector<8x384xf32>
    %cst_48 = arith.constant dense<0.000000e+00> : vector<8x384xf32>
    %165 = tpu.matmul %159, %4, %cst_48 {dimension_numbers = #tpu.dot_dimension_numbers<[1], [0], [0], [1], [0, 0, 1, 1], [], []>} : vector<8x128xf32>, vector<128x384xf32>, vector<8x384xf32> -> vector<8x384xf32>
    %166 = vector.extract_strided_slice %164 {offsets = [0, 0], sizes = [8, 128], strides = [1, 1]} : vector<8x384xf32> to vector<8x128xf32>
    %167 = vector.extract_strided_slice %165 {offsets = [0, 0], sizes = [8, 128], strides = [1, 1]} : vector<8x384xf32> to vector<8x128xf32>
    %168 = arith.addf %166, %167 : vector<8x128xf32>
    %169 = arith.negf %168 : vector<8x128xf32>
    %170 = math.exp %169 : vector<8x128xf32>
    %cst_49 = arith.constant 1.000000e+00 : f32
    %171 = vector.broadcast %cst_49 : f32 to vector<8x128xf32>
    %172 = arith.addf %171, %170 : vector<8x128xf32>
    %173 = arith.divf %171, %172 : vector<8x128xf32>
    %174 = vector.extract_strided_slice %164 {offsets = [0, 128], sizes = [8, 128], strides = [1, 1]} : vector<8x384xf32> to vector<8x128xf32>
    %175 = vector.extract_strided_slice %165 {offsets = [0, 128], sizes = [8, 128], strides = [1, 1]} : vector<8x384xf32> to vector<8x128xf32>
    %176 = arith.addf %174, %175 : vector<8x128xf32>
    %177 = arith.negf %176 : vector<8x128xf32>
    %178 = math.exp %177 : vector<8x128xf32>
    %cst_50 = arith.constant 1.000000e+00 : f32
    %179 = vector.broadcast %cst_50 : f32 to vector<8x128xf32>
    %180 = arith.addf %179, %178 : vector<8x128xf32>
    %181 = arith.divf %179, %180 : vector<8x128xf32>
    %182 = vector.extract_strided_slice %164 {offsets = [0, 256], sizes = [8, 128], strides = [1, 1]} : vector<8x384xf32> to vector<8x128xf32>
    %183 = vector.extract_strided_slice %165 {offsets = [0, 256], sizes = [8, 128], strides = [1, 1]} : vector<8x384xf32> to vector<8x128xf32>
    %184 = arith.addf %183, %7 : vector<8x128xf32>
    %185 = arith.mulf %173, %184 : vector<8x128xf32>
    %186 = arith.addf %182, %185 : vector<8x128xf32>
    %187 = math.tanh %186 : vector<8x128xf32>
    %188 = arith.subf %159, %187 : vector<8x128xf32>
    %189 = arith.mulf %181, %188 : vector<8x128xf32>
    %190 = arith.addf %187, %189 : vector<8x128xf32>
    %c5_51 = arith.constant 5 : index
    %c0_52 = arith.constant 0 : index
    %c0_53 = arith.constant 0 : index
    %191 = vector.load %arg5[%c5_51, %c0_52, %c0_53] : memref<8x8x128xf32, #tpu.memory_space<vmem>>, vector<1x8x128xf32>
    %192 = vector.shape_cast %191 : vector<1x8x128xf32> to vector<8x128xf32>
    %193 = vector.shape_cast %190 : vector<8x128xf32> to vector<1x8x128xf32>
    tpu.vector_store %arg5[%c5_51, %c0_52, %c0_53], %193 {strides = array<i32>} : memref<8x8x128xf32, #tpu.memory_space<vmem>>, vector<1x8x128xf32>,
    %c6 = arith.constant 6 : index
    %c0_54 = arith.constant 0 : index
    %c0_55 = arith.constant 0 : index
    %194 = vector.load %arg2[%c6, %c0_54, %c0_55] : memref<8x8x384xf32, #tpu.memory_space<vmem>>, vector<1x8x384xf32>
    %195 = vector.shape_cast %194 : vector<1x8x384xf32> to vector<8x384xf32>
    %cst_56 = arith.constant dense<0.000000e+00> : vector<8x384xf32>
    %196 = tpu.matmul %190, %4, %cst_56 {dimension_numbers = #tpu.dot_dimension_numbers<[1], [0], [0], [1], [0, 0, 1, 1], [], []>} : vector<8x128xf32>, vector<128x384xf32>, vector<8x384xf32> -> vector<8x384xf32>
    %197 = vector.extract_strided_slice %195 {offsets = [0, 0], sizes = [8, 128], strides = [1, 1]} : vector<8x384xf32> to vector<8x128xf32>
    %198 = vector.extract_strided_slice %196 {offsets = [0, 0], sizes = [8, 128], strides = [1, 1]} : vector<8x384xf32> to vector<8x128xf32>
    %199 = arith.addf %197, %198 : vector<8x128xf32>
    %200 = arith.negf %199 : vector<8x128xf32>
    %201 = math.exp %200 : vector<8x128xf32>
    %cst_57 = arith.constant 1.000000e+00 : f32
    %202 = vector.broadcast %cst_57 : f32 to vector<8x128xf32>
    %203 = arith.addf %202, %201 : vector<8x128xf32>
    %204 = arith.divf %202, %203 : vector<8x128xf32>
    %205 = vector.extract_strided_slice %195 {offsets = [0, 128], sizes = [8, 128], strides = [1, 1]} : vector<8x384xf32> to vector<8x128xf32>
    %206 = vector.extract_strided_slice %196 {offsets = [0, 128], sizes = [8, 128], strides = [1, 1]} : vector<8x384xf32> to vector<8x128xf32>
    %207 = arith.addf %205, %206 : vector<8x128xf32>
    %208 = arith.negf %207 : vector<8x128xf32>
    %209 = math.exp %208 : vector<8x128xf32>
    %cst_58 = arith.constant 1.000000e+00 : f32
    %210 = vector.broadcast %cst_58 : f32 to vector<8x128xf32>
    %211 = arith.addf %210, %209 : vector<8x128xf32>
    %212 = arith.divf %210, %211 : vector<8x128xf32>
    %213 = vector.extract_strided_slice %195 {offsets = [0, 256], sizes = [8, 128], strides = [1, 1]} : vector<8x384xf32> to vector<8x128xf32>
    %214 = vector.extract_strided_slice %196 {offsets = [0, 256], sizes = [8, 128], strides = [1, 1]} : vector<8x384xf32> to vector<8x128xf32>
    %215 = arith.addf %214, %7 : vector<8x128xf32>
    %216 = arith.mulf %204, %215 : vector<8x128xf32>
    %217 = arith.addf %213, %216 : vector<8x128xf32>
    %218 = math.tanh %217 : vector<8x128xf32>
    %219 = arith.subf %190, %218 : vector<8x128xf32>
    %220 = arith.mulf %212, %219 : vector<8x128xf32>
    %221 = arith.addf %218, %220 : vector<8x128xf32>
    %c6_59 = arith.constant 6 : index
    %c0_60 = arith.constant 0 : index
    %c0_61 = arith.constant 0 : index
    %222 = vector.load %arg5[%c6_59, %c0_60, %c0_61] : memref<8x8x128xf32, #tpu.memory_space<vmem>>, vector<1x8x128xf32>
    %223 = vector.shape_cast %222 : vector<1x8x128xf32> to vector<8x128xf32>
    %224 = vector.shape_cast %221 : vector<8x128xf32> to vector<1x8x128xf32>
    tpu.vector_store %arg5[%c6_59, %c0_60, %c0_61], %224 {strides = array<i32>} : memref<8x8x128xf32, #tpu.memory_space<vmem>>, vector<1x8x128xf32>,
    %c7 = arith.constant 7 : index
    %c0_62 = arith.constant 0 : index
    %c0_63 = arith.constant 0 : index
    %225 = vector.load %arg2[%c7, %c0_62, %c0_63] : memref<8x8x384xf32, #tpu.memory_space<vmem>>, vector<1x8x384xf32>
    %226 = vector.shape_cast %225 : vector<1x8x384xf32> to vector<8x384xf32>
    %cst_64 = arith.constant dense<0.000000e+00> : vector<8x384xf32>
    %227 = tpu.matmul %221, %4, %cst_64 {dimension_numbers = #tpu.dot_dimension_numbers<[1], [0], [0], [1], [0, 0, 1, 1], [], []>} : vector<8x128xf32>, vector<128x384xf32>, vector<8x384xf32> -> vector<8x384xf32>
    %228 = vector.extract_strided_slice %226 {offsets = [0, 0], sizes = [8, 128], strides = [1, 1]} : vector<8x384xf32> to vector<8x128xf32>
    %229 = vector.extract_strided_slice %227 {offsets = [0, 0], sizes = [8, 128], strides = [1, 1]} : vector<8x384xf32> to vector<8x128xf32>
    %230 = arith.addf %228, %229 : vector<8x128xf32>
    %231 = arith.negf %230 : vector<8x128xf32>
    %232 = math.exp %231 : vector<8x128xf32>
    %cst_65 = arith.constant 1.000000e+00 : f32
    %233 = vector.broadcast %cst_65 : f32 to vector<8x128xf32>
    %234 = arith.addf %233, %232 : vector<8x128xf32>
    %235 = arith.divf %233, %234 : vector<8x128xf32>
    %236 = vector.extract_strided_slice %226 {offsets = [0, 128], sizes = [8, 128], strides = [1, 1]} : vector<8x384xf32> to vector<8x128xf32>
    %237 = vector.extract_strided_slice %227 {offsets = [0, 128], sizes = [8, 128], strides = [1, 1]} : vector<8x384xf32> to vector<8x128xf32>
    %238 = arith.addf %236, %237 : vector<8x128xf32>
    %239 = arith.negf %238 : vector<8x128xf32>
    %240 = math.exp %239 : vector<8x128xf32>
    %cst_66 = arith.constant 1.000000e+00 : f32
    %241 = vector.broadcast %cst_66 : f32 to vector<8x128xf32>
    %242 = arith.addf %241, %240 : vector<8x128xf32>
    %243 = arith.divf %241, %242 : vector<8x128xf32>
    %244 = vector.extract_strided_slice %226 {offsets = [0, 256], sizes = [8, 128], strides = [1, 1]} : vector<8x384xf32> to vector<8x128xf32>
    %245 = vector.extract_strided_slice %227 {offsets = [0, 256], sizes = [8, 128], strides = [1, 1]} : vector<8x384xf32> to vector<8x128xf32>
    %246 = arith.addf %245, %7 : vector<8x128xf32>
    %247 = arith.mulf %235, %246 : vector<8x128xf32>
    %248 = arith.addf %244, %247 : vector<8x128xf32>
    %249 = math.tanh %248 : vector<8x128xf32>
    %250 = arith.subf %221, %249 : vector<8x128xf32>
    %251 = arith.mulf %243, %250 : vector<8x128xf32>
    %252 = arith.addf %249, %251 : vector<8x128xf32>
    %c7_67 = arith.constant 7 : index
    %c0_68 = arith.constant 0 : index
    %c0_69 = arith.constant 0 : index
    %253 = vector.load %arg5[%c7_67, %c0_68, %c0_69] : memref<8x8x128xf32, #tpu.memory_space<vmem>>, vector<1x8x128xf32>
    %254 = vector.shape_cast %253 : vector<1x8x128xf32> to vector<8x128xf32>
    %255 = vector.shape_cast %252 : vector<8x128xf32> to vector<1x8x128xf32>
    tpu.vector_store %arg5[%c7_67, %c0_68, %c0_69], %255 {strides = array<i32>} : memref<8x8x128xf32, #tpu.memory_space<vmem>>, vector<1x8x128xf32>,
    %c0_i32_70 = arith.constant 0 : i32
    %256 = arith.cmpi eq, %arg1, %c0_i32_70 : i32
    %257 = arith.extui %256 : i1 to i32
    %c0_i32_71 = arith.constant 0 : i32
    %258 = arith.cmpi ne, %257, %c0_i32_71 : i32
    scf.if %258 {
      %c0_74 = arith.constant 0 : index
      %c0_75 = arith.constant 0 : index
      %260 = vector.load %arg6[%c0_74, %c0_75] : memref<8x128xf32, #tpu.memory_space<vmem>>, vector<8x128xf32>
      tpu.vector_store %arg6[%c0_74, %c0_75], %252 {strides = array<i32>} : memref<8x128xf32, #tpu.memory_space<vmem>>, vector<8x128xf32>,
    } else {
    }
    %c0_72 = arith.constant 0 : index
    %c0_73 = arith.constant 0 : index
    %259 = vector.load %arg7[%c0_72, %c0_73] : memref<8x128xf32, #tpu.memory_space<vmem>>, vector<8x128xf32>
    tpu.vector_store %arg7[%c0_72, %c0_73], %252 {strides = array<i32>} : memref<8x128xf32, #tpu.memory_space<vmem>>, vector<8x128xf32>,
    return
  }
  func.func @transform_0(%arg0: i32, %arg1: i32) -> (i32, i32, i32) {
    %c0_i32 = arith.constant 0 : i32
    %c0_i32_0 = arith.constant 0 : i32
    return %arg1, %arg0, %c0_i32 : i32, i32, i32
  }
  func.func @transform_1(%arg0: i32, %arg1: i32) -> (i32, i32) {
    %c0_i32 = arith.constant 0 : i32
    %c0_i32_0 = arith.constant 0 : i32
    %c0_i32_1 = arith.constant 0 : i32
    return %c0_i32, %c0_i32_0 : i32, i32
  }
  func.func @transform_2(%arg0: i32, %arg1: i32) -> (i32, i32) {
    %c0_i32 = arith.constant 0 : i32
    %c0_i32_0 = arith.constant 0 : i32
    %c0_i32_1 = arith.constant 0 : i32
    return %c0_i32, %c0_i32_0 : i32, i32
  }
  func.func @transform_3(%arg0: i32, %arg1: i32) -> (i32, i32, i32) {
    %c0_i32 = arith.constant 0 : i32
    %c0_i32_0 = arith.constant 0 : i32
    return %arg1, %arg0, %c0_i32 : i32, i32, i32
  }
  func.func @transform_4(%arg0: i32, %arg1: i32) -> (i32, i32) {
    %c0_i32 = arith.constant 0 : i32
    %c0_i32_0 = arith.constant 0 : i32
    return %arg0, %c0_i32 : i32, i32
  }
}

</mosaic_0001>

<llo_original>
// kernel: tpu_custom_call.1
$region0: #{tpu_custom_call.1}
  #allocation0 [shape = 'u32[]', space=smem, size = 0x4, offset = 0x4, fixed_abs, tag = 'smem constant byte address 0x4 - core index']
  #allocation1 [shape = 'u32[144,128]{1,0:T(1,128)}', space=vmem, size = 0x12000, scoped, tag = 'internal scratch']
  #allocation2 [shape = 'f32[8,128]{1,0:T(8,128)}', space=vmem, size = 0x1000, scoped, tag = 'scratch operand']
  %s0 = inlined_call_operand.hbm [shape: f32[8,8,384], index: 0, kind: input, shape index: {}]
  %s1 = inlined_call_operand.hbm [shape: f32[128,384], index: 1, kind: input, shape index: {}]
  %s2 = inlined_call_operand.vmem [shape: f32[1,128], index: 2, kind: input, shape index: {}]
  %s3 = inlined_call_operand.hbm [shape: f32[8,8,128], index: 3, kind: output, shape index: {0}]
  %s4 = inlined_call_operand.hbm [shape: f32[8,128], index: 4, kind: output, shape index: {1}]
  %5 = xla_tuple %s3, %s4
  %s6 = sld [smem:[#allocation0]]
  $region46: #{tpu_custom_call.1} parent=0
    _
  %s8 = ssub.s32 1, %s6
  %s9 = scalar_select 0, %s8, %s6
  $region1: #{tpu_custom_call.1} parent=0
    #allocation3 [shape = 'u8[98304]{0}', space=vmem, size = 0x18000, scoped, tag = 'input window, operand 0, single buffered']
    #allocation4 [shape = 's32[1]{0}', space=sflag, size = 0x4, scoped, tag = 'scoped memory for tpu_custom_call.1']
    #allocation5 [shape = 's32[1]{0}', space=sflag, size = 0x4, scoped, tag = 'scoped memory for tpu_custom_call.1']
    #allocation6 [shape = 'u8[196608]{0}', space=vmem, size = 0x30000, scoped, tag = 'input window, operand 1, single buffered']
    #allocation7 [shape = 's32[1]{0}', space=sflag, size = 0x4, scoped, tag = 'scoped memory for tpu_custom_call.1']
    #allocation8 [shape = 'u8[32768]{0}', space=vmem, size = 0x8000, scoped, tag = 'output window, operand 0, single buffered']
    #allocation9 [shape = 'u8[4096]{0}', space=vmem, size = 0x1000, scoped, tag = 'output window, operand 1, single buffered']
    #allocation10 [shape = 's32[1]{0}', space=sflag, size = 0x4, scoped, tag = 'scoped memory for tpu_custom_call.1']
    %10 = vsyncpa [#allocation4], 0
    %11 = vsyncpa [#allocation7], 0
    %12 = vsyncpa [#allocation5], 0
    %13 = vsyncpa [#allocation10], 0
    // Predicated region
    $region2: #{tpu_custom_call.1} parent=1 // pred_check
      _
    $region3: #{tpu_custom_call.1} parent=1 // pred_check_branch
      %15 = sbr.rel (0) target = $region5
    $region4: #{tpu_custom_call.1} parent=1 // pred_region
      %s17 = ssub.s32 3072, 3072
      %18 = vsyncadd [#allocation4], %s17
      %s19 = sshll.u32 [#allocation3], 4
      %s20 = int_to_ptr.vmem [resolvable:$true] %s19
      %25 = dma.hbm_to_vmem [thread:$0]  %s0, 3072, %s20, [#allocation4], 384, 384, 24
    $region5: #{tpu_custom_call.1} parent=1 // pred_fallthru
      _
    // Predicated region
    $region6: #{tpu_custom_call.1} parent=1 // pred_check
      _
    $region7: #{tpu_custom_call.1} parent=1 // pred_check_branch
      %27 = sbr.rel (0) target = $region9
    $region8: #{tpu_custom_call.1} parent=1 // pred_region
      %s29 = ssub.s32 6144, 6144
      %30 = vsyncadd [#allocation7], %s29
      %s31 = sshll.u32 [#allocation6], 4
      %s32 = int_to_ptr.vmem [resolvable:$true] %s31
      %37 = dma.hbm_to_vmem [thread:$0]  %s1, 6144, %s32, [#allocation7], 384, 384, 24
    $region9: #{tpu_custom_call.1} parent=1 // pred_fallthru
      _
    // Predicated region
    $region10: #{tpu_custom_call.1} parent=1 // pred_check
      _
    $region11: #{tpu_custom_call.1} parent=1 // pred_check_branch
      %39 = sbr.rel (0) target = $region13
    $region12: #{tpu_custom_call.1} parent=1 // pred_region
      _
    $region13: #{tpu_custom_call.1} parent=1 // pred_fallthru
      _
    // Predicated region
    $region14: #{tpu_custom_call.1} parent=1 // pred_check
      _
    $region15: #{tpu_custom_call.1} parent=1 // pred_check_branch
      %41 = sbr.rel (0) target = $region17
    $region16: #{tpu_custom_call.1} parent=1 // pred_region
      %42 = dma.done [#allocation4], 3072
    $region17: #{tpu_custom_call.1} parent=1 // pred_fallthru
      _
    // Predicated region
    $region18: #{tpu_custom_call.1} parent=1 // pred_check
      _
    $region19: #{tpu_custom_call.1} parent=1 // pred_check_branch
      %44 = sbr.rel (0) target = $region21
    $region20: #{tpu_custom_call.1} parent=1 // pred_region
      %45 = dma.done [#allocation7], 6144
    $region21: #{tpu_custom_call.1} parent=1 // pred_fallthru
      _
    %p46 = scmp.eq.s32.totalorder 0, 0
    // Predicated region
    $region22: #{tpu_custom_call.1} parent=1 // pred_check
      %p47 = pneg %p46
    $region23: #{tpu_custom_call.1} parent=1 // pred_check_branch
      %49 = sbr.rel (%p47) target = $region25
    $region24: #{tpu_custom_call.1} parent=1 // pred_region
      %50 = vst [vmem:[#allocation2] sm:$0xff] 0.0
    $region25: #{tpu_custom_call.1} parent=1 // pred_fallthru
      _
    %v51 = vld [vmem:[#allocation2] sm:$0xff]
    %v52 = vld [vmem:[#allocation6] sm:$0xff]
    %v53 = vld [vmem:[#allocation6 + $0x8] sm:$0xff]
    %v54 = vld [vmem:[#allocation6 + $0x10] sm:$0xff]
    %v55 = vld [vmem:[#allocation6 + $0x18] sm:$0xff]
    %v56 = vld [vmem:[#allocation6 + $0x20] sm:$0xff]
    %v57 = vld [vmem:[#allocation6 + $0x28] sm:$0xff]
    %v58 = vld [vmem:[#allocation6 + $0x30] sm:$0xff]
    %v59 = vld [vmem:[#allocation6 + $0x38] sm:$0xff]
    %v60 = vld [vmem:[#allocation6 + $0x40] sm:$0xff]
    %v61 = vld [vmem:[#allocation6 + $0x48] sm:$0xff]
    %v62 = vld [vmem:[#allocation6 + $0x50] sm:$0xff]
    %v63 = vld [vmem:[#allocation6 + $0x58] sm:$0xff]
    %v64 = vld [vmem:[#allocation6 + $0x60] sm:$0xff]
    %v65 = vld [vmem:[#allocation6 + $0x68] sm:$0xff]
    %v66 = vld [vmem:[#allocation6 + $0x70] sm:$0xff]
    %v67 = vld [vmem:[#allocation6 + $0x78] sm:$0xff]
    %v68 = vld [vmem:[#allocation6 + $0x80] sm:$0xff]
    %v69 = vld [vmem:[#allocation6 + $0x88] sm:$0xff]
    %v70 = vld [vmem:[#allocation6 + $0x90] sm:$0xff]
    %v71 = vld [vmem:[#allocation6 + $0x98] sm:$0xff]
    %v72 = vld [vmem:[#allocation6 + $0xa0] sm:$0xff]
    %v73 = vld [vmem:[#allocation6 + $0xa8] sm:$0xff]
    %v74 = vld [vmem:[#allocation6 + $0xb0] sm:$0xff]
    %v75 = vld [vmem:[#allocation6 + $0xb8] sm:$0xff]
    %v76 = vld [vmem:[#allocation6 + $0xc0] sm:$0xff]
    %v77 = vld [vmem:[#allocation6 + $0xc8] sm:$0xff]
    %v78 = vld [vmem:[#allocation6 + $0xd0] sm:$0xff]
    %v79 = vld [vmem:[#allocation6 + $0xd8] sm:$0xff]
    %v80 = vld [vmem:[#allocation6 + $0xe0] sm:$0xff]
    %v81 = vld [vmem:[#allocation6 + $0xe8] sm:$0xff]
    %v82 = vld [vmem:[#allocation6 + $0xf0] sm:$0xff]
    %v83 = vld [vmem:[#allocation6 + $0xf8] sm:$0xff]
    %v84 = vld [vmem:[#allocation6 + $0x100] sm:$0xff]
    %v85 = vld [vmem:[#allocation6 + $0x108] sm:$0xff]
    %v86 = vld [vmem:[#allocation6 + $0x110] sm:$0xff]
    %v87 = vld [vmem:[#allocation6 + $0x118] sm:$0xff]
    %v88 = vld [vmem:[#allocation6 + $0x120] sm:$0xff]
    %v89 = vld [vmem:[#allocation6 + $0x128] sm:$0xff]
    %v90 = vld [vmem:[#allocation6 + $0x130] sm:$0xff]
    %v91 = vld [vmem:[#allocation6 + $0x138] sm:$0xff]
    %v92 = vld [vmem:[#allocation6 + $0x140] sm:$0xff]
    %v93 = vld [vmem:[#allocation6 + $0x148] sm:$0xff]
    %v94 = vld [vmem:[#allocation6 + $0x150] sm:$0xff]
    %v95 = vld [vmem:[#allocation6 + $0x158] sm:$0xff]
    %v96 = vld [vmem:[#allocation6 + $0x160] sm:$0xff]
    %v97 = vld [vmem:[#allocation6 + $0x168] sm:$0xff]
    %v98 = vld [vmem:[#allocation6 + $0x170] sm:$0xff]
    %v99 = vld [vmem:[#allocation6 + $0x178] sm:$0xff]
    %v100 = vld [vmem:[%s2] sm:$0x1]
    %v102 = vlaneseq
    %v103 = vshrl.u32 %v102, 7
    %v104 = vsub.s32 0, %v103
    %v105 = vrot.slane %v100, %v104
    %v107 = vld [vmem:[#allocation3] sm:$0xff]
    %v108 = vld [vmem:[#allocation3 + $0x8] sm:$0xff]
    %v109 = vld [vmem:[#allocation3 + $0x10] sm:$0xff]
    %110 = vmatprep.subr.mxu0 %v98
    %111 = vmatpush1.msra.mxu0 %v97
    %112 = vmatprep.subr.mxu0 %v95
    %113 = vmatpush1.msra.mxu0 %v94
    %114 = vmatprep.subr.mxu0 %v92
    %115 = vmatpush1.msra.mxu0 %v91
    %116 = vmatprep.subr.mxu0 %v89
    %117 = vmatpush1.msra.mxu0 %v88
    %118 = vmatprep.subr.mxu0 %v86
    %119 = vmatpush1.msra.mxu0 %v85
    %120 = vmatprep.subr.mxu0 %v83
    %121 = vmatpush1.msra.mxu0 %v82
    %122 = vmatprep.subr.mxu0 %v80
    %123 = vmatpush1.msra.mxu0 %v79
    %124 = vmatprep.subr.mxu0 %v77
    %125 = vmatpush1.msra.mxu0 %v76
    %126 = vmatprep.subr.mxu0 %v74
    %127 = vmatpush1.msra.mxu0 %v73
    %128 = vmatprep.subr.mxu0 %v71
    %129 = vmatpush1.msra.mxu0 %v70
    %130 = vmatprep.subr.mxu0 %v68
    %131 = vmatpush1.msra.mxu0 %v67
    %132 = vmatprep.subr.mxu0 %v65
    %133 = vmatpush1.msra.mxu0 %v64
    %134 = vmatprep.subr.mxu0 %v62
    %135 = vmatpush1.msra.mxu0 %v61
    %136 = vmatprep.subr.mxu0 %v59
    %137 = vmatpush1.msra.mxu0 %v58
    %138 = vmatprep.subr.mxu0 %v56
    %139 = vmatpush1.msra.mxu0 %v55
    %140 = vmatprep.subr.mxu0 %v53
    %141 = vmatpush1.msra.mxu0 %v52
    %142 = vmatprep.subr.mxu0 0.0
    %143 = vmatpush2.msra.mxu0 0.0
    %144 = vmatprep.subr.mxu0 0.0
    %145 = vmatpush2.msra.mxu0 0.0
    %146 = vmatprep.subr.mxu0 0.0
    %147 = vmatpush2.msra.mxu0 0.0
    %148 = vmatprep.subr.mxu0 0.0
    %149 = vmatpush2.msra.mxu0 0.0
    %150 = vmatprep.subr.mxu0 0.0
    %151 = vmatpush2.msra.mxu0 0.0
    %152 = vmatprep.subr.mxu0 0.0
    %153 = vmatpush2.msra.mxu0 0.0
    %154 = vmatprep.subr.mxu0 0.0
    %155 = vmatpush2.msra.mxu0 0.0
    %156 = vmatprep.subr.mxu0 0.0
    %157 = vmatpush2.msra.mxu0 0.0
    %158 = vmatprep.subr.mxu0 0.0
    %159 = vmatpush2.msra.mxu0 0.0
    %160 = vmatprep.subr.mxu0 0.0
    %161 = vmatpush2.msra.mxu0 0.0
    %162 = vmatprep.subr.mxu0 0.0
    %163 = vmatpush2.msra.mxu0 0.0
    %164 = vmatprep.subr.mxu0 0.0
    %165 = vmatpush2.msra.mxu0 0.0
    %166 = vmatprep.subr.mxu0 0.0
    %167 = vmatpush2.msra.mxu0 0.0
    %168 = vmatprep.subr.mxu0 0.0
    %169 = vmatpush2.msra.mxu0 0.0
    %170 = vmatprep.subr.mxu0 0.0
    %171 = vmatpush2.msra.mxu0 0.0
    %172 = vmatprep.subr.mxu0 0.0
    %173 = vmatpush2.msra.mxu0 0.0
    %174 = vmatprep.mubr.f32.mxu0 0.0
    %175 = vmatmul.mubr.f32.gmra.mxu0 %v51
    %v176 = vpop.f32.mrf.mxu0
    %v177 = vadd.f32 0.0, %v176
    %v178 = vpop.f32.mrf.mxu0
    %v179 = vadd.f32 0.0, %v178
    %180 = vdwg.mxu0
    %181 = vmatprep.subr.mxu0 0.0
    %182 = vmatpush1.msra.mxu0 %v99
    %183 = vmatprep.subr.mxu0 0.0
    %184 = vmatpush1.msra.mxu0 %v96
    %185 = vmatprep.subr.mxu0 0.0
    %186 = vmatpush1.msra.mxu0 %v93
    %187 = vmatprep.subr.mxu0 0.0
    %188 = vmatpush1.msra.mxu0 %v90
    %189 = vmatprep.subr.mxu0 0.0
    %190 = vmatpush1.msra.mxu0 %v87
    %191 = vmatprep.subr.mxu0 0.0
    %192 = vmatpush1.msra.mxu0 %v84
    %193 = vmatprep.subr.mxu0 0.0
    %194 = vmatpush1.msra.mxu0 %v81
    %195 = vmatprep.subr.mxu0 0.0
    %196 = vmatpush1.msra.mxu0 %v78
    %197 = vmatprep.subr.mxu0 0.0
    %198 = vmatpush1.msra.mxu0 %v75
    %199 = vmatprep.subr.mxu0 0.0
    %200 = vmatpush1.msra.mxu0 %v72
    %201 = vmatprep.subr.mxu0 0.0
    %202 = vmatpush1.msra.mxu0 %v69
    %203 = vmatprep.subr.mxu0 0.0
    %204 = vmatpush1.msra.mxu0 %v66
    %205 = vmatprep.subr.mxu0 0.0
    %206 = vmatpush1.msra.mxu0 %v63
    %207 = vmatprep.subr.mxu0 0.0
    %208 = vmatpush1.msra.mxu0 %v60
    %209 = vmatprep.subr.mxu0 0.0
    %210 = vmatpush1.msra.mxu0 %v57
    %211 = vmatprep.subr.mxu0 0.0
    %212 = vmatpush1.msra.mxu0 %v54
    %213 = vmatprep.subr.mxu0 0.0
    %214 = vmatpush2.msra.mxu0 0.0
    %215 = vmatprep.subr.mxu0 0.0
    %216 = vmatpush2.msra.mxu0 0.0
    %217 = vmatprep.subr.mxu0 0.0
    %218 = vmatpush2.msra.mxu0 0.0
    %219 = vmatprep.subr.mxu0 0.0
    %220 = vmatpush2.msra.mxu0 0.0
    %221 = vmatprep.subr.mxu0 0.0
    %222 = vmatpush2.msra.mxu0 0.0
    %223 = vmatprep.subr.mxu0 0.0
    %224 = vmatpush2.msra.mxu0 0.0
    %225 = vmatprep.subr.mxu0 0.0
    %226 = vmatpush2.msra.mxu0 0.0
    %227 = vmatprep.subr.mxu0 0.0
    %228 = vmatpush2.msra.mxu0 0.0
    %229 = vmatprep.subr.mxu0 0.0
    %230 = vmatpush2.msra.mxu0 0.0
    %231 = vmatprep.subr.mxu0 0.0
    %232 = vmatpush2.msra.mxu0 0.0
    %233 = vmatprep.subr.mxu0 0.0
    %234 = vmatpush2.msra.mxu0 0.0
    %235 = vmatprep.subr.mxu0 0.0
    %236 = vmatpush2.msra.mxu0 0.0
    %237 = vmatprep.subr.mxu0 0.0
    %238 = vmatpush2.msra.mxu0 0.0
    %239 = vmatprep.subr.mxu0 0.0
    %240 = vmatpush2.msra.mxu0 0.0
    %241 = vmatprep.subr.mxu0 0.0
    %242 = vmatpush2.msra.mxu0 0.0
    %243 = vmatprep.subr.mxu0 0.0
    %244 = vmatpush2.msra.mxu0 0.0
    %245 = vmatprep.mubr.f32.mxu0 0.0
    %246 = vmatmul.mubr.f32.gmra.mxu0 %v51
    %v247 = vpop.f32.mrf.mxu0
    %v248 = vadd.f32 0.0, %v247
    %v249 = vpop.f32.mrf.mxu0
    %250 = vdwg.mxu0
    %v251 = vadd.f32 %v107, %v177
    %v252 = vxor.u32 %v251, 2147483648
    %v253 = vmul.f32 %v252, 1.442695
    %v254 = vpow.pop %v253
    %v255 = vadd.f32 %v254, 1.0
    %v256 = vrcp.pop %v255
    %v257 = vmul.f32 1.0, %v256
    %v258 = vadd.f32 %v108, %v179
    %v259 = vxor.u32 %v258, 2147483648
    %v260 = vmul.f32 %v259, 1.442695
    %v261 = vpow.pop %v260
    %v262 = vadd.f32 %v261, 1.0
    %v263 = vrcp.pop %v262
    %v264 = vmul.f32 1.0, %v263
    %v265 = vadd.f32 %v248, %v105
    %v266 = vmul.f32 %v257, %v265
    %v267 = vadd.f32 %v109, %v266
    %v268 = vtanh.pop %v267
    %v269 = vsub.f32 %v51, %v268
    %v270 = vmul.f32 %v264, %v269
    %v271 = vadd.f32 %v268, %v270
    %272 = vst [vmem:[#allocation8] sm:$0xff] %v271
    %s273 = scalar_lea.vmem [#allocation3], 24
    %v274 = vld [vmem:[%s273] sm:$0xff]
    %v275 = vld [vmem:[%s273 + $0x8] sm:$0xff]
    %v276 = vld [vmem:[%s273 + $0x10] sm:$0xff]
    %277 = vmatprep.subr.mxu0 %v98
    %278 = vmatpush1.msra.mxu0 %v97
    %279 = vmatprep.subr.mxu0 %v95
    %280 = vmatpush1.msra.mxu0 %v94
    %281 = vmatprep.subr.mxu0 %v92
    %282 = vmatpush1.msra.mxu0 %v91
    %283 = vmatprep.subr.mxu0 %v89
    %284 = vmatpush1.msra.mxu0 %v88
    %285 = vmatprep.subr.mxu0 %v86
    %286 = vmatpush1.msra.mxu0 %v85
    %287 = vmatprep.subr.mxu0 %v83
    %288 = vmatpush1.msra.mxu0 %v82
    %289 = vmatprep.subr.mxu0 %v80
    %290 = vmatpush1.msra.mxu0 %v79
    %291 = vmatprep.subr.mxu0 %v77
    %292 = vmatpush1.msra.mxu0 %v76
    %293 = vmatprep.subr.mxu0 %v74
    %294 = vmatpush1.msra.mxu0 %v73
    %295 = vmatprep.subr.mxu0 %v71
    %296 = vmatpush1.msra.mxu0 %v70
    %297 = vmatprep.subr.mxu0 %v68
    %298 = vmatpush1.msra.mxu0 %v67
    %299 = vmatprep.subr.mxu0 %v65
    %300 = vmatpush1.msra.mxu0 %v64
    %301 = vmatprep.subr.mxu0 %v62
    %302 = vmatpush1.msra.mxu0 %v61
    %303 = vmatprep.subr.mxu0 %v59
    %304 = vmatpush1.msra.mxu0 %v58
    %305 = vmatprep.subr.mxu0 %v56
    %306 = vmatpush1.msra.mxu0 %v55
    %307 = vmatprep.subr.mxu0 %v53
    %308 = vmatpush1.msra.mxu0 %v52
    %309 = vmatprep.subr.mxu0 0.0
    %310 = vmatpush2.msra.mxu0 0.0
    %311 = vmatprep.subr.mxu0 0.0
    %312 = vmatpush2.msra.mxu0 0.0
    %313 = vmatprep.subr.mxu0 0.0
    %314 = vmatpush2.msra.mxu0 0.0
    %315 = vmatprep.subr.mxu0 0.0
    %316 = vmatpush2.msra.mxu0 0.0
    %317 = vmatprep.subr.mxu0 0.0
    %318 = vmatpush2.msra.mxu0 0.0
    %319 = vmatprep.subr.mxu0 0.0
    %320 = vmatpush2.msra.mxu0 0.0
    %321 = vmatprep.subr.mxu0 0.0
    %322 = vmatpush2.msra.mxu0 0.0
    %323 = vmatprep.subr.mxu0 0.0
    %324 = vmatpush2.msra.mxu0 0.0
    %325 = vmatprep.subr.mxu0 0.0
    %326 = vmatpush2.msra.mxu0 0.0
    %327 = vmatprep.subr.mxu0 0.0
    %328 = vmatpush2.msra.mxu0 0.0
    %329 = vmatprep.subr.mxu0 0.0
    %330 = vmatpush2.msra.mxu0 0.0
    %331 = vmatprep.subr.mxu0 0.0
    %332 = vmatpush2.msra.mxu0 0.0
    %333 = vmatprep.subr.mxu0 0.0
    %334 = vmatpush2.msra.mxu0 0.0
    %335 = vmatprep.subr.mxu0 0.0
    %336 = vmatpush2.msra.mxu0 0.0
    %337 = vmatprep.subr.mxu0 0.0
    %338 = vmatpush2.msra.mxu0 0.0
    %339 = vmatprep.subr.mxu0 0.0
    %340 = vmatpush2.msra.mxu0 0.0
    %341 = vmatprep.mubr.f32.mxu0 0.0
    %342 = vmatmul.mubr.f32.gmra.mxu0 %v271
    %v343 = vpop.f32.mrf.mxu0
    %v344 = vadd.f32 0.0, %v343
    %v345 = vpop.f32.mrf.mxu0
    %v346 = vadd.f32 0.0, %v345
    %347 = vdwg.mxu0
    %348 = vmatprep.subr.mxu0 0.0
    %349 = vmatpush1.msra.mxu0 %v99
    %350 = vmatprep.subr.mxu0 0.0
    %351 = vmatpush1.msra.mxu0 %v96
    %352 = vmatprep.subr.mxu0 0.0
    %353 = vmatpush1.msra.mxu0 %v93
    %354 = vmatprep.subr.mxu0 0.0
    %355 = vmatpush1.msra.mxu0 %v90
    %356 = vmatprep.subr.mxu0 0.0
    %357 = vmatpush1.msra.mxu0 %v87
    %358 = vmatprep.subr.mxu0 0.0
    %359 = vmatpush1.msra.mxu0 %v84
    %360 = vmatprep.subr.mxu0 0.0
    %361 = vmatpush1.msra.mxu0 %v81
    %362 = vmatprep.subr.mxu0 0.0
    %363 = vmatpush1.msra.mxu0 %v78
    %364 = vmatprep.subr.mxu0 0.0
    %365 = vmatpush1.msra.mxu0 %v75
    %366 = vmatprep.subr.mxu0 0.0
    %367 = vmatpush1.msra.mxu0 %v72
    %368 = vmatprep.subr.mxu0 0.0
    %369 = vmatpush1.msra.mxu0 %v69
    %370 = vmatprep.subr.mxu0 0.0
    %371 = vmatpush1.msra.mxu0 %v66
    %372 = vmatprep.subr.mxu0 0.0
    %373 = vmatpush1.msra.mxu0 %v63
    %374 = vmatprep.subr.mxu0 0.0
    %375 = vmatpush1.msra.mxu0 %v60
    %376 = vmatprep.subr.mxu0 0.0
    %377 = vmatpush1.msra.mxu0 %v57
    %378 = vmatprep.subr.mxu0 0.0
    %379 = vmatpush1.msra.mxu0 %v54
    %380 = vmatprep.subr.mxu0 0.0
    %381 = vmatpush2.msra.mxu0 0.0
    %382 = vmatprep.subr.mxu0 0.0
    %383 = vmatpush2.msra.mxu0 0.0
    %384 = vmatprep.subr.mxu0 0.0
    %385 = vmatpush2.msra.mxu0 0.0
    %386 = vmatprep.subr.mxu0 0.0
    %387 = vmatpush2.msra.mxu0 0.0
    %388 = vmatprep.subr.mxu0 0.0
    %389 = vmatpush2.msra.mxu0 0.0
    %390 = vmatprep.subr.mxu0 0.0
    %391 = vmatpush2.msra.mxu0 0.0
    %392 = vmatprep.subr.mxu0 0.0
    %393 = vmatpush2.msra.mxu0 0.0
    %394 = vmatprep.subr.mxu0 0.0
    %395 = vmatpush2.msra.mxu0 0.0
    %396 = vmatprep.subr.mxu0 0.0
    %397 = vmatpush2.msra.mxu0 0.0
    %398 = vmatprep.subr.mxu0 0.0
    %399 = vmatpush2.msra.mxu0 0.0
    %400 = vmatprep.subr.mxu0 0.0
    %401 = vmatpush2.msra.mxu0 0.0
    %402 = vmatprep.subr.mxu0 0.0
    %403 = vmatpush2.msra.mxu0 0.0
    %404 = vmatprep.subr.mxu0 0.0
    %405 = vmatpush2.msra.mxu0 0.0
    %406 = vmatprep.subr.mxu0 0.0
    %407 = vmatpush2.msra.mxu0 0.0
    %408 = vmatprep.subr.mxu0 0.0
    %409 = vmatpush2.msra.mxu0 0.0
    %410 = vmatprep.subr.mxu0 0.0
    %411 = vmatpush2.msra.mxu0 0.0
    %412 = vmatprep.mubr.f32.mxu0 0.0
    %413 = vmatmul.mubr.f32.gmra.mxu0 %v271
    %v414 = vpop.f32.mrf.mxu0
    %v415 = vadd.f32 0.0, %v414
    %v416 = vpop.f32.mrf.mxu0
    %417 = vdwg.mxu0
    %v418 = vadd.f32 %v274, %v344
    %v419 = vxor.u32 %v418, 2147483648
    %v420 = vmul.f32 %v419, 1.442695
    %v421 = vpow.pop %v420
    %v422 = vadd.f32 %v421, 1.0
    %v423 = vrcp.pop %v422
    %v424 = vmul.f32 1.0, %v423
    %v425 = vadd.f32 %v275, %v346
    %v426 = vxor.u32 %v425, 2147483648
    %v427 = vmul.f32 %v426, 1.442695
    %v428 = vpow.pop %v427
    %v429 = vadd.f32 %v428, 1.0
    %v430 = vrcp.pop %v429
    %v431 = vmul.f32 1.0, %v430
    %v432 = vadd.f32 %v415, %v105
    %v433 = vmul.f32 %v424, %v432
    %v434 = vadd.f32 %v276, %v433
    %v435 = vtanh.pop %v434
    %v436 = vsub.f32 %v271, %v435
    %v437 = vmul.f32 %v431, %v436
    %v438 = vadd.f32 %v435, %v437
    %s439 = scalar_lea.vmem [#allocation8], 8
    %440 = vst [vmem:[%s439] sm:$0xff] %v438
    %s441 = scalar_lea.vmem [#allocation3], 48
    %v442 = vld [vmem:[%s441] sm:$0xff]
    %v443 = vld [vmem:[%s441 + $0x8] sm:$0xff]
    %v444 = vld [vmem:[%s441 + $0x10] sm:$0xff]
    %445 = vmatprep.subr.mxu0 %v98
    %446 = vmatpush1.msra.mxu0 %v97
    %447 = vmatprep.subr.mxu0 %v95
    %448 = vmatpush1.msra.mxu0 %v94
    %449 = vmatprep.subr.mxu0 %v92
    %450 = vmatpush1.msra.mxu0 %v91
    %451 = vmatprep.subr.mxu0 %v89
    %452 = vmatpush1.msra.mxu0 %v88
    %453 = vmatprep.subr.mxu0 %v86
    %454 = vmatpush1.msra.mxu0 %v85
    %455 = vmatprep.subr.mxu0 %v83
    %456 = vmatpush1.msra.mxu0 %v82
    %457 = vmatprep.subr.mxu0 %v80
    %458 = vmatpush1.msra.mxu0 %v79
    %459 = vmatprep.subr.mxu0 %v77
    %460 = vmatpush1.msra.mxu0 %v76
    %461 = vmatprep.subr.mxu0 %v74
    %462 = vmatpush1.msra.mxu0 %v73
    %463 = vmatprep.subr.mxu0 %v71
    %464 = vmatpush1.msra.mxu0 %v70
    %465 = vmatprep.subr.mxu0 %v68
    %466 = vmatpush1.msra.mxu0 %v67
    %467 = vmatprep.subr.mxu0 %v65
    %468 = vmatpush1.msra.mxu0 %v64
    %469 = vmatprep.subr.mxu0 %v62
    %470 = vmatpush1.msra.mxu0 %v61
    %471 = vmatprep.subr.mxu0 %v59
    %472 = vmatpush1.msra.mxu0 %v58
    %473 = vmatprep.subr.mxu0 %v56
    %474 = vmatpush1.msra.mxu0 %v55
    %475 = vmatprep.subr.mxu0 %v53
    %476 = vmatpush1.msra.mxu0 %v52
    %477 = vmatprep.subr.mxu0 0.0
    %478 = vmatpush2.msra.mxu0 0.0
    %479 = vmatprep.subr.mxu0 0.0
    %480 = vmatpush2.msra.mxu0 0.0
    %481 = vmatprep.subr.mxu0 0.0
    %482 = vmatpush2.msra.mxu0 0.0
    %483 = vmatprep.subr.mxu0 0.0
    %484 = vmatpush2.msra.mxu0 0.0
    %485 = vmatprep.subr.mxu0 0.0
    %486 = vmatpush2.msra.mxu0 0.0
    %487 = vmatprep.subr.mxu0 0.0
    %488 = vmatpush2.msra.mxu0 0.0
    %489 = vmatprep.subr.mxu0 0.0
    %490 = vmatpush2.msra.mxu0 0.0
    %491 = vmatprep.subr.mxu0 0.0
    %492 = vmatpush2.msra.mxu0 0.0
    %493 = vmatprep.subr.mxu0 0.0
    %494 = vmatpush2.msra.mxu0 0.0
    %495 = vmatprep.subr.mxu0 0.0
    %496 = vmatpush2.msra.mxu0 0.0
    %497 = vmatprep.subr.mxu0 0.0
    %498 = vmatpush2.msra.mxu0 0.0
    %499 = vmatprep.subr.mxu0 0.0
    %500 = vmatpush2.msra.mxu0 0.0
    %501 = vmatprep.subr.mxu0 0.0
    %502 = vmatpush2.msra.mxu0 0.0
    %503 = vmatprep.subr.mxu0 0.0
    %504 = vmatpush2.msra.mxu0 0.0
    %505 = vmatprep.subr.mxu0 0.0
    %506 = vmatpush2.msra.mxu0 0.0
    %507 = vmatprep.subr.mxu0 0.0
    %508 = vmatpush2.msra.mxu0 0.0
    %509 = vmatprep.mubr.f32.mxu0 0.0
    %510 = vmatmul.mubr.f32.gmra.mxu0 %v438
    %v511 = vpop.f32.mrf.mxu0
    %v512 = vadd.f32 0.0, %v511
    %v513 = vpop.f32.mrf.mxu0
    %v514 = vadd.f32 0.0, %v513
    %515 = vdwg.mxu0
    %516 = vmatprep.subr.mxu0 0.0
    %517 = vmatpush1.msra.mxu0 %v99
    %518 = vmatprep.subr.mxu0 0.0
    %519 = vmatpush1.msra.mxu0 %v96
    %520 = vmatprep.subr.mxu0 0.0
    %521 = vmatpush1.msra.mxu0 %v93
    %522 = vmatprep.subr.mxu0 0.0
    %523 = vmatpush1.msra.mxu0 %v90
    %524 = vmatprep.subr.mxu0 0.0
    %525 = vmatpush1.msra.mxu0 %v87
    %526 = vmatprep.subr.mxu0 0.0
    %527 = vmatpush1.msra.mxu0 %v84
    %528 = vmatprep.subr.mxu0 0.0
    %529 = vmatpush1.msra.mxu0 %v81
    %530 = vmatprep.subr.mxu0 0.0
    %531 = vmatpush1.msra.mxu0 %v78
    %532 = vmatprep.subr.mxu0 0.0
    %533 = vmatpush1.msra.mxu0 %v75
    %534 = vmatprep.subr.mxu0 0.0
    %535 = vmatpush1.msra.mxu0 %v72
    %536 = vmatprep.subr.mxu0 0.0
    %537 = vmatpush1.msra.mxu0 %v69
    %538 = vmatprep.subr.mxu0 0.0
    %539 = vmatpush1.msra.mxu0 %v66
    %540 = vmatprep.subr.mxu0 0.0
    %541 = vmatpush1.msra.mxu0 %v63
    %542 = vmatprep.subr.mxu0 0.0
    %543 = vmatpush1.msra.mxu0 %v60
    %544 = vmatprep.subr.mxu0 0.0
    %545 = vmatpush1.msra.mxu0 %v57
    %546 = vmatprep.subr.mxu0 0.0
    %547 = vmatpush1.msra.mxu0 %v54
    %548 = vmatprep.subr.mxu0 0.0
    %549 = vmatpush2.msra.mxu0 0.0
    %550 = vmatprep.subr.mxu0 0.0
    %551 = vmatpush2.msra.mxu0 0.0
    %552 = vmatprep.subr.mxu0 0.0
    %553 = vmatpush2.msra.mxu0 0.0
    %554 = vmatprep.subr.mxu0 0.0
    %555 = vmatpush2.msra.mxu0 0.0
    %556 = vmatprep.subr.mxu0 0.0
    %557 = vmatpush2.msra.mxu0 0.0
    %558 = vmatprep.subr.mxu0 0.0
    %559 = vmatpush2.msra.mxu0 0.0
    %560 = vmatprep.subr.mxu0 0.0
    %561 = vmatpush2.msra.mxu0 0.0
    %562 = vmatprep.subr.mxu0 0.0
    %563 = vmatpush2.msra.mxu0 0.0
    %564 = vmatprep.subr.mxu0 0.0
    %565 = vmatpush2.msra.mxu0 0.0
    %566 = vmatprep.subr.mxu0 0.0
    %567 = vmatpush2.msra.mxu0 0.0
    %568 = vmatprep.subr.mxu0 0.0
    %569 = vmatpush2.msra.mxu0 0.0
    %570 = vmatprep.subr.mxu0 0.0
    %571 = vmatpush2.msra.mxu0 0.0
    %572 = vmatprep.subr.mxu0 0.0
    %573 = vmatpush2.msra.mxu0 0.0
    %574 = vmatprep.subr.mxu0 0.0
    %575 = vmatpush2.msra.mxu0 0.0
    %576 = vmatprep.subr.mxu0 0.0
    %577 = vmatpush2.msra.mxu0 0.0
    %578 = vmatprep.subr.mxu0 0.0
    %579 = vmatpush2.msra.mxu0 0.0
    %580 = vmatprep.mubr.f32.mxu0 0.0
    %581 = vmatmul.mubr.f32.gmra.mxu0 %v438
    %v582 = vpop.f32.mrf.mxu0
    %v583 = vadd.f32 0.0, %v582
    %v584 = vpop.f32.mrf.mxu0
    %585 = vdwg.mxu0
    %v586 = vadd.f32 %v442, %v512
    %v587 = vxor.u32 %v586, 2147483648
    %v588 = vmul.f32 %v587, 1.442695
    %v589 = vpow.pop %v588
    %v590 = vadd.f32 %v589, 1.0
    %v591 = vrcp.pop %v590
    %v592 = vmul.f32 1.0, %v591
    %v593 = vadd.f32 %v443, %v514
    %v594 = vxor.u32 %v593, 2147483648
    %v595 = vmul.f32 %v594, 1.442695
    %v596 = vpow.pop %v595
    %v597 = vadd.f32 %v596, 1.0
    %v598 = vrcp.pop %v597
    %v599 = vmul.f32 1.0, %v598
    %v600 = vadd.f32 %v583, %v105
    %v601 = vmul.f32 %v592, %v600
    %v602 = vadd.f32 %v444, %v601
    %v603 = vtanh.pop %v602
    %v604 = vsub.f32 %v438, %v603
    %v605 = vmul.f32 %v599, %v604
    %v606 = vadd.f32 %v603, %v605
    %s607 = scalar_lea.vmem [#allocation8], 16
    %608 = vst [vmem:[%s607] sm:$0xff] %v606
    %s609 = scalar_lea.vmem [#allocation3], 72
    %v610 = vld [vmem:[%s609] sm:$0xff]
    %v611 = vld [vmem:[%s609 + $0x8] sm:$0xff]
    %v612 = vld [vmem:[%s609 + $0x10] sm:$0xff]
    %613 = vmatprep.subr.mxu0 %v98
    %614 = vmatpush1.msra.mxu0 %v97
    %615 = vmatprep.subr.mxu0 %v95
    %616 = vmatpush1.msra.mxu0 %v94
    %617 = vmatprep.subr.mxu0 %v92
    %618 = vmatpush1.msra.mxu0 %v91
    %619 = vmatprep.subr.mxu0 %v89
    %620 = vmatpush1.msra.mxu0 %v88
    %621 = vmatprep.subr.mxu0 %v86
    %622 = vmatpush1.msra.mxu0 %v85
    %623 = vmatprep.subr.mxu0 %v83
    %624 = vmatpush1.msra.mxu0 %v82
    %625 = vmatprep.subr.mxu0 %v80
    %626 = vmatpush1.msra.mxu0 %v79
    %627 = vmatprep.subr.mxu0 %v77
    %628 = vmatpush1.msra.mxu0 %v76
    %629 = vmatprep.subr.mxu0 %v74
    %630 = vmatpush1.msra.mxu0 %v73
    %631 = vmatprep.subr.mxu0 %v71
    %632 = vmatpush1.msra.mxu0 %v70
    %633 = vmatprep.subr.mxu0 %v68
    %634 = vmatpush1.msra.mxu0 %v67
    %635 = vmatprep.subr.mxu0 %v65
    %636 = vmatpush1.msra.mxu0 %v64
    %637 = vmatprep.subr.mxu0 %v62
    %638 = vmatpush1.msra.mxu0 %v61
    %639 = vmatprep.subr.mxu0 %v59
    %640 = vmatpush1.msra.mxu0 %v58
    %641 = vmatprep.subr.mxu0 %v56
    %642 = vmatpush1.msra.mxu0 %v55
    %643 = vmatprep.subr.mxu0 %v53
    %644 = vmatpush1.msra.mxu0 %v52
    %645 = vmatprep.subr.mxu0 0.0
    %646 = vmatpush2.msra.mxu0 0.0
    %647 = vmatprep.subr.mxu0 0.0
    %648 = vmatpush2.msra.mxu0 0.0
    %649 = vmatprep.subr.mxu0 0.0
    %650 = vmatpush2.msra.mxu0 0.0
    %651 = vmatprep.subr.mxu0 0.0
    %652 = vmatpush2.msra.mxu0 0.0
    %653 = vmatprep.subr.mxu0 0.0
    %654 = vmatpush2.msra.mxu0 0.0
    %655 = vmatprep.subr.mxu0 0.0
    %656 = vmatpush2.msra.mxu0 0.0
    %657 = vmatprep.subr.mxu0 0.0
    %658 = vmatpush2.msra.mxu0 0.0
    %659 = vmatprep.subr.mxu0 0.0
    %660 = vmatpush2.msra.mxu0 0.0
    %661 = vmatprep.subr.mxu0 0.0
    %662 = vmatpush2.msra.mxu0 0.0
    %663 = vmatprep.subr.mxu0 0.0
    %664 = vmatpush2.msra.mxu0 0.0
    %665 = vmatprep.subr.mxu0 0.0
    %666 = vmatpush2.msra.mxu0 0.0
    %667 = vmatprep.subr.mxu0 0.0
    %668 = vmatpush2.msra.mxu0 0.0
    %669 = vmatprep.subr.mxu0 0.0
    %670 = vmatpush2.msra.mxu0 0.0
    %671 = vmatprep.subr.mxu0 0.0
    %672 = vmatpush2.msra.mxu0 0.0
    %673 = vmatprep.subr.mxu0 0.0
    %674 = vmatpush2.msra.mxu0 0.0
    %675 = vmatprep.subr.mxu0 0.0
    %676 = vmatpush2.msra.mxu0 0.0
    %677 = vmatprep.mubr.f32.mxu0 0.0
    %678 = vmatmul.mubr.f32.gmra.mxu0 %v606
    %v679 = vpop.f32.mrf.mxu0
    %v680 = vadd.f32 0.0, %v679
    %v681 = vpop.f32.mrf.mxu0
    %v682 = vadd.f32 0.0, %v681
    %683 = vdwg.mxu0
    %684 = vmatprep.subr.mxu0 0.0
    %685 = vmatpush1.msra.mxu0 %v99
    %686 = vmatprep.subr.mxu0 0.0
    %687 = vmatpush1.msra.mxu0 %v96
    %688 = vmatprep.subr.mxu0 0.0
    %689 = vmatpush1.msra.mxu0 %v93
    %690 = vmatprep.subr.mxu0 0.0
    %691 = vmatpush1.msra.mxu0 %v90
    %692 = vmatprep.subr.mxu0 0.0
    %693 = vmatpush1.msra.mxu0 %v87
    %694 = vmatprep.subr.mxu0 0.0
    %695 = vmatpush1.msra.mxu0 %v84
    %696 = vmatprep.subr.mxu0 0.0
    %697 = vmatpush1.msra.mxu0 %v81
    %698 = vmatprep.subr.mxu0 0.0
    %699 = vmatpush1.msra.mxu0 %v78
    %700 = vmatprep.subr.mxu0 0.0
    %701 = vmatpush1.msra.mxu0 %v75
    %702 = vmatprep.subr.mxu0 0.0
    %703 = vmatpush1.msra.mxu0 %v72
    %704 = vmatprep.subr.mxu0 0.0
    %705 = vmatpush1.msra.mxu0 %v69
    %706 = vmatprep.subr.mxu0 0.0
    %707 = vmatpush1.msra.mxu0 %v66
    %708 = vmatprep.subr.mxu0 0.0
    %709 = vmatpush1.msra.mxu0 %v63
    %710 = vmatprep.subr.mxu0 0.0
    %711 = vmatpush1.msra.mxu0 %v60
    %712 = vmatprep.subr.mxu0 0.0
    %713 = vmatpush1.msra.mxu0 %v57
    %714 = vmatprep.subr.mxu0 0.0
    %715 = vmatpush1.msra.mxu0 %v54
    %716 = vmatprep.subr.mxu0 0.0
    %717 = vmatpush2.msra.mxu0 0.0
    %718 = vmatprep.subr.mxu0 0.0
    %719 = vmatpush2.msra.mxu0 0.0
    %720 = vmatprep.subr.mxu0 0.0
    %721 = vmatpush2.msra.mxu0 0.0
    %722 = vmatprep.subr.mxu0 0.0
    %723 = vmatpush2.msra.mxu0 0.0
    %724 = vmatprep.subr.mxu0 0.0
    %725 = vmatpush2.msra.mxu0 0.0
    %726 = vmatprep.subr.mxu0 0.0
    %727 = vmatpush2.msra.mxu0 0.0
    %728 = vmatprep.subr.mxu0 0.0
    %729 = vmatpush2.msra.mxu0 0.0
    %730 = vmatprep.subr.mxu0 0.0
    %731 = vmatpush2.msra.mxu0 0.0
    %732 = vmatprep.subr.mxu0 0.0
    %733 = vmatpush2.msra.mxu0 0.0
    %734 = vmatprep.subr.mxu0 0.0
    %735 = vmatpush2.msra.mxu0 0.0
    %736 = vmatprep.subr.mxu0 0.0
    %737 = vmatpush2.msra.mxu0 0.0
    %738 = vmatprep.subr.mxu0 0.0
    %739 = vmatpush2.msra.mxu0 0.0
    %740 = vmatprep.subr.mxu0 0.0
    %741 = vmatpush2.msra.mxu0 0.0
    %742 = vmatprep.subr.mxu0 0.0
    %743 = vmatpush2.msra.mxu0 0.0
    %744 = vmatprep.subr.mxu0 0.0
    %745 = vmatpush2.msra.mxu0 0.0
    %746 = vmatprep.subr.mxu0 0.0
    %747 = vmatpush2.msra.mxu0 0.0
    %748 = vmatprep.mubr.f32.mxu0 0.0
    %749 = vmatmul.mubr.f32.gmra.mxu0 %v606
    %v750 = vpop.f32.mrf.mxu0
    %v751 = vadd.f32 0.0, %v750
    %v752 = vpop.f32.mrf.mxu0
    %753 = vdwg.mxu0
    %v754 = vadd.f32 %v610, %v680
    %v755 = vxor.u32 %v754, 2147483648
    %v756 = vmul.f32 %v755, 1.442695
    %v757 = vpow.pop %v756
    %v758 = vadd.f32 %v757, 1.0
    %v759 = vrcp.pop %v758
    %v760 = vmul.f32 1.0, %v759
    %v761 = vadd.f32 %v611, %v682
    %v762 = vxor.u32 %v761, 2147483648
    %v763 = vmul.f32 %v762, 1.442695
    %v764 = vpow.pop %v763
    %v765 = vadd.f32 %v764, 1.0
    %v766 = vrcp.pop %v765
    %v767 = vmul.f32 1.0, %v766
    %v768 = vadd.f32 %v751, %v105
    %v769 = vmul.f32 %v760, %v768
    %v770 = vadd.f32 %v612, %v769
    %v771 = vtanh.pop %v770
    %v772 = vsub.f32 %v606, %v771
    %v773 = vmul.f32 %v767, %v772
    %v774 = vadd.f32 %v771, %v773
    %s775 = scalar_lea.vmem [#allocation8], 24
    %776 = vst [vmem:[%s775] sm:$0xff] %v774
    %s777 = scalar_lea.vmem [#allocation3], 96
    %v778 = vld [vmem:[%s777] sm:$0xff]
    %v779 = vld [vmem:[%s777 + $0x8] sm:$0xff]
    %v780 = vld [vmem:[%s777 + $0x10] sm:$0xff]
    %781 = vmatprep.subr.mxu0 %v98
    %782 = vmatpush1.msra.mxu0 %v97
    %783 = vmatprep.subr.mxu0 %v95
    %784 = vmatpush1.msra.mxu0 %v94
    %785 = vmatprep.subr.mxu0 %v92
    %786 = vmatpush1.msra.mxu0 %v91
    %787 = vmatprep.subr.mxu0 %v89
    %788 = vmatpush1.msra.mxu0 %v88
    %789 = vmatprep.subr.mxu0 %v86
    %790 = vmatpush1.msra.mxu0 %v85
    %791 = vmatprep.subr.mxu0 %v83
    %792 = vmatpush1.msra.mxu0 %v82
    %793 = vmatprep.subr.mxu0 %v80
    %794 = vmatpush1.msra.mxu0 %v79
    %795 = vmatprep.subr.mxu0 %v77
    %796 = vmatpush1.msra.mxu0 %v76
    %797 = vmatprep.subr.mxu0 %v74
    %798 = vmatpush1.msra.mxu0 %v73
    %799 = vmatprep.subr.mxu0 %v71
    %800 = vmatpush1.msra.mxu0 %v70
    %801 = vmatprep.subr.mxu0 %v68
    %802 = vmatpush1.msra.mxu0 %v67
    %803 = vmatprep.subr.mxu0 %v65
    %804 = vmatpush1.msra.mxu0 %v64
    %805 = vmatprep.subr.mxu0 %v62
    %806 = vmatpush1.msra.mxu0 %v61
    %807 = vmatprep.subr.mxu0 %v59
    %808 = vmatpush1.msra.mxu0 %v58
    %809 = vmatprep.subr.mxu0 %v56
    %810 = vmatpush1.msra.mxu0 %v55
    %811 = vmatprep.subr.mxu0 %v53
    %812 = vmatpush1.msra.mxu0 %v52
    %813 = vmatprep.subr.mxu0 0.0
    %814 = vmatpush2.msra.mxu0 0.0
    %815 = vmatprep.subr.mxu0 0.0
    %816 = vmatpush2.msra.mxu0 0.0
    %817 = vmatprep.subr.mxu0 0.0
    %818 = vmatpush2.msra.mxu0 0.0
    %819 = vmatprep.subr.mxu0 0.0
    %820 = vmatpush2.msra.mxu0 0.0
    %821 = vmatprep.subr.mxu0 0.0
    %822 = vmatpush2.msra.mxu0 0.0
    %823 = vmatprep.subr.mxu0 0.0
    %824 = vmatpush2.msra.mxu0 0.0
    %825 = vmatprep.subr.mxu0 0.0
    %826 = vmatpush2.msra.mxu0 0.0
    %827 = vmatprep.subr.mxu0 0.0
    %828 = vmatpush2.msra.mxu0 0.0
    %829 = vmatprep.subr.mxu0 0.0
    %830 = vmatpush2.msra.mxu0 0.0
    %831 = vmatprep.subr.mxu0 0.0
    %832 = vmatpush2.msra.mxu0 0.0
    %833 = vmatprep.subr.mxu0 0.0
    %834 = vmatpush2.msra.mxu0 0.0
    %835 = vmatprep.subr.mxu0 0.0
    %836 = vmatpush2.msra.mxu0 0.0
    %837 = vmatprep.subr.mxu0 0.0
    %838 = vmatpush2.msra.mxu0 0.0
    %839 = vmatprep.subr.mxu0 0.0
    %840 = vmatpush2.msra.mxu0 0.0
    %841 = vmatprep.subr.mxu0 0.0
    %842 = vmatpush2.msra.mxu0 0.0
    %843 = vmatprep.subr.mxu0 0.0
    %844 = vmatpush2.msra.mxu0 0.0
    %845 = vmatprep.mubr.f32.mxu0 0.0
    %846 = vmatmul.mubr.f32.gmra.mxu0 %v774
    %v847 = vpop.f32.mrf.mxu0
    %v848 = vadd.f32 0.0, %v847
    %v849 = vpop.f32.mrf.mxu0
    %v850 = vadd.f32 0.0, %v849
    %851 = vdwg.mxu0
    %852 = vmatprep.subr.mxu0 0.0
    %853 = vmatpush1.msra.mxu0 %v99
    %854 = vmatprep.subr.mxu0 0.0
    %855 = vmatpush1.msra.mxu0 %v96
    %856 = vmatprep.subr.mxu0 0.0
    %857 = vmatpush1.msra.mxu0 %v93
    %858 = vmatprep.subr.mxu0 0.0
    %859 = vmatpush1.msra.mxu0 %v90
    %860 = vmatprep.subr.mxu0 0.0
    %861 = vmatpush1.msra.mxu0 %v87
    %862 = vmatprep.subr.mxu0 0.0
    %863 = vmatpush1.msra.mxu0 %v84
    %864 = vmatprep.subr.mxu0 0.0
    %865 = vmatpush1.msra.mxu0 %v81
    %866 = vmatprep.subr.mxu0 0.0
    %867 = vmatpush1.msra.mxu0 %v78
    %868 = vmatprep.subr.mxu0 0.0
    %869 = vmatpush1.msra.mxu0 %v75
    %870 = vmatprep.subr.mxu0 0.0
    %871 = vmatpush1.msra.mxu0 %v72
    %872 = vmatprep.subr.mxu0 0.0
    %873 = vmatpush1.msra.mxu0 %v69
    %874 = vmatprep.subr.mxu0 0.0
    %875 = vmatpush1.msra.mxu0 %v66
    %876 = vmatprep.subr.mxu0 0.0
    %877 = vmatpush1.msra.mxu0 %v63
    %878 = vmatprep.subr.mxu0 0.0
    %879 = vmatpush1.msra.mxu0 %v60
    %880 = vmatprep.subr.mxu0 0.0
    %881 = vmatpush1.msra.mxu0 %v57
    %882 = vmatprep.subr.mxu0 0.0
    %883 = vmatpush1.msra.mxu0 %v54
    %884 = vmatprep.subr.mxu0 0.0
    %885 = vmatpush2.msra.mxu0 0.0
    %886 = vmatprep.subr.mxu0 0.0
    %887 = vmatpush2.msra.mxu0 0.0
    %888 = vmatprep.subr.mxu0 0.0
    %889 = vmatpush2.msra.mxu0 0.0
    %890 = vmatprep.subr.mxu0 0.0
    %891 = vmatpush2.msra.mxu0 0.0
    %892 = vmatprep.subr.mxu0 0.0
    %893 = vmatpush2.msra.mxu0 0.0
    %894 = vmatprep.subr.mxu0 0.0
    %895 = vmatpush2.msra.mxu0 0.0
    %896 = vmatprep.subr.mxu0 0.0
    %897 = vmatpush2.msra.mxu0 0.0
    %898 = vmatprep.subr.mxu0 0.0
    %899 = vmatpush2.msra.mxu0 0.0
    %900 = vmatprep.subr.mxu0 0.0
    %901 = vmatpush2.msra.mxu0 0.0
    %902 = vmatprep.subr.mxu0 0.0
    %903 = vmatpush2.msra.mxu0 0.0
    %904 = vmatprep.subr.mxu0 0.0
    %905 = vmatpush2.msra.mxu0 0.0
    %906 = vmatprep.subr.mxu0 0.0
    %907 = vmatpush2.msra.mxu0 0.0
    %908 = vmatprep.subr.mxu0 0.0
    %909 = vmatpush2.msra.mxu0 0.0
    %910 = vmatprep.subr.mxu0 0.0
    %911 = vmatpush2.msra.mxu0 0.0
    %912 = vmatprep.subr.mxu0 0.0
    %913 = vmatpush2.msra.mxu0 0.0
    %914 = vmatprep.subr.mxu0 0.0
    %915 = vmatpush2.msra.mxu0 0.0
    %916 = vmatprep.mubr.f32.mxu0 0.0
    %917 = vmatmul.mubr.f32.gmra.mxu0 %v774
    %v918 = vpop.f32.mrf.mxu0
    %v919 = vadd.f32 0.0, %v918
    %v920 = vpop.f32.mrf.mxu0
    %921 = vdwg.mxu0
    %v922 = vadd.f32 %v778, %v848
    %v923 = vxor.u32 %v922, 2147483648
    %v924 = vmul.f32 %v923, 1.442695
    %v925 = vpow.pop %v924
    %v926 = vadd.f32 %v925, 1.0
    %v927 = vrcp.pop %v926
    %v928 = vmul.f32 1.0, %v927
    %v929 = vadd.f32 %v779, %v850
    %v930 = vxor.u32 %v929, 2147483648
    %v931 = vmul.f32 %v930, 1.442695
    %v932 = vpow.pop %v931
    %v933 = vadd.f32 %v932, 1.0
    %v934 = vrcp.pop %v933
    %v935 = vmul.f32 1.0, %v934
    %v936 = vadd.f32 %v919, %v105
    %v937 = vmul.f32 %v928, %v936
    %v938 = vadd.f32 %v780, %v937
    %v939 = vtanh.pop %v938
    %v940 = vsub.f32 %v774, %v939
    %v941 = vmul.f32 %v935, %v940
    %v942 = vadd.f32 %v939, %v941
    %s943 = scalar_lea.vmem [#allocation8], 32
    %944 = vst [vmem:[%s943] sm:$0xff] %v942
    %s945 = scalar_lea.vmem [#allocation3], 120
    %v946 = vld [vmem:[%s945] sm:$0xff]
    %v947 = vld [vmem:[%s945 + $0x8] sm:$0xff]
    %v948 = vld [vmem:[%s945 + $0x10] sm:$0xff]
    %949 = vmatprep.subr.mxu0 %v98
    %950 = vmatpush1.msra.mxu0 %v97
    %951 = vmatprep.subr.mxu0 %v95
    %952 = vmatpush1.msra.mxu0 %v94
    %953 = vmatprep.subr.mxu0 %v92
    %954 = vmatpush1.msra.mxu0 %v91
    %955 = vmatprep.subr.mxu0 %v89
    %956 = vmatpush1.msra.mxu0 %v88
    %957 = vmatprep.subr.mxu0 %v86
    %958 = vmatpush1.msra.mxu0 %v85
    %959 = vmatprep.subr.mxu0 %v83
    %960 = vmatpush1.msra.mxu0 %v82
    %961 = vmatprep.subr.mxu0 %v80
    %962 = vmatpush1.msra.mxu0 %v79
    %963 = vmatprep.subr.mxu0 %v77
    %964 = vmatpush1.msra.mxu0 %v76
    %965 = vmatprep.subr.mxu0 %v74
    %966 = vmatpush1.msra.mxu0 %v73
    %967 = vmatprep.subr.mxu0 %v71
    %968 = vmatpush1.msra.mxu0 %v70
    %969 = vmatprep.subr.mxu0 %v68
    %970 = vmatpush1.msra.mxu0 %v67
    %971 = vmatprep.subr.mxu0 %v65
    %972 = vmatpush1.msra.mxu0 %v64
    %973 = vmatprep.subr.mxu0 %v62
    %974 = vmatpush1.msra.mxu0 %v61
    %975 = vmatprep.subr.mxu0 %v59
    %976 = vmatpush1.msra.mxu0 %v58
    %977 = vmatprep.subr.mxu0 %v56
    %978 = vmatpush1.msra.mxu0 %v55
    %979 = vmatprep.subr.mxu0 %v53
    %980 = vmatpush1.msra.mxu0 %v52
    %981 = vmatprep.subr.mxu0 0.0
    %982 = vmatpush2.msra.mxu0 0.0
    %983 = vmatprep.subr.mxu0 0.0
    %984 = vmatpush2.msra.mxu0 0.0
    %985 = vmatprep.subr.mxu0 0.0
    %986 = vmatpush2.msra.mxu0 0.0
    %987 = vmatprep.subr.mxu0 0.0
    %988 = vmatpush2.msra.mxu0 0.0
    %989 = vmatprep.subr.mxu0 0.0
    %990 = vmatpush2.msra.mxu0 0.0
    %991 = vmatprep.subr.mxu0 0.0
    %992 = vmatpush2.msra.mxu0 0.0
    %993 = vmatprep.subr.mxu0 0.0
    %994 = vmatpush2.msra.mxu0 0.0
    %995 = vmatprep.subr.mxu0 0.0
    %996 = vmatpush2.msra.mxu0 0.0
    %997 = vmatprep.subr.mxu0 0.0
    %998 = vmatpush2.msra.mxu0 0.0
    %999 = vmatprep.subr.mxu0 0.0
    %1000 = vmatpush2.msra.mxu0 0.0
    %1001 = vmatprep.subr.mxu0 0.0
    %1002 = vmatpush2.msra.mxu0 0.0
    %1003 = vmatprep.subr.mxu0 0.0
    %1004 = vmatpush2.msra.mxu0 0.0
    %1005 = vmatprep.subr.mxu0 0.0
    %1006 = vmatpush2.msra.mxu0 0.0
    %1007 = vmatprep.subr.mxu0 0.0
    %1008 = vmatpush2.msra.mxu0 0.0
    %1009 = vmatprep.subr.mxu0 0.0
    %1010 = vmatpush2.msra.mxu0 0.0
    %1011 = vmatprep.subr.mxu0 0.0
    %1012 = vmatpush2.msra.mxu0 0.0
    %1013 = vmatprep.mubr.f32.mxu0 0.0
    %1014 = vmatmul.mubr.f32.gmra.mxu0 %v942
    %v1015 = vpop.f32.mrf.mxu0
    %v1016 = vadd.f32 0.0, %v1015
    %v1017 = vpop.f32.mrf.mxu0
    %v1018 = vadd.f32 0.0, %v1017
    %1019 = vdwg.mxu0
    %1020 = vmatprep.subr.mxu0 0.0
    %1021 = vmatpush1.msra.mxu0 %v99
    %1022 = vmatprep.subr.mxu0 0.0
    %1023 = vmatpush1.msra.mxu0 %v96
    %1024 = vmatprep.subr.mxu0 0.0
    %1025 = vmatpush1.msra.mxu0 %v93
    %1026 = vmatprep.subr.mxu0 0.0
    %1027 = vmatpush1.msra.mxu0 %v90
    %1028 = vmatprep.subr.mxu0 0.0
    %1029 = vmatpush1.msra.mxu0 %v87
    %1030 = vmatprep.subr.mxu0 0.0
    %1031 = vmatpush1.msra.mxu0 %v84
    %1032 = vmatprep.subr.mxu0 0.0
    %1033 = vmatpush1.msra.mxu0 %v81
    %1034 = vmatprep.subr.mxu0 0.0
    %1035 = vmatpush1.msra.mxu0 %v78
    %1036 = vmatprep.subr.mxu0 0.0
    %1037 = vmatpush1.msra.mxu0 %v75
    %1038 = vmatprep.subr.mxu0 0.0
    %1039 = vmatpush1.msra.mxu0 %v72
    %1040 = vmatprep.subr.mxu0 0.0
    %1041 = vmatpush1.msra.mxu0 %v69
    %1042 = vmatprep.subr.mxu0 0.0
    %1043 = vmatpush1.msra.mxu0 %v66
    %1044 = vmatprep.subr.mxu0 0.0
    %1045 = vmatpush1.msra.mxu0 %v63
    %1046 = vmatprep.subr.mxu0 0.0
    %1047 = vmatpush1.msra.mxu0 %v60
    %1048 = vmatprep.subr.mxu0 0.0
    %1049 = vmatpush1.msra.mxu0 %v57
    %1050 = vmatprep.subr.mxu0 0.0
    %1051 = vmatpush1.msra.mxu0 %v54
    %1052 = vmatprep.subr.mxu0 0.0
    %1053 = vmatpush2.msra.mxu0 0.0
    %1054 = vmatprep.subr.mxu0 0.0
    %1055 = vmatpush2.msra.mxu0 0.0
    %1056 = vmatprep.subr.mxu0 0.0
    %1057 = vmatpush2.msra.mxu0 0.0
    %1058 = vmatprep.subr.mxu0 0.0
    %1059 = vmatpush2.msra.mxu0 0.0
    %1060 = vmatprep.subr.mxu0 0.0
    %1061 = vmatpush2.msra.mxu0 0.0
    %1062 = vmatprep.subr.mxu0 0.0
    %1063 = vmatpush2.msra.mxu0 0.0
    %1064 = vmatprep.subr.mxu0 0.0
    %1065 = vmatpush2.msra.mxu0 0.0
    %1066 = vmatprep.subr.mxu0 0.0
    %1067 = vmatpush2.msra.mxu0 0.0
    %1068 = vmatprep.subr.mxu0 0.0
    %1069 = vmatpush2.msra.mxu0 0.0
    %1070 = vmatprep.subr.mxu0 0.0
    %1071 = vmatpush2.msra.mxu0 0.0
    %1072 = vmatprep.subr.mxu0 0.0
    %1073 = vmatpush2.msra.mxu0 0.0
    %1074 = vmatprep.subr.mxu0 0.0
    %1075 = vmatpush2.msra.mxu0 0.0
    %1076 = vmatprep.subr.mxu0 0.0
    %1077 = vmatpush2.msra.mxu0 0.0
    %1078 = vmatprep.subr.mxu0 0.0
    %1079 = vmatpush2.msra.mxu0 0.0
    %1080 = vmatprep.subr.mxu0 0.0
    %1081 = vmatpush2.msra.mxu0 0.0
    %1082 = vmatprep.subr.mxu0 0.0
    %1083 = vmatpush2.msra.mxu0 0.0
    %1084 = vmatprep.mubr.f32.mxu0 0.0
    %1085 = vmatmul.mubr.f32.gmra.mxu0 %v942
    %v1086 = vpop.f32.mrf.mxu0
    %v1087 = vadd.f32 0.0, %v1086
    %v1088 = vpop.f32.mrf.mxu0
    %1089 = vdwg.mxu0
    %v1090 = vadd.f32 %v946, %v1016
    %v1091 = vxor.u32 %v1090, 2147483648
    %v1092 = vmul.f32 %v1091, 1.442695
    %v1093 = vpow.pop %v1092
    %v1094 = vadd.f32 %v1093, 1.0
    %v1095 = vrcp.pop %v1094
    %v1096 = vmul.f32 1.0, %v1095
    %v1097 = vadd.f32 %v947, %v1018
    %v1098 = vxor.u32 %v1097, 2147483648
    %v1099 = vmul.f32 %v1098, 1.442695
    %v1100 = vpow.pop %v1099
    %v1101 = vadd.f32 %v1100, 1.0
    %v1102 = vrcp.pop %v1101
    %v1103 = vmul.f32 1.0, %v1102
    %v1104 = vadd.f32 %v1087, %v105
    %v1105 = vmul.f32 %v1096, %v1104
    %v1106 = vadd.f32 %v948, %v1105
    %v1107 = vtanh.pop %v1106
    %v1108 = vsub.f32 %v942, %v1107
    %v1109 = vmul.f32 %v1103, %v1108
    %v1110 = vadd.f32 %v1107, %v1109
    %s1111 = scalar_lea.vmem [#allocation8], 40
    %1112 = vst [vmem:[%s1111] sm:$0xff] %v1110
    %s1113 = scalar_lea.vmem [#allocation3], 144
    %v1114 = vld [vmem:[%s1113] sm:$0xff]
    %v1115 = vld [vmem:[%s1113 + $0x8] sm:$0xff]
    %v1116 = vld [vmem:[%s1113 + $0x10] sm:$0xff]
    %1117 = vmatprep.subr.mxu0 %v98
    %1118 = vmatpush1.msra.mxu0 %v97
    %1119 = vmatprep.subr.mxu0 %v95
    %1120 = vmatpush1.msra.mxu0 %v94
    %1121 = vmatprep.subr.mxu0 %v92
    %1122 = vmatpush1.msra.mxu0 %v91
    %1123 = vmatprep.subr.mxu0 %v89
    %1124 = vmatpush1.msra.mxu0 %v88
    %1125 = vmatprep.subr.mxu0 %v86
    %1126 = vmatpush1.msra.mxu0 %v85
    %1127 = vmatprep.subr.mxu0 %v83
    %1128 = vmatpush1.msra.mxu0 %v82
    %1129 = vmatprep.subr.mxu0 %v80
    %1130 = vmatpush1.msra.mxu0 %v79
    %1131 = vmatprep.subr.mxu0 %v77
    %1132 = vmatpush1.msra.mxu0 %v76
    %1133 = vmatprep.subr.mxu0 %v74
    %1134 = vmatpush1.msra.mxu0 %v73
    %1135 = vmatprep.subr.mxu0 %v71
    %1136 = vmatpush1.msra.mxu0 %v70
    %1137 = vmatprep.subr.mxu0 %v68
    %1138 = vmatpush1.msra.mxu0 %v67
    %1139 = vmatprep.subr.mxu0 %v65
    %1140 = vmatpush1.msra.mxu0 %v64
    %1141 = vmatprep.subr.mxu0 %v62
    %1142 = vmatpush1.msra.mxu0 %v61
    %1143 = vmatprep.subr.mxu0 %v59
    %1144 = vmatpush1.msra.mxu0 %v58
    %1145 = vmatprep.subr.mxu0 %v56
    %1146 = vmatpush1.msra.mxu0 %v55
    %1147 = vmatprep.subr.mxu0 %v53
    %1148 = vmatpush1.msra.mxu0 %v52
    %1149 = vmatprep.subr.mxu0 0.0
    %1150 = vmatpush2.msra.mxu0 0.0
    %1151 = vmatprep.subr.mxu0 0.0
    %1152 = vmatpush2.msra.mxu0 0.0
    %1153 = vmatprep.subr.mxu0 0.0
    %1154 = vmatpush2.msra.mxu0 0.0
    %1155 = vmatprep.subr.mxu0 0.0
    %1156 = vmatpush2.msra.mxu0 0.0
    %1157 = vmatprep.subr.mxu0 0.0
    %1158 = vmatpush2.msra.mxu0 0.0
    %1159 = vmatprep.subr.mxu0 0.0
    %1160 = vmatpush2.msra.mxu0 0.0
    %1161 = vmatprep.subr.mxu0 0.0
    %1162 = vmatpush2.msra.mxu0 0.0
    %1163 = vmatprep.subr.mxu0 0.0
    %1164 = vmatpush2.msra.mxu0 0.0
    %1165 = vmatprep.subr.mxu0 0.0
    %1166 = vmatpush2.msra.mxu0 0.0
    %1167 = vmatprep.subr.mxu0 0.0
    %1168 = vmatpush2.msra.mxu0 0.0
    %1169 = vmatprep.subr.mxu0 0.0
    %1170 = vmatpush2.msra.mxu0 0.0
    %1171 = vmatprep.subr.mxu0 0.0
    %1172 = vmatpush2.msra.mxu0 0.0
    %1173 = vmatprep.subr.mxu0 0.0
    %1174 = vmatpush2.msra.mxu0 0.0
    %1175 = vmatprep.subr.mxu0 0.0
    %1176 = vmatpush2.msra.mxu0 0.0
    %1177 = vmatprep.subr.mxu0 0.0
    %1178 = vmatpush2.msra.mxu0 0.0
    %1179 = vmatprep.subr.mxu0 0.0
    %1180 = vmatpush2.msra.mxu0 0.0
    %1181 = vmatprep.mubr.f32.mxu0 0.0
    %1182 = vmatmul.mubr.f32.gmra.mxu0 %v1110
    %v1183 = vpop.f32.mrf.mxu0
    %v1184 = vadd.f32 0.0, %v1183
    %v1185 = vpop.f32.mrf.mxu0
    %v1186 = vadd.f32 0.0, %v1185
    %1187 = vdwg.mxu0
    %1188 = vmatprep.subr.mxu0 0.0
    %1189 = vmatpush1.msra.mxu0 %v99
    %1190 = vmatprep.subr.mxu0 0.0
    %1191 = vmatpush1.msra.mxu0 %v96
    %1192 = vmatprep.subr.mxu0 0.0
    %1193 = vmatpush1.msra.mxu0 %v93
    %1194 = vmatprep.subr.mxu0 0.0
    %1195 = vmatpush1.msra.mxu0 %v90
    %1196 = vmatprep.subr.mxu0 0.0
    %1197 = vmatpush1.msra.mxu0 %v87
    %1198 = vmatprep.subr.mxu0 0.0
    %1199 = vmatpush1.msra.mxu0 %v84
    %1200 = vmatprep.subr.mxu0 0.0
    %1201 = vmatpush1.msra.mxu0 %v81
    %1202 = vmatprep.subr.mxu0 0.0
    %1203 = vmatpush1.msra.mxu0 %v78
    %1204 = vmatprep.subr.mxu0 0.0
    %1205 = vmatpush1.msra.mxu0 %v75
    %1206 = vmatprep.subr.mxu0 0.0
    %1207 = vmatpush1.msra.mxu0 %v72
    %1208 = vmatprep.subr.mxu0 0.0
    %1209 = vmatpush1.msra.mxu0 %v69
    %1210 = vmatprep.subr.mxu0 0.0
    %1211 = vmatpush1.msra.mxu0 %v66
    %1212 = vmatprep.subr.mxu0 0.0
    %1213 = vmatpush1.msra.mxu0 %v63
    %1214 = vmatprep.subr.mxu0 0.0
    %1215 = vmatpush1.msra.mxu0 %v60
    %1216 = vmatprep.subr.mxu0 0.0
    %1217 = vmatpush1.msra.mxu0 %v57
    %1218 = vmatprep.subr.mxu0 0.0
    %1219 = vmatpush1.msra.mxu0 %v54
    %1220 = vmatprep.subr.mxu0 0.0
    %1221 = vmatpush2.msra.mxu0 0.0
    %1222 = vmatprep.subr.mxu0 0.0
    %1223 = vmatpush2.msra.mxu0 0.0
    %1224 = vmatprep.subr.mxu0 0.0
    %1225 = vmatpush2.msra.mxu0 0.0
    %1226 = vmatprep.subr.mxu0 0.0
    %1227 = vmatpush2.msra.mxu0 0.0
    %1228 = vmatprep.subr.mxu0 0.0
    %1229 = vmatpush2.msra.mxu0 0.0
    %1230 = vmatprep.subr.mxu0 0.0
    %1231 = vmatpush2.msra.mxu0 0.0
    %1232 = vmatprep.subr.mxu0 0.0
    %1233 = vmatpush2.msra.mxu0 0.0
    %1234 = vmatprep.subr.mxu0 0.0
    %1235 = vmatpush2.msra.mxu0 0.0
    %1236 = vmatprep.subr.mxu0 0.0
    %1237 = vmatpush2.msra.mxu0 0.0
    %1238 = vmatprep.subr.mxu0 0.0
    %1239 = vmatpush2.msra.mxu0 0.0
    %1240 = vmatprep.subr.mxu0 0.0
    %1241 = vmatpush2.msra.mxu0 0.0
    %1242 = vmatprep.subr.mxu0 0.0
    %1243 = vmatpush2.msra.mxu0 0.0
    %1244 = vmatprep.subr.mxu0 0.0
    %1245 = vmatpush2.msra.mxu0 0.0
    %1246 = vmatprep.subr.mxu0 0.0
    %1247 = vmatpush2.msra.mxu0 0.0
    %1248 = vmatprep.subr.mxu0 0.0
    %1249 = vmatpush2.msra.mxu0 0.0
    %1250 = vmatprep.subr.mxu0 0.0
    %1251 = vmatpush2.msra.mxu0 0.0
    %1252 = vmatprep.mubr.f32.mxu0 0.0
    %1253 = vmatmul.mubr.f32.gmra.mxu0 %v1110
    %v1254 = vpop.f32.mrf.mxu0
    %v1255 = vadd.f32 0.0, %v1254
    %v1256 = vpop.f32.mrf.mxu0
    %1257 = vdwg.mxu0
    %v1258 = vadd.f32 %v1114, %v1184
    %v1259 = vxor.u32 %v1258, 2147483648
    %v1260 = vmul.f32 %v1259, 1.442695
    %v1261 = vpow.pop %v1260
    %v1262 = vadd.f32 %v1261, 1.0
    %v1263 = vrcp.pop %v1262
    %v1264 = vmul.f32 1.0, %v1263
    %v1265 = vadd.f32 %v1115, %v1186
    %v1266 = vxor.u32 %v1265, 2147483648
    %v1267 = vmul.f32 %v1266, 1.442695
    %v1268 = vpow.pop %v1267
    %v1269 = vadd.f32 %v1268, 1.0
    %v1270 = vrcp.pop %v1269
    %v1271 = vmul.f32 1.0, %v1270
    %v1272 = vadd.f32 %v1255, %v105
    %v1273 = vmul.f32 %v1264, %v1272
    %v1274 = vadd.f32 %v1116, %v1273
    %v1275 = vtanh.pop %v1274
    %v1276 = vsub.f32 %v1110, %v1275
    %v1277 = vmul.f32 %v1271, %v1276
    %v1278 = vadd.f32 %v1275, %v1277
    %s1279 = scalar_lea.vmem [#allocation8], 48
    %1280 = vst [vmem:[%s1279] sm:$0xff] %v1278
    %s1281 = scalar_lea.vmem [#allocation3], 168
    %v1282 = vld [vmem:[%s1281] sm:$0xff]
    %v1283 = vld [vmem:[%s1281 + $0x8] sm:$0xff]
    %v1284 = vld [vmem:[%s1281 + $0x10] sm:$0xff]
    %1285 = vmatprep.subr.mxu0 %v98
    %1286 = vmatpush1.msra.mxu0 %v97
    %1287 = vmatprep.subr.mxu0 %v95
    %1288 = vmatpush1.msra.mxu0 %v94
    %1289 = vmatprep.subr.mxu0 %v92
    %1290 = vmatpush1.msra.mxu0 %v91
    %1291 = vmatprep.subr.mxu0 %v89
    %1292 = vmatpush1.msra.mxu0 %v88
    %1293 = vmatprep.subr.mxu0 %v86
    %1294 = vmatpush1.msra.mxu0 %v85
    %1295 = vmatprep.subr.mxu0 %v83
    %1296 = vmatpush1.msra.mxu0 %v82
    %1297 = vmatprep.subr.mxu0 %v80
    %1298 = vmatpush1.msra.mxu0 %v79
    %1299 = vmatprep.subr.mxu0 %v77
    %1300 = vmatpush1.msra.mxu0 %v76
    %1301 = vmatprep.subr.mxu0 %v74
    %1302 = vmatpush1.msra.mxu0 %v73
    %1303 = vmatprep.subr.mxu0 %v71
    %1304 = vmatpush1.msra.mxu0 %v70
    %1305 = vmatprep.subr.mxu0 %v68
    %1306 = vmatpush1.msra.mxu0 %v67
    %1307 = vmatprep.subr.mxu0 %v65
    %1308 = vmatpush1.msra.mxu0 %v64
    %1309 = vmatprep.subr.mxu0 %v62
    %1310 = vmatpush1.msra.mxu0 %v61
    %1311 = vmatprep.subr.mxu0 %v59
    %1312 = vmatpush1.msra.mxu0 %v58
    %1313 = vmatprep.subr.mxu0 %v56
    %1314 = vmatpush1.msra.mxu0 %v55
    %1315 = vmatprep.subr.mxu0 %v53
    %1316 = vmatpush1.msra.mxu0 %v52
    %1317 = vmatprep.subr.mxu0 0.0
    %1318 = vmatpush2.msra.mxu0 0.0
    %1319 = vmatprep.subr.mxu0 0.0
    %1320 = vmatpush2.msra.mxu0 0.0
    %1321 = vmatprep.subr.mxu0 0.0
    %1322 = vmatpush2.msra.mxu0 0.0
    %1323 = vmatprep.subr.mxu0 0.0
    %1324 = vmatpush2.msra.mxu0 0.0
    %1325 = vmatprep.subr.mxu0 0.0
    %1326 = vmatpush2.msra.mxu0 0.0
    %1327 = vmatprep.subr.mxu0 0.0
    %1328 = vmatpush2.msra.mxu0 0.0
    %1329 = vmatprep.subr.mxu0 0.0
    %1330 = vmatpush2.msra.mxu0 0.0
    %1331 = vmatprep.subr.mxu0 0.0
    %1332 = vmatpush2.msra.mxu0 0.0
    %1333 = vmatprep.subr.mxu0 0.0
    %1334 = vmatpush2.msra.mxu0 0.0
    %1335 = vmatprep.subr.mxu0 0.0
    %1336 = vmatpush2.msra.mxu0 0.0
    %1337 = vmatprep.subr.mxu0 0.0
    %1338 = vmatpush2.msra.mxu0 0.0
    %1339 = vmatprep.subr.mxu0 0.0
    %1340 = vmatpush2.msra.mxu0 0.0
    %1341 = vmatprep.subr.mxu0 0.0
    %1342 = vmatpush2.msra.mxu0 0.0
    %1343 = vmatprep.subr.mxu0 0.0
    %1344 = vmatpush2.msra.mxu0 0.0
    %1345 = vmatprep.subr.mxu0 0.0
    %1346 = vmatpush2.msra.mxu0 0.0
    %1347 = vmatprep.subr.mxu0 0.0
    %1348 = vmatpush2.msra.mxu0 0.0
    %1349 = vmatprep.mubr.f32.mxu0 0.0
    %1350 = vmatmul.mubr.f32.gmra.mxu0 %v1278
    %v1351 = vpop.f32.mrf.mxu0
    %v1352 = vadd.f32 0.0, %v1351
    %v1353 = vpop.f32.mrf.mxu0
    %v1354 = vadd.f32 0.0, %v1353
    %1355 = vdwg.mxu0
    %1356 = vmatprep.subr.mxu0 0.0
    %1357 = vmatpush1.msra.mxu0 %v99
    %1358 = vmatprep.subr.mxu0 0.0
    %1359 = vmatpush1.msra.mxu0 %v96
    %1360 = vmatprep.subr.mxu0 0.0
    %1361 = vmatpush1.msra.mxu0 %v93
    %1362 = vmatprep.subr.mxu0 0.0
    %1363 = vmatpush1.msra.mxu0 %v90
    %1364 = vmatprep.subr.mxu0 0.0
    %1365 = vmatpush1.msra.mxu0 %v87
    %1366 = vmatprep.subr.mxu0 0.0
    %1367 = vmatpush1.msra.mxu0 %v84
    %1368 = vmatprep.subr.mxu0 0.0
    %1369 = vmatpush1.msra.mxu0 %v81
    %1370 = vmatprep.subr.mxu0 0.0
    %1371 = vmatpush1.msra.mxu0 %v78
    %1372 = vmatprep.subr.mxu0 0.0
    %1373 = vmatpush1.msra.mxu0 %v75
    %1374 = vmatprep.subr.mxu0 0.0
    %1375 = vmatpush1.msra.mxu0 %v72
    %1376 = vmatprep.subr.mxu0 0.0
    %1377 = vmatpush1.msra.mxu0 %v69
    %1378 = vmatprep.subr.mxu0 0.0
    %1379 = vmatpush1.msra.mxu0 %v66
    %1380 = vmatprep.subr.mxu0 0.0
    %1381 = vmatpush1.msra.mxu0 %v63
    %1382 = vmatprep.subr.mxu0 0.0
    %1383 = vmatpush1.msra.mxu0 %v60
    %1384 = vmatprep.subr.mxu0 0.0
    %1385 = vmatpush1.msra.mxu0 %v57
    %1386 = vmatprep.subr.mxu0 0.0
    %1387 = vmatpush1.msra.mxu0 %v54
    %1388 = vmatprep.subr.mxu0 0.0
    %1389 = vmatpush2.msra.mxu0 0.0
    %1390 = vmatprep.subr.mxu0 0.0
    %1391 = vmatpush2.msra.mxu0 0.0
    %1392 = vmatprep.subr.mxu0 0.0
    %1393 = vmatpush2.msra.mxu0 0.0
    %1394 = vmatprep.subr.mxu0 0.0
    %1395 = vmatpush2.msra.mxu0 0.0
    %1396 = vmatprep.subr.mxu0 0.0
    %1397 = vmatpush2.msra.mxu0 0.0
    %1398 = vmatprep.subr.mxu0 0.0
    %1399 = vmatpush2.msra.mxu0 0.0
    %1400 = vmatprep.subr.mxu0 0.0
    %1401 = vmatpush2.msra.mxu0 0.0
    %1402 = vmatprep.subr.mxu0 0.0
    %1403 = vmatpush2.msra.mxu0 0.0
    %1404 = vmatprep.subr.mxu0 0.0
    %1405 = vmatpush2.msra.mxu0 0.0
    %1406 = vmatprep.subr.mxu0 0.0
    %1407 = vmatpush2.msra.mxu0 0.0
    %1408 = vmatprep.subr.mxu0 0.0
    %1409 = vmatpush2.msra.mxu0 0.0
    %1410 = vmatprep.subr.mxu0 0.0
    %1411 = vmatpush2.msra.mxu0 0.0
    %1412 = vmatprep.subr.mxu0 0.0
    %1413 = vmatpush2.msra.mxu0 0.0
    %1414 = vmatprep.subr.mxu0 0.0
    %1415 = vmatpush2.msra.mxu0 0.0
    %1416 = vmatprep.subr.mxu0 0.0
    %1417 = vmatpush2.msra.mxu0 0.0
    %1418 = vmatprep.subr.mxu0 0.0
    %1419 = vmatpush2.msra.mxu0 0.0
    %1420 = vmatprep.mubr.f32.mxu0 0.0
    %1421 = vmatmul.mubr.f32.gmra.mxu0 %v1278
    %v1422 = vpop.f32.mrf.mxu0
    %v1423 = vadd.f32 0.0, %v1422
    %v1424 = vpop.f32.mrf.mxu0
    %1425 = vdwg.mxu0
    %v1426 = vadd.f32 %v1282, %v1352
    %v1427 = vxor.u32 %v1426, 2147483648
    %v1428 = vmul.f32 %v1427, 1.442695
    %v1429 = vpow.pop %v1428
    %v1430 = vadd.f32 %v1429, 1.0
    %v1431 = vrcp.pop %v1430
    %v1432 = vmul.f32 1.0, %v1431
    %v1433 = vadd.f32 %v1283, %v1354
    %v1434 = vxor.u32 %v1433, 2147483648
    %v1435 = vmul.f32 %v1434, 1.442695
    %v1436 = vpow.pop %v1435
    %v1437 = vadd.f32 %v1436, 1.0
    %v1438 = vrcp.pop %v1437
    %v1439 = vmul.f32 1.0, %v1438
    %v1440 = vadd.f32 %v1423, %v105
    %v1441 = vmul.f32 %v1432, %v1440
    %v1442 = vadd.f32 %v1284, %v1441
    %v1443 = vtanh.pop %v1442
    %v1444 = vsub.f32 %v1278, %v1443
    %v1445 = vmul.f32 %v1439, %v1444
    %v1446 = vadd.f32 %v1443, %v1445
    %s1447 = scalar_lea.vmem [#allocation8], 56
    %1448 = vst [vmem:[%s1447] sm:$0xff] %v1446
    // Predicated region
    $region26: #{tpu_custom_call.1} parent=1 // pred_check
      %p1449 = pneg %p46
    $region27: #{tpu_custom_call.1} parent=1 // pred_check_branch
      %1451 = sbr.rel (%p1449) target = $region29
    $region28: #{tpu_custom_call.1} parent=1 // pred_region
      %1452 = vst [vmem:[#allocation9] sm:$0xff] %v1446
    $region29: #{tpu_custom_call.1} parent=1 // pred_fallthru
      _
    %1453 = vst [vmem:[#allocation2] sm:$0xff] %v1446
    // Predicated region
    $region30: #{tpu_custom_call.1} parent=1 // pred_check
      _
    $region31: #{tpu_custom_call.1} parent=1 // pred_check_branch
      %1455 = sbr.rel (0) target = $region33
    $region32: #{tpu_custom_call.1} parent=1 // pred_region
      %s1457 = ssub.s32 1024, 1024
      %1458 = vsyncadd [#allocation5], %s1457
      %s1459 = sshll.u32 [#allocation8], 4
      %s1460 = int_to_ptr.vmem [resolvable:$true] %s1459
      %1465 = dma.vmem_to_hbm [thread:$0]  %s1460, 1024, %s3, [#allocation5], 128, 128, 8
    $region33: #{tpu_custom_call.1} parent=1 // pred_fallthru
      _
    // Predicated region
    $region34: #{tpu_custom_call.1} parent=1 // pred_check
      _
    $region35: #{tpu_custom_call.1} parent=1 // pred_check_branch
      %1467 = sbr.rel (0) target = $region37
    $region36: #{tpu_custom_call.1} parent=1 // pred_region
      %s1469 = ssub.s32 128, 128
      %1470 = vsyncadd [#allocation10], %s1469
      %s1472 = sshll.u32 [#allocation9], 4
      %s1473 = int_to_ptr.vmem [resolvable:$true] %s1472
      %1475 = dma.vmem_to_hbm [thread:$0]  %s1473, 128, %s4, [#allocation10]
    $region37: #{tpu_custom_call.1} parent=1 // pred_fallthru
      _
    // Predicated region
    $region38: #{tpu_custom_call.1} parent=1 // pred_check
      _
    $region39: #{tpu_custom_call.1} parent=1 // pred_check_branch
      %1477 = sbr.rel (0) target = $region41
    $region40: #{tpu_custom_call.1} parent=1 // pred_region
      %1478 = dma.done [#allocation5], 1024
    $region41: #{tpu_custom_call.1} parent=1 // pred_fallthru
      _
    // Predicated region
    $region42: #{tpu_custom_call.1} parent=1 // pred_check
      _
    $region43: #{tpu_custom_call.1} parent=1 // pred_check_branch
      %1480 = sbr.rel (0) target = $region45
    $region44: #{tpu_custom_call.1} parent=1 // pred_region
      %1481 = dma.done [#allocation10], 128
    $region45: #{tpu_custom_call.1} parent=1 // pred_fallthru
      _
    %1482 = vsyncpa [#allocation4], 1
    %1483 = vsyncpa [#allocation7], 1
    %1484 = vsyncpa [#allocation5], 1
    %1485 = vsyncpa [#allocation10], 1

// kernel: tpu_custom_call.1
$region0: #{tpu_custom_call.1}
  #allocation0 [shape = 'u32[]', space=smem, size = 0x4, offset = 0x4, fixed_abs, tag = 'smem constant byte address 0x4 - core index']
  #allocation1 [shape = 'u32[144,128]{1,0:T(1,128)}', space=vmem, size = 0x12000, scoped, tag = 'internal scratch']
  #allocation2 [shape = 'f32[8,128]{1,0:T(8,128)}', space=vmem, size = 0x1000, scoped, tag = 'scratch operand']
  %s0 = inlined_call_operand.hbm [shape: f32[8,8,384], index: 0, kind: input, shape index: {}]
  %s1 = inlined_call_operand.hbm [shape: f32[128,384], index: 1, kind: input, shape index: {}]
  %s2 = inlined_call_operand.vmem [shape: f32[1,128], index: 2, kind: input, shape index: {}]
  %s3 = inlined_call_operand.hbm [shape: f32[8,8,128], index: 3, kind: output, shape index: {0}]
  %s4 = inlined_call_operand.hbm [shape: f32[8,128], index: 4, kind: output, shape index: {1}]
  %5 = xla_tuple %s3, %s4
  %s6 = sld [smem:[#allocation0]]
  $region46: #{tpu_custom_call.1} parent=0
    _
  %s8 = ssub.s32 1, %s6
  %s9 = scalar_select 0, %s8, %s6
  $region1: #{tpu_custom_call.1} parent=0
    #allocation3 [shape = 'u8[98304]{0}', space=vmem, size = 0x18000, scoped, tag = 'input window, operand 0, single buffered']
    #allocation4 [shape = 's32[1]{0}', space=sflag, size = 0x4, scoped, tag = 'scoped memory for tpu_custom_call.1']
    #allocation5 [shape = 's32[1]{0}', space=sflag, size = 0x4, scoped, tag = 'scoped memory for tpu_custom_call.1']
    #allocation6 [shape = 'u8[196608]{0}', space=vmem, size = 0x30000, scoped, tag = 'input window, operand 1, single buffered']
    #allocation7 [shape = 's32[1]{0}', space=sflag, size = 0x4, scoped, tag = 'scoped memory for tpu_custom_call.1']
    #allocation8 [shape = 'u8[32768]{0}', space=vmem, size = 0x8000, scoped, tag = 'output window, operand 0, single buffered']
    #allocation9 [shape = 'u8[4096]{0}', space=vmem, size = 0x1000, scoped, tag = 'output window, operand 1, single buffered']
    #allocation10 [shape = 's32[1]{0}', space=sflag, size = 0x4, scoped, tag = 'scoped memory for tpu_custom_call.1']
    %10 = vsyncpa [#allocation4], 0
    %11 = vsyncpa [#allocation7], 0
    %12 = vsyncpa [#allocation5], 0
    %13 = vsyncpa [#allocation10], 0
    // Predicated region
    $region2: #{tpu_custom_call.1} parent=1 // pred_check
      _
    $region3: #{tpu_custom_call.1} parent=1 // pred_check_branch
      %15 = sbr.rel (0) target = $region5
    $region4: #{tpu_custom_call.1} parent=1 // pred_region
      %s17 = ssub.s32 3072, 3072
      %18 = vsyncadd [#allocation4], %s17
      %s19 = sshll.u32 [#allocation3], 4
      %s20 = int_to_ptr.vmem [resolvable:$true] %s19
      %25 = dma.hbm_to_vmem [thread:$0]  %s0, 3072, %s20, [#allocation4], 384, 384, 24
    $region5: #{tpu_custom_call.1} parent=1 // pred_fallthru
      _
    // Predicated region
    $region6: #{tpu_custom_call.1} parent=1 // pred_check
      _
    $region7: #{tpu_custom_call.1} parent=1 // pred_check_branch
      %27 = sbr.rel (0) target = $region9
    $region8: #{tpu_custom_call.1} parent=1 // pred_region
      %s29 = ssub.s32 6144, 6144
      %30 = vsyncadd [#allocation7], %s29
      %s31 = sshll.u32 [#allocation6], 4
      %s32 = int_to_ptr.vmem [resolvable:$true] %s31
      %37 = dma.hbm_to_vmem [thread:$0]  %s1, 6144, %s32, [#allocation7], 384, 384, 24
    $region9: #{tpu_custom_call.1} parent=1 // pred_fallthru
      _
    // Predicated region
    $region10: #{tpu_custom_call.1} parent=1 // pred_check
      _
    $region11: #{tpu_custom_call.1} parent=1 // pred_check_branch
      %39 = sbr.rel (0) target = $region13
    $region12: #{tpu_custom_call.1} parent=1 // pred_region
      _
    $region13: #{tpu_custom_call.1} parent=1 // pred_fallthru
      _
    // Predicated region
    $region14: #{tpu_custom_call.1} parent=1 // pred_check
      _
    $region15: #{tpu_custom_call.1} parent=1 // pred_check_branch
      %41 = sbr.rel (0) target = $region17
    $region16: #{tpu_custom_call.1} parent=1 // pred_region
      %42 = dma.done [#allocation4], 3072
    $region17: #{tpu_custom_call.1} parent=1 // pred_fallthru
      _
    // Predicated region
    $region18: #{tpu_custom_call.1} parent=1 // pred_check
      _
    $region19: #{tpu_custom_call.1} parent=1 // pred_check_branch
      %44 = sbr.rel (0) target = $region21
    $region20: #{tpu_custom_call.1} parent=1 // pred_region
      %45 = dma.done [#allocation7], 6144
    $region21: #{tpu_custom_call.1} parent=1 // pred_fallthru
      _
    %p46 = scmp.eq.s32.totalorder 0, 0
    // Predicated region
    $region22: #{tpu_custom_call.1} parent=1 // pred_check
      %p47 = pneg %p46
    $region23: #{tpu_custom_call.1} parent=1 // pred_check_branch
      %49 = sbr.rel (%p47) target = $region25
    $region24: #{tpu_custom_call.1} parent=1 // pred_region
      %50 = vst [vmem:[#allocation2] sm:$0xff] 0.0
    $region25: #{tpu_custom_call.1} parent=1 // pred_fallthru
      _
    %v51 = vld [vmem:[#allocation2] sm:$0xff]
    %v52 = vld [vmem:[#allocation6] sm:$0xff]
    %v53 = vld [vmem:[#allocation6 + $0x8] sm:$0xff]
    %v54 = vld [vmem:[#allocation6 + $0x10] sm:$0xff]
    %v55 = vld [vmem:[#allocation6 + $0x18] sm:$0xff]
    %v56 = vld [vmem:[#allocation6 + $0x20] sm:$0xff]
    %v57 = vld [vmem:[#allocation6 + $0x28] sm:$0xff]
    %v58 = vld [vmem:[#allocation6 + $0x30] sm:$0xff]
    %v59 = vld [vmem:[#allocation6 + $0x38] sm:$0xff]
    %v60 = vld [vmem:[#allocation6 + $0x40] sm:$0xff]
    %v61 = vld [vmem:[#allocation6 + $0x48] sm:$0xff]
    %v62 = vld [vmem:[#allocation6 + $0x50] sm:$0xff]
    %v63 = vld [vmem:[#allocation6 + $0x58] sm:$0xff]
    %v64 = vld [vmem:[#allocation6 + $0x60] sm:$0xff]
    %v65 = vld [vmem:[#allocation6 + $0x68] sm:$0xff]
    %v66 = vld [vmem:[#allocation6 + $0x70] sm:$0xff]
    %v67 = vld [vmem:[#allocation6 + $0x78] sm:$0xff]
    %v68 = vld [vmem:[#allocation6 + $0x80] sm:$0xff]
    %v69 = vld [vmem:[#allocation6 + $0x88] sm:$0xff]
    %v70 = vld [vmem:[#allocation6 + $0x90] sm:$0xff]
    %v71 = vld [vmem:[#allocation6 + $0x98] sm:$0xff]
    %v72 = vld [vmem:[#allocation6 + $0xa0] sm:$0xff]
    %v73 = vld [vmem:[#allocation6 + $0xa8] sm:$0xff]
    %v74 = vld [vmem:[#allocation6 + $0xb0] sm:$0xff]
    %v75 = vld [vmem:[#allocation6 + $0xb8] sm:$0xff]
    %v76 = vld [vmem:[#allocation6 + $0xc0] sm:$0xff]
    %v77 = vld [vmem:[#allocation6 + $0xc8] sm:$0xff]
    %v78 = vld [vmem:[#allocation6 + $0xd0] sm:$0xff]
    %v79 = vld [vmem:[#allocation6 + $0xd8] sm:$0xff]
    %v80 = vld [vmem:[#allocation6 + $0xe0] sm:$0xff]
    %v81 = vld [vmem:[#allocation6 + $0xe8] sm:$0xff]
    %v82 = vld [vmem:[#allocation6 + $0xf0] sm:$0xff]
    %v83 = vld [vmem:[#allocation6 + $0xf8] sm:$0xff]
    %v84 = vld [vmem:[#allocation6 + $0x100] sm:$0xff]
    %v85 = vld [vmem:[#allocation6 + $0x108] sm:$0xff]
    %v86 = vld [vmem:[#allocation6 + $0x110] sm:$0xff]
    %v87 = vld [vmem:[#allocation6 + $0x118] sm:$0xff]
    %v88 = vld [vmem:[#allocation6 + $0x120] sm:$0xff]
    %v89 = vld [vmem:[#allocation6 + $0x128] sm:$0xff]
    %v90 = vld [vmem:[#allocation6 + $0x130] sm:$0xff]
    %v91 = vld [vmem:[#allocation6 + $0x138] sm:$0xff]
    %v92 = vld [vmem:[#allocation6 + $0x140] sm:$0xff]
    %v93 = vld [vmem:[#allocation6 + $0x148] sm:$0xff]
    %v94 = vld [vmem:[#allocation6 + $0x150] sm:$0xff]
    %v95 = vld [vmem:[#allocation6 + $0x158] sm:$0xff]
    %v96 = vld [vmem:[#allocation6 + $0x160] sm:$0xff]
    %v97 = vld [vmem:[#allocation6 + $0x168] sm:$0xff]
    %v98 = vld [vmem:[#allocation6 + $0x170] sm:$0xff]
    %v99 = vld [vmem:[#allocation6 + $0x178] sm:$0xff]
    %v100 = vld [vmem:[%s2] sm:$0x1]
    %v102 = vlaneseq
    %v103 = vshrl.u32 %v102, 7
    %v104 = vsub.s32 0, %v103
    %v105 = vrot.slane %v100, %v104
    %v107 = vld [vmem:[#allocation3] sm:$0xff]
    %v108 = vld [vmem:[#allocation3 + $0x8] sm:$0xff]
    %v109 = vld [vmem:[#allocation3 + $0x10] sm:$0xff]
    %110 = vmatprep.subr.mxu0 %v98
    %111 = vmatpush1.msra.mxu0 %v97
    %112 = vmatprep.subr.mxu0 %v95
    %113 = vmatpush1.msra.mxu0 %v94
    %114 = vmatprep.subr.mxu0 %v92
    %115 = vmatpush1.msra.mxu0 %v91
    %116 = vmatprep.subr.mxu0 %v89
    %117 = vmatpush1.msra.mxu0 %v88
    %118 = vmatprep.subr.mxu0 %v86
    %119 = vmatpush1.msra.mxu0 %v85
    %120 = vmatprep.subr.mxu0 %v83
    %121 = vmatpush1.msra.mxu0 %v82
    %122 = vmatprep.subr.mxu0 %v80
    %123 = vmatpush1.msra.mxu0 %v79
    %124 = vmatprep.subr.mxu0 %v77
    %125 = vmatpush1.msra.mxu0 %v76
    %126 = vmatprep.subr.mxu0 %v74
    %127 = vmatpush1.msra.mxu0 %v73
    %128 = vmatprep.subr.mxu0 %v71
    %129 = vmatpush1.msra.mxu0 %v70
    %130 = vmatprep.subr.mxu0 %v68
    %131 = vmatpush1.msra.mxu0 %v67
    %132 = vmatprep.subr.mxu0 %v65
    %133 = vmatpush1.msra.mxu0 %v64
    %134 = vmatprep.subr.mxu0 %v62
    %135 = vmatpush1.msra.mxu0 %v61
    %136 = vmatprep.subr.mxu0 %v59
    %137 = vmatpush1.msra.mxu0 %v58
    %138 = vmatprep.subr.mxu0 %v56
    %139 = vmatpush1.msra.mxu0 %v55
    %140 = vmatprep.subr.mxu0 %v53
    %141 = vmatpush1.msra.mxu0 %v52
    %142 = vmatprep.subr.mxu0 0.0
    %143 = vmatpush2.msra.mxu0 0.0
    %144 = vmatprep.subr.mxu0 0.0
    %145 = vmatpush2.msra.mxu0 0.0
    %146 = vmatprep.subr.mxu0 0.0
    %147 = vmatpush2.msra.mxu0 0.0
    %148 = vmatprep.subr.mxu0 0.0
    %149 = vmatpush2.msra.mxu0 0.0
    %150 = vmatprep.subr.mxu0 0.0
    %151 = vmatpush2.msra.mxu0 0.0
    %152 = vmatprep.subr.mxu0 0.0
    %153 = vmatpush2.msra.mxu0 0.0
    %154 = vmatprep.subr.mxu0 0.0
    %155 = vmatpush2.msra.mxu0 0.0
    %156 = vmatprep.subr.mxu0 0.0
    %157 = vmatpush2.msra.mxu0 0.0
    %158 = vmatprep.subr.mxu0 0.0
    %159 = vmatpush2.msra.mxu0 0.0
    %160 = vmatprep.subr.mxu0 0.0
    %161 = vmatpush2.msra.mxu0 0.0
    %162 = vmatprep.subr.mxu0 0.0
    %163 = vmatpush2.msra.mxu0 0.0
    %164 = vmatprep.subr.mxu0 0.0
    %165 = vmatpush2.msra.mxu0 0.0
    %166 = vmatprep.subr.mxu0 0.0
    %167 = vmatpush2.msra.mxu0 0.0
    %168 = vmatprep.subr.mxu0 0.0
    %169 = vmatpush2.msra.mxu0 0.0
    %170 = vmatprep.subr.mxu0 0.0
    %171 = vmatpush2.msra.mxu0 0.0
    %172 = vmatprep.subr.mxu0 0.0
    %173 = vmatpush2.msra.mxu0 0.0
    %174 = vmatprep.mubr.f32.mxu0 0.0
    %175 = vmatmul.mubr.f32.gmra.mxu0 %v51
    %v176 = vpop.f32.mrf.mxu0
    %v177 = vadd.f32 0.0, %v176
    %v178 = vpop.f32.mrf.mxu0
    %v179 = vadd.f32 0.0, %v178
    %180 = vdwg.mxu0
    %181 = vmatprep.subr.mxu0 0.0
    %182 = vmatpush1.msra.mxu0 %v99
    %183 = vmatprep.subr.mxu0 0.0
    %184 = vmatpush1.msra.mxu0 %v96
    %185 = vmatprep.subr.mxu0 0.0
    %186 = vmatpush1.msra.mxu0 %v93
    %187 = vmatprep.subr.mxu0 0.0
    %188 = vmatpush1.msra.mxu0 %v90
    %189 = vmatprep.subr.mxu0 0.0
    %190 = vmatpush1.msra.mxu0 %v87
    %191 = vmatprep.subr.mxu0 0.0
    %192 = vmatpush1.msra.mxu0 %v84
    %193 = vmatprep.subr.mxu0 0.0
    %194 = vmatpush1.msra.mxu0 %v81
    %195 = vmatprep.subr.mxu0 0.0
    %196 = vmatpush1.msra.mxu0 %v78
    %197 = vmatprep.subr.mxu0 0.0
    %198 = vmatpush1.msra.mxu0 %v75
    %199 = vmatprep.subr.mxu0 0.0
    %200 = vmatpush1.msra.mxu0 %v72
    %201 = vmatprep.subr.mxu0 0.0
    %202 = vmatpush1.msra.mxu0 %v69
    %203 = vmatprep.subr.mxu0 0.0
    %204 = vmatpush1.msra.mxu0 %v66
    %205 = vmatprep.subr.mxu0 0.0
    %206 = vmatpush1.msra.mxu0 %v63
    %207 = vmatprep.subr.mxu0 0.0
    %208 = vmatpush1.msra.mxu0 %v60
    %209 = vmatprep.subr.mxu0 0.0
    %210 = vmatpush1.msra.mxu0 %v57
    %211 = vmatprep.subr.mxu0 0.0
    %212 = vmatpush1.msra.mxu0 %v54
    %213 = vmatprep.subr.mxu0 0.0
    %214 = vmatpush2.msra.mxu0 0.0
    %215 = vmatprep.subr.mxu0 0.0
    %216 = vmatpush2.msra.mxu0 0.0
    %217 = vmatprep.subr.mxu0 0.0
    %218 = vmatpush2.msra.mxu0 0.0
    %219 = vmatprep.subr.mxu0 0.0
    %220 = vmatpush2.msra.mxu0 0.0
    %221 = vmatprep.subr.mxu0 0.0
    %222 = vmatpush2.msra.mxu0 0.0
    %223 = vmatprep.subr.mxu0 0.0
    %224 = vmatpush2.msra.mxu0 0.0
    %225 = vmatprep.subr.mxu0 0.0
    %226 = vmatpush2.msra.mxu0 0.0
    %227 = vmatprep.subr.mxu0 0.0
    %228 = vmatpush2.msra.mxu0 0.0
    %229 = vmatprep.subr.mxu0 0.0
    %230 = vmatpush2.msra.mxu0 0.0
    %231 = vmatprep.subr.mxu0 0.0
    %232 = vmatpush2.msra.mxu0 0.0
    %233 = vmatprep.subr.mxu0 0.0
    %234 = vmatpush2.msra.mxu0 0.0
    %235 = vmatprep.subr.mxu0 0.0
    %236 = vmatpush2.msra.mxu0 0.0
    %237 = vmatprep.subr.mxu0 0.0
    %238 = vmatpush2.msra.mxu0 0.0
    %239 = vmatprep.subr.mxu0 0.0
    %240 = vmatpush2.msra.mxu0 0.0
    %241 = vmatprep.subr.mxu0 0.0
    %242 = vmatpush2.msra.mxu0 0.0
    %243 = vmatprep.subr.mxu0 0.0
    %244 = vmatpush2.msra.mxu0 0.0
    %245 = vmatprep.mubr.f32.mxu0 0.0
    %246 = vmatmul.mubr.f32.gmra.mxu0 %v51
    %v247 = vpop.f32.mrf.mxu0
    %v248 = vadd.f32 0.0, %v247
    %v249 = vpop.f32.mrf.mxu0
    %250 = vdwg.mxu0
    %v251 = vadd.f32 %v107, %v177
    %v252 = vxor.u32 %v251, 2147483648
    %v253 = vmul.f32 %v252, 1.442695
    %v254 = vpow.pop %v253
    %v255 = vadd.f32 %v254, 1.0
    %v256 = vrcp.pop %v255
    %v257 = vmul.f32 1.0, %v256
    %v258 = vadd.f32 %v108, %v179
    %v259 = vxor.u32 %v258, 2147483648
    %v260 = vmul.f32 %v259, 1.442695
    %v261 = vpow.pop %v260
    %v262 = vadd.f32 %v261, 1.0
    %v263 = vrcp.pop %v262
    %v264 = vmul.f32 1.0, %v263
    %v265 = vadd.f32 %v248, %v105
    %v266 = vmul.f32 %v257, %v265
    %v267 = vadd.f32 %v109, %v266
    %v268 = vtanh.pop %v267
    %v269 = vsub.f32 %v51, %v268
    %v270 = vmul.f32 %v264, %v269
    %v271 = vadd.f32 %v268, %v270
    %272 = vst [vmem:[#allocation8] sm:$0xff] %v271
    %s273 = scalar_lea.vmem [#allocation3], 24
    %v274 = vld [vmem:[%s273] sm:$0xff]
    %v275 = vld [vmem:[%s273 + $0x8] sm:$0xff]
    %v276 = vld [vmem:[%s273 + $0x10] sm:$0xff]
    %277 = vmatprep.subr.mxu0 %v98
    %278 = vmatpush1.msra.mxu0 %v97
    %279 = vmatprep.subr.mxu0 %v95
    %280 = vmatpush1.msra.mxu0 %v94
    %281 = vmatprep.subr.mxu0 %v92
    %282 = vmatpush1.msra.mxu0 %v91
    %283 = vmatprep.subr.mxu0 %v89
    %284 = vmatpush1.msra.mxu0 %v88
    %285 = vmatprep.subr.mxu0 %v86
    %286 = vmatpush1.msra.mxu0 %v85
    %287 = vmatprep.subr.mxu0 %v83
    %288 = vmatpush1.msra.mxu0 %v82
    %289 = vmatprep.subr.mxu0 %v80
    %290 = vmatpush1.msra.mxu0 %v79
    %291 = vmatprep.subr.mxu0 %v77
    %292 = vmatpush1.msra.mxu0 %v76
    %293 = vmatprep.subr.mxu0 %v74
    %294 = vmatpush1.msra.mxu0 %v73
    %295 = vmatprep.subr.mxu0 %v71
    %296 = vmatpush1.msra.mxu0 %v70
    %297 = vmatprep.subr.mxu0 %v68
    %298 = vmatpush1.msra.mxu0 %v67
    %299 = vmatprep.subr.mxu0 %v65
    %300 = vmatpush1.msra.mxu0 %v64
    %301 = vmatprep.subr.mxu0 %v62
    %302 = vmatpush1.msra.mxu0 %v61
    %303 = vmatprep.subr.mxu0 %v59
    %304 = vmatpush1.msra.mxu0 %v58
    %305 = vmatprep.subr.mxu0 %v56
    %306 = vmatpush1.msra.mxu0 %v55
    %307 = vmatprep.subr.mxu0 %v53
    %308 = vmatpush1.msra.mxu0 %v52
    %309 = vmatprep.subr.mxu0 0.0
    %310 = vmatpush2.msra.mxu0 0.0
    %311 = vmatprep.subr.mxu0 0.0
    %312 = vmatpush2.msra.mxu0 0.0
    %313 = vmatprep.subr.mxu0 0.0
    %314 = vmatpush2.msra.mxu0 0.0
    %315 = vmatprep.subr.mxu0 0.0
    %316 = vmatpush2.msra.mxu0 0.0
    %317 = vmatprep.subr.mxu0 0.0
    %318 = vmatpush2.msra.mxu0 0.0
    %319 = vmatprep.subr.mxu0 0.0
    %320 = vmatpush2.msra.mxu0 0.0
    %321 = vmatprep.subr.mxu0 0.0
    %322 = vmatpush2.msra.mxu0 0.0
    %323 = vmatprep.subr.mxu0 0.0
    %324 = vmatpush2.msra.mxu0 0.0
    %325 = vmatprep.subr.mxu0 0.0
    %326 = vmatpush2.msra.mxu0 0.0
    %327 = vmatprep.subr.mxu0 0.0
    %328 = vmatpush2.msra.mxu0 0.0
    %329 = vmatprep.subr.mxu0 0.0
    %330 = vmatpush2.msra.mxu0 0.0
    %331 = vmatprep.subr.mxu0 0.0
    %332 = vmatpush2.msra.mxu0 0.0
    %333 = vmatprep.subr.mxu0 0.0
    %334 = vmatpush2.msra.mxu0 0.0
    %335 = vmatprep.subr.mxu0 0.0
    %336 = vmatpush2.msra.mxu0 0.0
    %337 = vmatprep.subr.mxu0 0.0
    %338 = vmatpush2.msra.mxu0 0.0
    %339 = vmatprep.subr.mxu0 0.0
    %340 = vmatpush2.msra.mxu0 0.0
    %341 = vmatprep.mubr.f32.mxu0 0.0
    %342 = vmatmul.mubr.f32.gmra.mxu0 %v271
    %v343 = vpop.f32.mrf.mxu0
    %v344 = vadd.f32 0.0, %v343
    %v345 = vpop.f32.mrf.mxu0
    %v346 = vadd.f32 0.0, %v345
    %347 = vdwg.mxu0
    %348 = vmatprep.subr.mxu0 0.0
    %349 = vmatpush1.msra.mxu0 %v99
    %350 = vmatprep.subr.mxu0 0.0
    %351 = vmatpush1.msra.mxu0 %v96
    %352 = vmatprep.subr.mxu0 0.0
    %353 = vmatpush1.msra.mxu0 %v93
    %354 = vmatprep.subr.mxu0 0.0
    %355 = vmatpush1.msra.mxu0 %v90
    %356 = vmatprep.subr.mxu0 0.0
    %357 = vmatpush1.msra.mxu0 %v87
    %358 = vmatprep.subr.mxu0 0.0
    %359 = vmatpush1.msra.mxu0 %v84
    %360 = vmatprep.subr.mxu0 0.0
    %361 = vmatpush1.msra.mxu0 %v81
    %362 = vmatprep.subr.mxu0 0.0
    %363 = vmatpush1.msra.mxu0 %v78
    %364 = vmatprep.subr.mxu0 0.0
    %365 = vmatpush1.msra.mxu0 %v75
    %366 = vmatprep.subr.mxu0 0.0
    %367 = vmatpush1.msra.mxu0 %v72
    %368 = vmatprep.subr.mxu0 0.0
    %369 = vmatpush1.msra.mxu0 %v69
    %370 = vmatprep.subr.mxu0 0.0
    %371 = vmatpush1.msra.mxu0 %v66
    %372 = vmatprep.subr.mxu0 0.0
    %373 = vmatpush1.msra.mxu0 %v63
    %374 = vmatprep.subr.mxu0 0.0
    %375 = vmatpush1.msra.mxu0 %v60
    %376 = vmatprep.subr.mxu0 0.0
    %377 = vmatpush1.msra.mxu0 %v57
    %378 = vmatprep.subr.mxu0 0.0
    %379 = vmatpush1.msra.mxu0 %v54
    %380 = vmatprep.subr.mxu0 0.0
    %381 = vmatpush2.msra.mxu0 0.0
    %382 = vmatprep.subr.mxu0 0.0
    %383 = vmatpush2.msra.mxu0 0.0
    %384 = vmatprep.subr.mxu0 0.0
    %385 = vmatpush2.msra.mxu0 0.0
    %386 = vmatprep.subr.mxu0 0.0
    %387 = vmatpush2.msra.mxu0 0.0
    %388 = vmatprep.subr.mxu0 0.0
    %389 = vmatpush2.msra.mxu0 0.0
    %390 = vmatprep.subr.mxu0 0.0
    %391 = vmatpush2.msra.mxu0 0.0
    %392 = vmatprep.subr.mxu0 0.0
    %393 = vmatpush2.msra.mxu0 0.0
    %394 = vmatprep.subr.mxu0 0.0
    %395 = vmatpush2.msra.mxu0 0.0
    %396 = vmatprep.subr.mxu0 0.0
    %397 = vmatpush2.msra.mxu0 0.0
    %398 = vmatprep.subr.mxu0 0.0
    %399 = vmatpush2.msra.mxu0 0.0
    %400 = vmatprep.subr.mxu0 0.0
    %401 = vmatpush2.msra.mxu0 0.0
    %402 = vmatprep.subr.mxu0 0.0
    %403 = vmatpush2.msra.mxu0 0.0
    %404 = vmatprep.subr.mxu0 0.0
    %405 = vmatpush2.msra.mxu0 0.0
    %406 = vmatprep.subr.mxu0 0.0
    %407 = vmatpush2.msra.mxu0 0.0
    %408 = vmatprep.subr.mxu0 0.0
    %409 = vmatpush2.msra.mxu0 0.0
    %410 = vmatprep.subr.mxu0 0.0
    %411 = vmatpush2.msra.mxu0 0.0
    %412 = vmatprep.mubr.f32.mxu0 0.0
    %413 = vmatmul.mubr.f32.gmra.mxu0 %v271
    %v414 = vpop.f32.mrf.mxu0
    %v415 = vadd.f32 0.0, %v414
    %v416 = vpop.f32.mrf.mxu0
    %417 = vdwg.mxu0
    %v418 = vadd.f32 %v274, %v344
    %v419 = vxor.u32 %v418, 2147483648
    %v420 = vmul.f32 %v419, 1.442695
    %v421 = vpow.pop %v420
    %v422 = vadd.f32 %v421, 1.0
    %v423 = vrcp.pop %v422
    %v424 = vmul.f32 1.0, %v423
    %v425 = vadd.f32 %v275, %v346
    %v426 = vxor.u32 %v425, 2147483648
    %v427 = vmul.f32 %v426, 1.442695
    %v428 = vpow.pop %v427
    %v429 = vadd.f32 %v428, 1.0
    %v430 = vrcp.pop %v429
    %v431 = vmul.f32 1.0, %v430
    %v432 = vadd.f32 %v415, %v105
    %v433 = vmul.f32 %v424, %v432
    %v434 = vadd.f32 %v276, %v433
    %v435 = vtanh.pop %v434
    %v436 = vsub.f32 %v271, %v435
    %v437 = vmul.f32 %v431, %v436
    %v438 = vadd.f32 %v435, %v437
    %s439 = scalar_lea.vmem [#allocation8], 8
    %440 = vst [vmem:[%s439] sm:$0xff] %v438
    %s441 = scalar_lea.vmem [#allocation3], 48
    %v442 = vld [vmem:[%s441] sm:$0xff]
    %v443 = vld [vmem:[%s441 + $0x8] sm:$0xff]
    %v444 = vld [vmem:[%s441 + $0x10] sm:$0xff]
    %445 = vmatprep.subr.mxu0 %v98
    %446 = vmatpush1.msra.mxu0 %v97
    %447 = vmatprep.subr.mxu0 %v95
    %448 = vmatpush1.msra.mxu0 %v94
    %449 = vmatprep.subr.mxu0 %v92
    %450 = vmatpush1.msra.mxu0 %v91
    %451 = vmatprep.subr.mxu0 %v89
    %452 = vmatpush1.msra.mxu0 %v88
    %453 = vmatprep.subr.mxu0 %v86
    %454 = vmatpush1.msra.mxu0 %v85
    %455 = vmatprep.subr.mxu0 %v83
    %456 = vmatpush1.msra.mxu0 %v82
    %457 = vmatprep.subr.mxu0 %v80
    %458 = vmatpush1.msra.mxu0 %v79
    %459 = vmatprep.subr.mxu0 %v77
    %460 = vmatpush1.msra.mxu0 %v76
    %461 = vmatprep.subr.mxu0 %v74
    %462 = vmatpush1.msra.mxu0 %v73
    %463 = vmatprep.subr.mxu0 %v71
    %464 = vmatpush1.msra.mxu0 %v70
    %465 = vmatprep.subr.mxu0 %v68
    %466 = vmatpush1.msra.mxu0 %v67
    %467 = vmatprep.subr.mxu0 %v65
    %468 = vmatpush1.msra.mxu0 %v64
    %469 = vmatprep.subr.mxu0 %v62
    %470 = vmatpush1.msra.mxu0 %v61
    %471 = vmatprep.subr.mxu0 %v59
    %472 = vmatpush1.msra.mxu0 %v58
    %473 = vmatprep.subr.mxu0 %v56
    %474 = vmatpush1.msra.mxu0 %v55
    %475 = vmatprep.subr.mxu0 %v53
    %476 = vmatpush1.msra.mxu0 %v52
    %477 = vmatprep.subr.mxu0 0.0
    %478 = vmatpush2.msra.mxu0 0.0
    %479 = vmatprep.subr.mxu0 0.0
    %480 = vmatpush2.msra.mxu0 0.0
    %481 = vmatprep.subr.mxu0 0.0
    %482 = vmatpush2.msra.mxu0 0.0
    %483 = vmatprep.subr.mxu0 0.0
    %484 = vmatpush2.msra.mxu0 0.0
    %485 = vmatprep.subr.mxu0 0.0
    %486 = vmatpush2.msra.mxu0 0.0
    %487 = vmatprep.subr.mxu0 0.0
    %488 = vmatpush2.msra.mxu0 0.0
    %489 = vmatprep.subr.mxu0 0.0
    %490 = vmatpush2.msra.mxu0 0.0
    %491 = vmatprep.subr.mxu0 0.0
    %492 = vmatpush2.msra.mxu0 0.0
    %493 = vmatprep.subr.mxu0 0.0
    %494 = vmatpush2.msra.mxu0 0.0
    %495 = vmatprep.subr.mxu0 0.0
    %496 = vmatpush2.msra.mxu0 0.0
    %497 = vmatprep.subr.mxu0 0.0
    %498 = vmatpush2.msra.mxu0 0.0
    %499 = vmatprep.subr.mxu0 0.0
    %500 = vmatpush2.msra.mxu0 0.0
    %501 = vmatprep.subr.mxu0 0.0
    %502 = vmatpush2.msra.mxu0 0.0
    %503 = vmatprep.subr.mxu0 0.0
    %504 = vmatpush2.msra.mxu0 0.0
    %505 = vmatprep.subr.mxu0 0.0
    %506 = vmatpush2.msra.mxu0 0.0
    %507 = vmatprep.subr.mxu0 0.0
    %508 = vmatpush2.msra.mxu0 0.0
    %509 = vmatprep.mubr.f32.mxu0 0.0
    %510 = vmatmul.mubr.f32.gmra.mxu0 %v438
    %v511 = vpop.f32.mrf.mxu0
    %v512 = vadd.f32 0.0, %v511
    %v513 = vpop.f32.mrf.mxu0
    %v514 = vadd.f32 0.0, %v513
    %515 = vdwg.mxu0
    %516 = vmatprep.subr.mxu0 0.0
    %517 = vmatpush1.msra.mxu0 %v99
    %518 = vmatprep.subr.mxu0 0.0
    %519 = vmatpush1.msra.mxu0 %v96
    %520 = vmatprep.subr.mxu0 0.0
    %521 = vmatpush1.msra.mxu0 %v93
    %522 = vmatprep.subr.mxu0 0.0
    %523 = vmatpush1.msra.mxu0 %v90
    %524 = vmatprep.subr.mxu0 0.0
    %525 = vmatpush1.msra.mxu0 %v87
    %526 = vmatprep.subr.mxu0 0.0
    %527 = vmatpush1.msra.mxu0 %v84
    %528 = vmatprep.subr.mxu0 0.0
    %529 = vmatpush1.msra.mxu0 %v81
    %530 = vmatprep.subr.mxu0 0.0
    %531 = vmatpush1.msra.mxu0 %v78
    %532 = vmatprep.subr.mxu0 0.0
    %533 = vmatpush1.msra.mxu0 %v75
    %534 = vmatprep.subr.mxu0 0.0
    %535 = vmatpush1.msra.mxu0 %v72
    %536 = vmatprep.subr.mxu0 0.0
    %537 = vmatpush1.msra.mxu0 %v69
    %538 = vmatprep.subr.mxu0 0.0
    %539 = vmatpush1.msra.mxu0 %v66
    %540 = vmatprep.subr.mxu0 0.0
    %541 = vmatpush1.msra.mxu0 %v63
    %542 = vmatprep.subr.mxu0 0.0
    %543 = vmatpush1.msra.mxu0 %v60
    %544 = vmatprep.subr.mxu0 0.0
    %545 = vmatpush1.msra.mxu0 %v57
    %546 = vmatprep.subr.mxu0 0.0
    %547 = vmatpush1.msra.mxu0 %v54
    %548 = vmatprep.subr.mxu0 0.0
    %549 = vmatpush2.msra.mxu0 0.0
    %550 = vmatprep.subr.mxu0 0.0
    %551 = vmatpush2.msra.mxu0 0.0
    %552 = vmatprep.subr.mxu0 0.0
    %553 = vmatpush2.msra.mxu0 0.0
    %554 = vmatprep.subr.mxu0 0.0
    %555 = vmatpush2.msra.mxu0 0.0
    %556 = vmatprep.subr.mxu0 0.0
    %557 = vmatpush2.msra.mxu0 0.0
    %558 = vmatprep.subr.mxu0 0.0
    %559 = vmatpush2.msra.mxu0 0.0
    %560 = vmatprep.subr.mxu0 0.0
    %561 = vmatpush2.msra.mxu0 0.0
    %562 = vmatprep.subr.mxu0 0.0
    %563 = vmatpush2.msra.mxu0 0.0
    %564 = vmatprep.subr.mxu0 0.0
    %565 = vmatpush2.msra.mxu0 0.0
    %566 = vmatprep.subr.mxu0 0.0
    %567 = vmatpush2.msra.mxu0 0.0
    %568 = vmatprep.subr.mxu0 0.0
    %569 = vmatpush2.msra.mxu0 0.0
    %570 = vmatprep.subr.mxu0 0.0
    %571 = vmatpush2.msra.mxu0 0.0
    %572 = vmatprep.subr.mxu0 0.0
    %573 = vmatpush2.msra.mxu0 0.0
    %574 = vmatprep.subr.mxu0 0.0
    %575 = vmatpush2.msra.mxu0 0.0
    %576 = vmatprep.subr.mxu0 0.0
    %577 = vmatpush2.msra.mxu0 0.0
    %578 = vmatprep.subr.mxu0 0.0
    %579 = vmatpush2.msra.mxu0 0.0
    %580 = vmatprep.mubr.f32.mxu0 0.0
    %581 = vmatmul.mubr.f32.gmra.mxu0 %v438
    %v582 = vpop.f32.mrf.mxu0
    %v583 = vadd.f32 0.0, %v582
    %v584 = vpop.f32.mrf.mxu0
    %585 = vdwg.mxu0
    %v586 = vadd.f32 %v442, %v512
    %v587 = vxor.u32 %v586, 2147483648
    %v588 = vmul.f32 %v587, 1.442695
    %v589 = vpow.pop %v588
    %v590 = vadd.f32 %v589, 1.0
    %v591 = vrcp.pop %v590
    %v592 = vmul.f32 1.0, %v591
    %v593 = vadd.f32 %v443, %v514
    %v594 = vxor.u32 %v593, 2147483648
    %v595 = vmul.f32 %v594, 1.442695
    %v596 = vpow.pop %v595
    %v597 = vadd.f32 %v596, 1.0
    %v598 = vrcp.pop %v597
    %v599 = vmul.f32 1.0, %v598
    %v600 = vadd.f32 %v583, %v105
    %v601 = vmul.f32 %v592, %v600
    %v602 = vadd.f32 %v444, %v601
    %v603 = vtanh.pop %v602
    %v604 = vsub.f32 %v438, %v603
    %v605 = vmul.f32 %v599, %v604
    %v606 = vadd.f32 %v603, %v605
    %s607 = scalar_lea.vmem [#allocation8], 16
    %608 = vst [vmem:[%s607] sm:$0xff] %v606
    %s609 = scalar_lea.vmem [#allocation3], 72
    %v610 = vld [vmem:[%s609] sm:$0xff]
    %v611 = vld [vmem:[%s609 + $0x8] sm:$0xff]
    %v612 = vld [vmem:[%s609 + $0x10] sm:$0xff]
    %613 = vmatprep.subr.mxu0 %v98
    %614 = vmatpush1.msra.mxu0 %v97
    %615 = vmatprep.subr.mxu0 %v95
    %616 = vmatpush1.msra.mxu0 %v94
    %617 = vmatprep.subr.mxu0 %v92
    %618 = vmatpush1.msra.mxu0 %v91
    %619 = vmatprep.subr.mxu0 %v89
    %620 = vmatpush1.msra.mxu0 %v88
    %621 = vmatprep.subr.mxu0 %v86
    %622 = vmatpush1.msra.mxu0 %v85
    %623 = vmatprep.subr.mxu0 %v83
    %624 = vmatpush1.msra.mxu0 %v82
    %625 = vmatprep.subr.mxu0 %v80
    %626 = vmatpush1.msra.mxu0 %v79
    %627 = vmatprep.subr.mxu0 %v77
    %628 = vmatpush1.msra.mxu0 %v76
    %629 = vmatprep.subr.mxu0 %v74
    %630 = vmatpush1.msra.mxu0 %v73
    %631 = vmatprep.subr.mxu0 %v71
    %632 = vmatpush1.msra.mxu0 %v70
    %633 = vmatprep.subr.mxu0 %v68
    %634 = vmatpush1.msra.mxu0 %v67
    %635 = vmatprep.subr.mxu0 %v65
    %636 = vmatpush1.msra.mxu0 %v64
    %637 = vmatprep.subr.mxu0 %v62
    %638 = vmatpush1.msra.mxu0 %v61
    %639 = vmatprep.subr.mxu0 %v59
    %640 = vmatpush1.msra.mxu0 %v58
    %641 = vmatprep.subr.mxu0 %v56
    %642 = vmatpush1.msra.mxu0 %v55
    %643 = vmatprep.subr.mxu0 %v53
    %644 = vmatpush1.msra.mxu0 %v52
    %645 = vmatprep.subr.mxu0 0.0
    %646 = vmatpush2.msra.mxu0 0.0
    %647 = vmatprep.subr.mxu0 0.0
    %648 = vmatpush2.msra.mxu0 0.0
    %649 = vmatprep.subr.mxu0 0.0
    %650 = vmatpush2.msra.mxu0 0.0
    %651 = vmatprep.subr.mxu0 0.0
    %652 = vmatpush2.msra.mxu0 0.0
    %653 = vmatprep.subr.mxu0 0.0
    %654 = vmatpush2.msra.mxu0 0.0
    %655 = vmatprep.subr.mxu0 0.0
    %656 = vmatpush2.msra.mxu0 0.0
    %657 = vmatprep.subr.mxu0 0.0
    %658 = vmatpush2.msra.mxu0 0.0
    %659 = vmatprep.subr.mxu0 0.0
    %660 = vmatpush2.msra.mxu0 0.0
    %661 = vmatprep.subr.mxu0 0.0
    %662 = vmatpush2.msra.mxu0 0.0
    %663 = vmatprep.subr.mxu0 0.0
    %664 = vmatpush2.msra.mxu0 0.0
    %665 = vmatprep.subr.mxu0 0.0
    %666 = vmatpush2.msra.mxu0 0.0
    %667 = vmatprep.subr.mxu0 0.0
    %668 = vmatpush2.msra.mxu0 0.0
    %669 = vmatprep.subr.mxu0 0.0
    %670 = vmatpush2.msra.mxu0 0.0
    %671 = vmatprep.subr.mxu0 0.0
    %672 = vmatpush2.msra.mxu0 0.0
    %673 = vmatprep.subr.mxu0 0.0
    %674 = vmatpush2.msra.mxu0 0.0
    %675 = vmatprep.subr.mxu0 0.0
    %676 = vmatpush2.msra.mxu0 0.0
    %677 = vmatprep.mubr.f32.mxu0 0.0
    %678 = vmatmul.mubr.f32.gmra.mxu0 %v606
    %v679 = vpop.f32.mrf.mxu0
    %v680 = vadd.f32 0.0, %v679
    %v681 = vpop.f32.mrf.mxu0
    %v682 = vadd.f32 0.0, %v681
    %683 = vdwg.mxu0
    %684 = vmatprep.subr.mxu0 0.0
    %685 = vmatpush1.msra.mxu0 %v99
    %686 = vmatprep.subr.mxu0 0.0
    %687 = vmatpush1.msra.mxu0 %v96
    %688 = vmatprep.subr.mxu0 0.0
    %689 = vmatpush1.msra.mxu0 %v93
    %690 = vmatprep.subr.mxu0 0.0
    %691 = vmatpush1.msra.mxu0 %v90
    %692 = vmatprep.subr.mxu0 0.0
    %693 = vmatpush1.msra.mxu0 %v87
    %694 = vmatprep.subr.mxu0 0.0
    %695 = vmatpush1.msra.mxu0 %v84
    %696 = vmatprep.subr.mxu0 0.0
    %697 = vmatpush1.msra.mxu0 %v81
    %698 = vmatprep.subr.mxu0 0.0
    %699 = vmatpush1.msra.mxu0 %v78
    %700 = vmatprep.subr.mxu0 0.0
    %701 = vmatpush1.msra.mxu0 %v75
    %702 = vmatprep.subr.mxu0 0.0
    %703 = vmatpush1.msra.mxu0 %v72
    %704 = vmatprep.subr.mxu0 0.0
    %705 = vmatpush1.msra.mxu0 %v69
    %706 = vmatprep.subr.mxu0 0.0
    %707 = vmatpush1.msra.mxu0 %v66
    %708 = vmatprep.subr.mxu0 0.0
    %709 = vmatpush1.msra.mxu0 %v63
    %710 = vmatprep.subr.mxu0 0.0
    %711 = vmatpush1.msra.mxu0 %v60
    %712 = vmatprep.subr.mxu0 0.0
    %713 = vmatpush1.msra.mxu0 %v57
    %714 = vmatprep.subr.mxu0 0.0
    %715 = vmatpush1.msra.mxu0 %v54
    %716 = vmatprep.subr.mxu0 0.0
    %717 = vmatpush2.msra.mxu0 0.0
    %718 = vmatprep.subr.mxu0 0.0
    %719 = vmatpush2.msra.mxu0 0.0
    %720 = vmatprep.subr.mxu0 0.0
    %721 = vmatpush2.msra.mxu0 0.0
    %722 = vmatprep.subr.mxu0 0.0
    %723 = vmatpush2.msra.mxu0 0.0
    %724 = vmatprep.subr.mxu0 0.0
    %725 = vmatpush2.msra.mxu0 0.0
    %726 = vmatprep.subr.mxu0 0.0
    %727 = vmatpush2.msra.mxu0 0.0
    %728 = vmatprep.subr.mxu0 0.0
    %729 = vmatpush2.msra.mxu0 0.0
    %730 = vmatprep.subr.mxu0 0.0
    %731 = vmatpush2.msra.mxu0 0.0
    %732 = vmatprep.subr.mxu0 0.0
    %733 = vmatpush2.msra.mxu0 0.0
    %734 = vmatprep.subr.mxu0 0.0
    %735 = vmatpush2.msra.mxu0 0.0
    %736 = vmatprep.subr.mxu0 0.0
    %737 = vmatpush2.msra.mxu0 0.0
    %738 = vmatprep.subr.mxu0 0.0
    %739 = vmatpush2.msra.mxu0 0.0
    %740 = vmatprep.subr.mxu0 0.0
    %741 = vmatpush2.msra.mxu0 0.0
    %742 = vmatprep.subr.mxu0 0.0
    %743 = vmatpush2.msra.mxu0 0.0
    %744 = vmatprep.subr.mxu0 0.0
    %745 = vmatpush2.msra.mxu0 0.0
    %746 = vmatprep.subr.mxu0 0.0
    %747 = vmatpush2.msra.mxu0 0.0
    %748 = vmatprep.mubr.f32.mxu0 0.0
    %749 = vmatmul.mubr.f32.gmra.mxu0 %v606
    %v750 = vpop.f32.mrf.mxu0
    %v751 = vadd.f32 0.0, %v750
    %v752 = vpop.f32.mrf.mxu0
    %753 = vdwg.mxu0
    %v754 = vadd.f32 %v610, %v680
    %v755 = vxor.u32 %v754, 2147483648
    %v756 = vmul.f32 %v755, 1.442695
    %v757 = vpow.pop %v756
    %v758 = vadd.f32 %v757, 1.0
    %v759 = vrcp.pop %v758
    %v760 = vmul.f32 1.0, %v759
    %v761 = vadd.f32 %v611, %v682
    %v762 = vxor.u32 %v761, 2147483648
    %v763 = vmul.f32 %v762, 1.442695
    %v764 = vpow.pop %v763
    %v765 = vadd.f32 %v764, 1.0
    %v766 = vrcp.pop %v765
    %v767 = vmul.f32 1.0, %v766
    %v768 = vadd.f32 %v751, %v105
    %v769 = vmul.f32 %v760, %v768
    %v770 = vadd.f32 %v612, %v769
    %v771 = vtanh.pop %v770
    %v772 = vsub.f32 %v606, %v771
    %v773 = vmul.f32 %v767, %v772
    %v774 = vadd.f32 %v771, %v773
    %s775 = scalar_lea.vmem [#allocation8], 24
    %776 = vst [vmem:[%s775] sm:$0xff] %v774
    %s777 = scalar_lea.vmem [#allocation3], 96
    %v778 = vld [vmem:[%s777] sm:$0xff]
    %v779 = vld [vmem:[%s777 + $0x8] sm:$0xff]
    %v780 = vld [vmem:[%s777 + $0x10] sm:$0xff]
    %781 = vmatprep.subr.mxu0 %v98
    %782 = vmatpush1.msra.mxu0 %v97
    %783 = vmatprep.subr.mxu0 %v95
    %784 = vmatpush1.msra.mxu0 %v94
    %785 = vmatprep.subr.mxu0 %v92
    %786 = vmatpush1.msra.mxu0 %v91
    %787 = vmatprep.subr.mxu0 %v89
    %788 = vmatpush1.msra.mxu0 %v88
    %789 = vmatprep.subr.mxu0 %v86
    %790 = vmatpush1.msra.mxu0 %v85
    %791 = vmatprep.subr.mxu0 %v83
    %792 = vmatpush1.msra.mxu0 %v82
    %793 = vmatprep.subr.mxu0 %v80
    %794 = vmatpush1.msra.mxu0 %v79
    %795 = vmatprep.subr.mxu0 %v77
    %796 = vmatpush1.msra.mxu0 %v76
    %797 = vmatprep.subr.mxu0 %v74
    %798 = vmatpush1.msra.mxu0 %v73
    %799 = vmatprep.subr.mxu0 %v71
    %800 = vmatpush1.msra.mxu0 %v70
    %801 = vmatprep.subr.mxu0 %v68
    %802 = vmatpush1.msra.mxu0 %v67
    %803 = vmatprep.subr.mxu0 %v65
    %804 = vmatpush1.msra.mxu0 %v64
    %805 = vmatprep.subr.mxu0 %v62
    %806 = vmatpush1.msra.mxu0 %v61
    %807 = vmatprep.subr.mxu0 %v59
    %808 = vmatpush1.msra.mxu0 %v58
    %809 = vmatprep.subr.mxu0 %v56
    %810 = vmatpush1.msra.mxu0 %v55
    %811 = vmatprep.subr.mxu0 %v53
    %812 = vmatpush1.msra.mxu0 %v52
    %813 = vmatprep.subr.mxu0 0.0
    %814 = vmatpush2.msra.mxu0 0.0
    %815 = vmatprep.subr.mxu0 0.0
    %816 = vmatpush2.msra.mxu0 0.0
    %817 = vmatprep.subr.mxu0 0.0
    %818 = vmatpush2.msra.mxu0 0.0
    %819 = vmatprep.subr.mxu0 0.0
    %820 = vmatpush2.msra.mxu0 0.0
    %821 = vmatprep.subr.mxu0 0.0
    %822 = vmatpush2.msra.mxu0 0.0
    %823 = vmatprep.subr.mxu0 0.0
    %824 = vmatpush2.msra.mxu0 0.0
    %825 = vmatprep.subr.mxu0 0.0
    %826 = vmatpush2.msra.mxu0 0.0
    %827 = vmatprep.subr.mxu0 0.0
    %828 = vmatpush2.msra.mxu0 0.0
    %829 = vmatprep.subr.mxu0 0.0
    %830 = vmatpush2.msra.mxu0 0.0
    %831 = vmatprep.subr.mxu0 0.0
    %832 = vmatpush2.msra.mxu0 0.0
    %833 = vmatprep.subr.mxu0 0.0
    %834 = vmatpush2.msra.mxu0 0.0
    %835 = vmatprep.subr.mxu0 0.0
    %836 = vmatpush2.msra.mxu0 0.0
    %837 = vmatprep.subr.mxu0 0.0
    %838 = vmatpush2.msra.mxu0 0.0
    %839 = vmatprep.subr.mxu0 0.0
    %840 = vmatpush2.msra.mxu0 0.0
    %841 = vmatprep.subr.mxu0 0.0
    %842 = vmatpush2.msra.mxu0 0.0
    %843 = vmatprep.subr.mxu0 0.0
    %844 = vmatpush2.msra.mxu0 0.0
    %845 = vmatprep.mubr.f32.mxu0 0.0
    %846 = vmatmul.mubr.f32.gmra.mxu0 %v774
    %v847 = vpop.f32.mrf.mxu0
    %v848 = vadd.f32 0.0, %v847
    %v849 = vpop.f32.mrf.mxu0
    %v850 = vadd.f32 0.0, %v849
    %851 = vdwg.mxu0
    %852 = vmatprep.subr.mxu0 0.0
    %853 = vmatpush1.msra.mxu0 %v99
    %854 = vmatprep.subr.mxu0 0.0
    %855 = vmatpush1.msra.mxu0 %v96
    %856 = vmatprep.subr.mxu0 0.0
    %857 = vmatpush1.msra.mxu0 %v93
    %858 = vmatprep.subr.mxu0 0.0
    %859 = vmatpush1.msra.mxu0 %v90
    %860 = vmatprep.subr.mxu0 0.0
    %861 = vmatpush1.msra.mxu0 %v87
    %862 = vmatprep.subr.mxu0 0.0
    %863 = vmatpush1.msra.mxu0 %v84
    %864 = vmatprep.subr.mxu0 0.0
    %865 = vmatpush1.msra.mxu0 %v81
    %866 = vmatprep.subr.mxu0 0.0
    %867 = vmatpush1.msra.mxu0 %v78
    %868 = vmatprep.subr.mxu0 0.0
    %869 = vmatpush1.msra.mxu0 %v75
    %870 = vmatprep.subr.mxu0 0.0
    %871 = vmatpush1.msra.mxu0 %v72
    %872 = vmatprep.subr.mxu0 0.0
    %873 = vmatpush1.msra.mxu0 %v69
    %874 = vmatprep.subr.mxu0 0.0
    %875 = vmatpush1.msra.mxu0 %v66
    %876 = vmatprep.subr.mxu0 0.0
    %877 = vmatpush1.msra.mxu0 %v63
    %878 = vmatprep.subr.mxu0 0.0
    %879 = vmatpush1.msra.mxu0 %v60
    %880 = vmatprep.subr.mxu0 0.0
    %881 = vmatpush1.msra.mxu0 %v57
    %882 = vmatprep.subr.mxu0 0.0
    %883 = vmatpush1.msra.mxu0 %v54
    %884 = vmatprep.subr.mxu0 0.0
    %885 = vmatpush2.msra.mxu0 0.0
    %886 = vmatprep.subr.mxu0 0.0
    %887 = vmatpush2.msra.mxu0 0.0
    %888 = vmatprep.subr.mxu0 0.0
    %889 = vmatpush2.msra.mxu0 0.0
    %890 = vmatprep.subr.mxu0 0.0
    %891 = vmatpush2.msra.mxu0 0.0
    %892 = vmatprep.subr.mxu0 0.0
    %893 = vmatpush2.msra.mxu0 0.0
    %894 = vmatprep.subr.mxu0 0.0
    %895 = vmatpush2.msra.mxu0 0.0
    %896 = vmatprep.subr.mxu0 0.0
    %897 = vmatpush2.msra.mxu0 0.0
    %898 = vmatprep.subr.mxu0 0.0
    %899 = vmatpush2.msra.mxu0 0.0
    %900 = vmatprep.subr.mxu0 0.0
    %901 = vmatpush2.msra.mxu0 0.0
    %902 = vmatprep.subr.mxu0 0.0
    %903 = vmatpush2.msra.mxu0 0.0
    %904 = vmatprep.subr.mxu0 0.0
    %905 = vmatpush2.msra.mxu0 0.0
    %906 = vmatprep.subr.mxu0 0.0
    %907 = vmatpush2.msra.mxu0 0.0
    %908 = vmatprep.subr.mxu0 0.0
    %909 = vmatpush2.msra.mxu0 0.0
    %910 = vmatprep.subr.mxu0 0.0
    %911 = vmatpush2.msra.mxu0 0.0
    %912 = vmatprep.subr.mxu0 0.0
    %913 = vmatpush2.msra.mxu0 0.0
    %914 = vmatprep.subr.mxu0 0.0
    %915 = vmatpush2.msra.mxu0 0.0
    %916 = vmatprep.mubr.f32.mxu0 0.0
    %917 = vmatmul.mubr.f32.gmra.mxu0 %v774
    %v918 = vpop.f32.mrf.mxu0
    %v919 = vadd.f32 0.0, %v918
    %v920 = vpop.f32.mrf.mxu0
    %921 = vdwg.mxu0
    %v922 = vadd.f32 %v778, %v848
    %v923 = vxor.u32 %v922, 2147483648
    %v924 = vmul.f32 %v923, 1.442695
    %v925 = vpow.pop %v924
    %v926 = vadd.f32 %v925, 1.0
    %v927 = vrcp.pop %v926
    %v928 = vmul.f32 1.0, %v927
    %v929 = vadd.f32 %v779, %v850
    %v930 = vxor.u32 %v929, 2147483648
    %v931 = vmul.f32 %v930, 1.442695
    %v932 = vpow.pop %v931
    %v933 = vadd.f32 %v932, 1.0
    %v934 = vrcp.pop %v933
    %v935 = vmul.f32 1.0, %v934
    %v936 = vadd.f32 %v919, %v105
    %v937 = vmul.f32 %v928, %v936
    %v938 = vadd.f32 %v780, %v937
    %v939 = vtanh.pop %v938
    %v940 = vsub.f32 %v774, %v939
    %v941 = vmul.f32 %v935, %v940
    %v942 = vadd.f32 %v939, %v941
    %s943 = scalar_lea.vmem [#allocation8], 32
    %944 = vst [vmem:[%s943] sm:$0xff] %v942
    %s945 = scalar_lea.vmem [#allocation3], 120
    %v946 = vld [vmem:[%s945] sm:$0xff]
    %v947 = vld [vmem:[%s945 + $0x8] sm:$0xff]
    %v948 = vld [vmem:[%s945 + $0x10] sm:$0xff]
    %949 = vmatprep.subr.mxu0 %v98
    %950 = vmatpush1.msra.mxu0 %v97
    %951 = vmatprep.subr.mxu0 %v95
    %952 = vmatpush1.msra.mxu0 %v94
    %953 = vmatprep.subr.mxu0 %v92
    %954 = vmatpush1.msra.mxu0 %v91
    %955 = vmatprep.subr.mxu0 %v89
    %956 = vmatpush1.msra.mxu0 %v88
    %957 = vmatprep.subr.mxu0 %v86
    %958 = vmatpush1.msra.mxu0 %v85
    %959 = vmatprep.subr.mxu0 %v83
    %960 = vmatpush1.msra.mxu0 %v82
    %961 = vmatprep.subr.mxu0 %v80
    %962 = vmatpush1.msra.mxu0 %v79
    %963 = vmatprep.subr.mxu0 %v77
    %964 = vmatpush1.msra.mxu0 %v76
    %965 = vmatprep.subr.mxu0 %v74
    %966 = vmatpush1.msra.mxu0 %v73
    %967 = vmatprep.subr.mxu0 %v71
    %968 = vmatpush1.msra.mxu0 %v70
    %969 = vmatprep.subr.mxu0 %v68
    %970 = vmatpush1.msra.mxu0 %v67
    %971 = vmatprep.subr.mxu0 %v65
    %972 = vmatpush1.msra.mxu0 %v64
    %973 = vmatprep.subr.mxu0 %v62
    %974 = vmatpush1.msra.mxu0 %v61
    %975 = vmatprep.subr.mxu0 %v59
    %976 = vmatpush1.msra.mxu0 %v58
    %977 = vmatprep.subr.mxu0 %v56
    %978 = vmatpush1.msra.mxu0 %v55
    %979 = vmatprep.subr.mxu0 %v53
    %980 = vmatpush1.msra.mxu0 %v52
    %981 = vmatprep.subr.mxu0 0.0
    %982 = vmatpush2.msra.mxu0 0.0
    %983 = vmatprep.subr.mxu0 0.0
    %984 = vmatpush2.msra.mxu0 0.0
    %985 = vmatprep.subr.mxu0 0.0
    %986 = vmatpush2.msra.mxu0 0.0
    %987 = vmatprep.subr.mxu0 0.0
    %988 = vmatpush2.msra.mxu0 0.0
    %989 = vmatprep.subr.mxu0 0.0
    %990 = vmatpush2.msra.mxu0 0.0
    %991 = vmatprep.subr.mxu0 0.0
    %992 = vmatpush2.msra.mxu0 0.0
    %993 = vmatprep.subr.mxu0 0.0
    %994 = vmatpush2.msra.mxu0 0.0
    %995 = vmatprep.subr.mxu0 0.0
    %996 = vmatpush2.msra.mxu0 0.0
    %997 = vmatprep.subr.mxu0 0.0
    %998 = vmatpush2.msra.mxu0 0.0
    %999 = vmatprep.subr.mxu0 0.0
    %1000 = vmatpush2.msra.mxu0 0.0
    %1001 = vmatprep.subr.mxu0 0.0
    %1002 = vmatpush2.msra.mxu0 0.0
    %1003 = vmatprep.subr.mxu0 0.0
    %1004 = vmatpush2.msra.mxu0 0.0
    %1005 = vmatprep.subr.mxu0 0.0
    %1006 = vmatpush2.msra.mxu0 0.0
    %1007 = vmatprep.subr.mxu0 0.0
    %1008 = vmatpush2.msra.mxu0 0.0
    %1009 = vmatprep.subr.mxu0 0.0
    %1010 = vmatpush2.msra.mxu0 0.0
    %1011 = vmatprep.subr.mxu0 0.0
    %1012 = vmatpush2.msra.mxu0 0.0
    %1013 = vmatprep.mubr.f32.mxu0 0.0
    %1014 = vmatmul.mubr.f32.gmra.mxu0 %v942
    %v1015 = vpop.f32.mrf.mxu0
    %v1016 = vadd.f32 0.0, %v1015
    %v1017 = vpop.f32.mrf.mxu0
    %v1018 = vadd.f32 0.0, %v1017
    %1019 = vdwg.mxu0
    %1020 = vmatprep.subr.mxu0 0.0
    %1021 = vmatpush1.msra.mxu0 %v99
    %1022 = vmatprep.subr.mxu0 0.0
    %1023 = vmatpush1.msra.mxu0 %v96
    %1024 = vmatprep.subr.mxu0 0.0
    %1025 = vmatpush1.msra.mxu0 %v93
    %1026 = vmatprep.subr.mxu0 0.0
    %1027 = vmatpush1.msra.mxu0 %v90
    %1028 = vmatprep.subr.mxu0 0.0
    %1029 = vmatpush1.msra.mxu0 %v87
    %1030 = vmatprep.subr.mxu0 0.0
    %1031 = vmatpush1.msra.mxu0 %v84
    %1032 = vmatprep.subr.mxu0 0.0
    %1033 = vmatpush1.msra.mxu0 %v81
    %1034 = vmatprep.subr.mxu0 0.0
    %1035 = vmatpush1.msra.mxu0 %v78
    %1036 = vmatprep.subr.mxu0 0.0
    %1037 = vmatpush1.msra.mxu0 %v75
    %1038 = vmatprep.subr.mxu0 0.0
    %1039 = vmatpush1.msra.mxu0 %v72
    %1040 = vmatprep.subr.mxu0 0.0
    %1041 = vmatpush1.msra.mxu0 %v69
    %1042 = vmatprep.subr.mxu0 0.0
    %1043 = vmatpush1.msra.mxu0 %v66
    %1044 = vmatprep.subr.mxu0 0.0
    %1045 = vmatpush1.msra.mxu0 %v63
    %1046 = vmatprep.subr.mxu0 0.0
    %1047 = vmatpush1.msra.mxu0 %v60
    %1048 = vmatprep.subr.mxu0 0.0
    %1049 = vmatpush1.msra.mxu0 %v57
    %1050 = vmatprep.subr.mxu0 0.0
    %1051 = vmatpush1.msra.mxu0 %v54
    %1052 = vmatprep.subr.mxu0 0.0
    %1053 = vmatpush2.msra.mxu0 0.0
    %1054 = vmatprep.subr.mxu0 0.0
    %1055 = vmatpush2.msra.mxu0 0.0
    %1056 = vmatprep.subr.mxu0 0.0
    %1057 = vmatpush2.msra.mxu0 0.0
    %1058 = vmatprep.subr.mxu0 0.0
    %1059 = vmatpush2.msra.mxu0 0.0
    %1060 = vmatprep.subr.mxu0 0.0
    %1061 = vmatpush2.msra.mxu0 0.0
    %1062 = vmatprep.subr.mxu0 0.0
    %1063 = vmatpush2.msra.mxu0 0.0
    %1064 = vmatprep.subr.mxu0 0.0
    %1065 = vmatpush2.msra.mxu0 0.0
    %1066 = vmatprep.subr.mxu0 0.0
    %1067 = vmatpush2.msra.mxu0 0.0
    %1068 = vmatprep.subr.mxu0 0.0
    %1069 = vmatpush2.msra.mxu0 0.0
    %1070 = vmatprep.subr.mxu0 0.0
    %1071 = vmatpush2.msra.mxu0 0.0
    %1072 = vmatprep.subr.mxu0 0.0
    %1073 = vmatpush2.msra.mxu0 0.0
    %1074 = vmatprep.subr.mxu0 0.0
    %1075 = vmatpush2.msra.mxu0 0.0
    %1076 = vmatprep.subr.mxu0 0.0
    %1077 = vmatpush2.msra.mxu0 0.0
    %1078 = vmatprep.subr.mxu0 0.0
    %1079 = vmatpush2.msra.mxu0 0.0
    %1080 = vmatprep.subr.mxu0 0.0
    %1081 = vmatpush2.msra.mxu0 0.0
    %1082 = vmatprep.subr.mxu0 0.0
    %1083 = vmatpush2.msra.mxu0 0.0
    %1084 = vmatprep.mubr.f32.mxu0 0.0
    %1085 = vmatmul.mubr.f32.gmra.mxu0 %v942
    %v1086 = vpop.f32.mrf.mxu0
    %v1087 = vadd.f32 0.0, %v1086
    %v1088 = vpop.f32.mrf.mxu0
    %1089 = vdwg.mxu0
    %v1090 = vadd.f32 %v946, %v1016
    %v1091 = vxor.u32 %v1090, 2147483648
    %v1092 = vmul.f32 %v1091, 1.442695
    %v1093 = vpow.pop %v1092
    %v1094 = vadd.f32 %v1093, 1.0
    %v1095 = vrcp.pop %v1094
    %v1096 = vmul.f32 1.0, %v1095
    %v1097 = vadd.f32 %v947, %v1018
    %v1098 = vxor.u32 %v1097, 2147483648
    %v1099 = vmul.f32 %v1098, 1.442695
    %v1100 = vpow.pop %v1099
    %v1101 = vadd.f32 %v1100, 1.0
    %v1102 = vrcp.pop %v1101
    %v1103 = vmul.f32 1.0, %v1102
    %v1104 = vadd.f32 %v1087, %v105
    %v1105 = vmul.f32 %v1096, %v1104
    %v1106 = vadd.f32 %v948, %v1105
    %v1107 = vtanh.pop %v1106
    %v1108 = vsub.f32 %v942, %v1107
    %v1109 = vmul.f32 %v1103, %v1108
    %v1110 = vadd.f32 %v1107, %v1109
    %s1111 = scalar_lea.vmem [#allocation8], 40
    %1112 = vst [vmem:[%s1111] sm:$0xff] %v1110
    %s1113 = scalar_lea.vmem [#allocation3], 144
    %v1114 = vld [vmem:[%s1113] sm:$0xff]
    %v1115 = vld [vmem:[%s1113 + $0x8] sm:$0xff]
    %v1116 = vld [vmem:[%s1113 + $0x10] sm:$0xff]
    %1117 = vmatprep.subr.mxu0 %v98
    %1118 = vmatpush1.msra.mxu0 %v97
    %1119 = vmatprep.subr.mxu0 %v95
    %1120 = vmatpush1.msra.mxu0 %v94
    %1121 = vmatprep.subr.mxu0 %v92
    %1122 = vmatpush1.msra.mxu0 %v91
    %1123 = vmatprep.subr.mxu0 %v89
    %1124 = vmatpush1.msra.mxu0 %v88
    %1125 = vmatprep.subr.mxu0 %v86
    %1126 = vmatpush1.msra.mxu0 %v85
    %1127 = vmatprep.subr.mxu0 %v83
    %1128 = vmatpush1.msra.mxu0 %v82
    %1129 = vmatprep.subr.mxu0 %v80
    %1130 = vmatpush1.msra.mxu0 %v79
    %1131 = vmatprep.subr.mxu0 %v77
    %1132 = vmatpush1.msra.mxu0 %v76
    %1133 = vmatprep.subr.mxu0 %v74
    %1134 = vmatpush1.msra.mxu0 %v73
    %1135 = vmatprep.subr.mxu0 %v71
    %1136 = vmatpush1.msra.mxu0 %v70
    %1137 = vmatprep.subr.mxu0 %v68
    %1138 = vmatpush1.msra.mxu0 %v67
    %1139 = vmatprep.subr.mxu0 %v65
    %1140 = vmatpush1.msra.mxu0 %v64
    %1141 = vmatprep.subr.mxu0 %v62
    %1142 = vmatpush1.msra.mxu0 %v61
    %1143 = vmatprep.subr.mxu0 %v59
    %1144 = vmatpush1.msra.mxu0 %v58
    %1145 = vmatprep.subr.mxu0 %v56
    %1146 = vmatpush1.msra.mxu0 %v55
    %1147 = vmatprep.subr.mxu0 %v53
    %1148 = vmatpush1.msra.mxu0 %v52
    %1149 = vmatprep.subr.mxu0 0.0
    %1150 = vmatpush2.msra.mxu0 0.0
    %1151 = vmatprep.subr.mxu0 0.0
    %1152 = vmatpush2.msra.mxu0 0.0
    %1153 = vmatprep.subr.mxu0 0.0
    %1154 = vmatpush2.msra.mxu0 0.0
    %1155 = vmatprep.subr.mxu0 0.0
    %1156 = vmatpush2.msra.mxu0 0.0
    %1157 = vmatprep.subr.mxu0 0.0
    %1158 = vmatpush2.msra.mxu0 0.0
    %1159 = vmatprep.subr.mxu0 0.0
    %1160 = vmatpush2.msra.mxu0 0.0
    %1161 = vmatprep.subr.mxu0 0.0
    %1162 = vmatpush2.msra.mxu0 0.0
    %1163 = vmatprep.subr.mxu0 0.0
    %1164 = vmatpush2.msra.mxu0 0.0
    %1165 = vmatprep.subr.mxu0 0.0
    %1166 = vmatpush2.msra.mxu0 0.0
    %1167 = vmatprep.subr.mxu0 0.0
    %1168 = vmatpush2.msra.mxu0 0.0
    %1169 = vmatprep.subr.mxu0 0.0
    %1170 = vmatpush2.msra.mxu0 0.0
    %1171 = vmatprep.subr.mxu0 0.0
    %1172 = vmatpush2.msra.mxu0 0.0
    %1173 = vmatprep.subr.mxu0 0.0
    %1174 = vmatpush2.msra.mxu0 0.0
    %1175 = vmatprep.subr.mxu0 0.0
    %1176 = vmatpush2.msra.mxu0 0.0
    %1177 = vmatprep.subr.mxu0 0.0
    %1178 = vmatpush2.msra.mxu0 0.0
    %1179 = vmatprep.subr.mxu0 0.0
    %1180 = vmatpush2.msra.mxu0 0.0
    %1181 = vmatprep.mubr.f32.mxu0 0.0
    %1182 = vmatmul.mubr.f32.gmra.mxu0 %v1110
    %v1183 = vpop.f32.mrf.mxu0
    %v1184 = vadd.f32 0.0, %v1183
    %v1185 = vpop.f32.mrf.mxu0
    %v1186 = vadd.f32 0.0, %v1185
    %1187 = vdwg.mxu0
    %1188 = vmatprep.subr.mxu0 0.0
    %1189 = vmatpush1.msra.mxu0 %v99
    %1190 = vmatprep.subr.mxu0 0.0
    %1191 = vmatpush1.msra.mxu0 %v96
    %1192 = vmatprep.subr.mxu0 0.0
    %1193 = vmatpush1.msra.mxu0 %v93
    %1194 = vmatprep.subr.mxu0 0.0
    %1195 = vmatpush1.msra.mxu0 %v90
    %1196 = vmatprep.subr.mxu0 0.0
    %1197 = vmatpush1.msra.mxu0 %v87
    %1198 = vmatprep.subr.mxu0 0.0
    %1199 = vmatpush1.msra.mxu0 %v84
    %1200 = vmatprep.subr.mxu0 0.0
    %1201 = vmatpush1.msra.mxu0 %v81
    %1202 = vmatprep.subr.mxu0 0.0
    %1203 = vmatpush1.msra.mxu0 %v78
    %1204 = vmatprep.subr.mxu0 0.0
    %1205 = vmatpush1.msra.mxu0 %v75
    %1206 = vmatprep.subr.mxu0 0.0
    %1207 = vmatpush1.msra.mxu0 %v72
    %1208 = vmatprep.subr.mxu0 0.0
    %1209 = vmatpush1.msra.mxu0 %v69
    %1210 = vmatprep.subr.mxu0 0.0
    %1211 = vmatpush1.msra.mxu0 %v66
    %1212 = vmatprep.subr.mxu0 0.0
    %1213 = vmatpush1.msra.mxu0 %v63
    %1214 = vmatprep.subr.mxu0 0.0
    %1215 = vmatpush1.msra.mxu0 %v60
    %1216 = vmatprep.subr.mxu0 0.0
    %1217 = vmatpush1.msra.mxu0 %v57
    %1218 = vmatprep.subr.mxu0 0.0
    %1219 = vmatpush1.msra.mxu0 %v54
    %1220 = vmatprep.subr.mxu0 0.0
    %1221 = vmatpush2.msra.mxu0 0.0
    %1222 = vmatprep.subr.mxu0 0.0
    %1223 = vmatpush2.msra.mxu0 0.0
    %1224 = vmatprep.subr.mxu0 0.0
    %1225 = vmatpush2.msra.mxu0 0.0
    %1226 = vmatprep.subr.mxu0 0.0
    %1227 = vmatpush2.msra.mxu0 0.0
    %1228 = vmatprep.subr.mxu0 0.0
    %1229 = vmatpush2.msra.mxu0 0.0
    %1230 = vmatprep.subr.mxu0 0.0
    %1231 = vmatpush2.msra.mxu0 0.0
    %1232 = vmatprep.subr.mxu0 0.0
    %1233 = vmatpush2.msra.mxu0 0.0
    %1234 = vmatprep.subr.mxu0 0.0
    %1235 = vmatpush2.msra.mxu0 0.0
    %1236 = vmatprep.subr.mxu0 0.0
    %1237 = vmatpush2.msra.mxu0 0.0
    %1238 = vmatprep.subr.mxu0 0.0
    %1239 = vmatpush2.msra.mxu0 0.0
    %1240 = vmatprep.subr.mxu0 0.0
    %1241 = vmatpush2.msra.mxu0 0.0
    %1242 = vmatprep.subr.mxu0 0.0
    %1243 = vmatpush2.msra.mxu0 0.0
    %1244 = vmatprep.subr.mxu0 0.0
    %1245 = vmatpush2.msra.mxu0 0.0
    %1246 = vmatprep.subr.mxu0 0.0
    %1247 = vmatpush2.msra.mxu0 0.0
    %1248 = vmatprep.subr.mxu0 0.0
    %1249 = vmatpush2.msra.mxu0 0.0
    %1250 = vmatprep.subr.mxu0 0.0
    %1251 = vmatpush2.msra.mxu0 0.0
    %1252 = vmatprep.mubr.f32.mxu0 0.0
    %1253 = vmatmul.mubr.f32.gmra.mxu0 %v1110
    %v1254 = vpop.f32.mrf.mxu0
    %v1255 = vadd.f32 0.0, %v1254
    %v1256 = vpop.f32.mrf.mxu0
    %1257 = vdwg.mxu0
    %v1258 = vadd.f32 %v1114, %v1184
    %v1259 = vxor.u32 %v1258, 2147483648
    %v1260 = vmul.f32 %v1259, 1.442695
    %v1261 = vpow.pop %v1260
    %v1262 = vadd.f32 %v1261, 1.0
    %v1263 = vrcp.pop %v1262
    %v1264 = vmul.f32 1.0, %v1263
    %v1265 = vadd.f32 %v1115, %v1186
    %v1266 = vxor.u32 %v1265, 2147483648
    %v1267 = vmul.f32 %v1266, 1.442695
    %v1268 = vpow.pop %v1267
    %v1269 = vadd.f32 %v1268, 1.0
    %v1270 = vrcp.pop %v1269
    %v1271 = vmul.f32 1.0, %v1270
    %v1272 = vadd.f32 %v1255, %v105
    %v1273 = vmul.f32 %v1264, %v1272
    %v1274 = vadd.f32 %v1116, %v1273
    %v1275 = vtanh.pop %v1274
    %v1276 = vsub.f32 %v1110, %v1275
    %v1277 = vmul.f32 %v1271, %v1276
    %v1278 = vadd.f32 %v1275, %v1277
    %s1279 = scalar_lea.vmem [#allocation8], 48
    %1280 = vst [vmem:[%s1279] sm:$0xff] %v1278
    %s1281 = scalar_lea.vmem [#allocation3], 168
    %v1282 = vld [vmem:[%s1281] sm:$0xff]
    %v1283 = vld [vmem:[%s1281 + $0x8] sm:$0xff]
    %v1284 = vld [vmem:[%s1281 + $0x10] sm:$0xff]
    %1285 = vmatprep.subr.mxu0 %v98
    %1286 = vmatpush1.msra.mxu0 %v97
    %1287 = vmatprep.subr.mxu0 %v95
    %1288 = vmatpush1.msra.mxu0 %v94
    %1289 = vmatprep.subr.mxu0 %v92
    %1290 = vmatpush1.msra.mxu0 %v91
    %1291 = vmatprep.subr.mxu0 %v89
    %1292 = vmatpush1.msra.mxu0 %v88
    %1293 = vmatprep.subr.mxu0 %v86
    %1294 = vmatpush1.msra.mxu0 %v85
    %1295 = vmatprep.subr.mxu0 %v83
    %1296 = vmatpush1.msra.mxu0 %v82
    %1297 = vmatprep.subr.mxu0 %v80
    %1298 = vmatpush1.msra.mxu0 %v79
    %1299 = vmatprep.subr.mxu0 %v77
    %1300 = vmatpush1.msra.mxu0 %v76
    %1301 = vmatprep.subr.mxu0 %v74
    %1302 = vmatpush1.msra.mxu0 %v73
    %1303 = vmatprep.subr.mxu0 %v71
    %1304 = vmatpush1.msra.mxu0 %v70
    %1305 = vmatprep.subr.mxu0 %v68
    %1306 = vmatpush1.msra.mxu0 %v67
    %1307 = vmatprep.subr.mxu0 %v65
    %1308 = vmatpush1.msra.mxu0 %v64
    %1309 = vmatprep.subr.mxu0 %v62
    %1310 = vmatpush1.msra.mxu0 %v61
    %1311 = vmatprep.subr.mxu0 %v59
    %1312 = vmatpush1.msra.mxu0 %v58
    %1313 = vmatprep.subr.mxu0 %v56
    %1314 = vmatpush1.msra.mxu0 %v55
    %1315 = vmatprep.subr.mxu0 %v53
    %1316 = vmatpush1.msra.mxu0 %v52
    %1317 = vmatprep.subr.mxu0 0.0
    %1318 = vmatpush2.msra.mxu0 0.0
    %1319 = vmatprep.subr.mxu0 0.0
    %1320 = vmatpush2.msra.mxu0 0.0
    %1321 = vmatprep.subr.mxu0 0.0
    %1322 = vmatpush2.msra.mxu0 0.0
    %1323 = vmatprep.subr.mxu0 0.0
    %1324 = vmatpush2.msra.mxu0 0.0
    %1325 = vmatprep.subr.mxu0 0.0
    %1326 = vmatpush2.msra.mxu0 0.0
    %1327 = vmatprep.subr.mxu0 0.0
    %1328 = vmatpush2.msra.mxu0 0.0
    %1329 = vmatprep.subr.mxu0 0.0
    %1330 = vmatpush2.msra.mxu0 0.0
    %1331 = vmatprep.subr.mxu0 0.0
    %1332 = vmatpush2.msra.mxu0 0.0
    %1333 = vmatprep.subr.mxu0 0.0
    %1334 = vmatpush2.msra.mxu0 0.0
    %1335 = vmatprep.subr.mxu0 0.0
    %1336 = vmatpush2.msra.mxu0 0.0
    %1337 = vmatprep.subr.mxu0 0.0
    %1338 = vmatpush2.msra.mxu0 0.0
    %1339 = vmatprep.subr.mxu0 0.0
    %1340 = vmatpush2.msra.mxu0 0.0
    %1341 = vmatprep.subr.mxu0 0.0
    %1342 = vmatpush2.msra.mxu0 0.0
    %1343 = vmatprep.subr.mxu0 0.0
    %1344 = vmatpush2.msra.mxu0 0.0
    %1345 = vmatprep.subr.mxu0 0.0
    %1346 = vmatpush2.msra.mxu0 0.0
    %1347 = vmatprep.subr.mxu0 0.0
    %1348 = vmatpush2.msra.mxu0 0.0
    %1349 = vmatprep.mubr.f32.mxu0 0.0
    %1350 = vmatmul.mubr.f32.gmra.mxu0 %v1278
    %v1351 = vpop.f32.mrf.mxu0
    %v1352 = vadd.f32 0.0, %v1351
    %v1353 = vpop.f32.mrf.mxu0
    %v1354 = vadd.f32 0.0, %v1353
    %1355 = vdwg.mxu0
    %1356 = vmatprep.subr.mxu0 0.0
    %1357 = vmatpush1.msra.mxu0 %v99
    %1358 = vmatprep.subr.mxu0 0.0
    %1359 = vmatpush1.msra.mxu0 %v96
    %1360 = vmatprep.subr.mxu0 0.0
    %1361 = vmatpush1.msra.mxu0 %v93
    %1362 = vmatprep.subr.mxu0 0.0
    %1363 = vmatpush1.msra.mxu0 %v90
    %1364 = vmatprep.subr.mxu0 0.0
    %1365 = vmatpush1.msra.mxu0 %v87
    %1366 = vmatprep.subr.mxu0 0.0
    %1367 = vmatpush1.msra.mxu0 %v84
    %1368 = vmatprep.subr.mxu0 0.0
    %1369 = vmatpush1.msra.mxu0 %v81
    %1370 = vmatprep.subr.mxu0 0.0
    %1371 = vmatpush1.msra.mxu0 %v78
    %1372 = vmatprep.subr.mxu0 0.0
    %1373 = vmatpush1.msra.mxu0 %v75
    %1374 = vmatprep.subr.mxu0 0.0
    %1375 = vmatpush1.msra.mxu0 %v72
    %1376 = vmatprep.subr.mxu0 0.0
    %1377 = vmatpush1.msra.mxu0 %v69
    %1378 = vmatprep.subr.mxu0 0.0
    %1379 = vmatpush1.msra.mxu0 %v66
    %1380 = vmatprep.subr.mxu0 0.0
    %1381 = vmatpush1.msra.mxu0 %v63
    %1382 = vmatprep.subr.mxu0 0.0
    %1383 = vmatpush1.msra.mxu0 %v60
    %1384 = vmatprep.subr.mxu0 0.0
    %1385 = vmatpush1.msra.mxu0 %v57
    %1386 = vmatprep.subr.mxu0 0.0
    %1387 = vmatpush1.msra.mxu0 %v54
    %1388 = vmatprep.subr.mxu0 0.0
    %1389 = vmatpush2.msra.mxu0 0.0
    %1390 = vmatprep.subr.mxu0 0.0
    %1391 = vmatpush2.msra.mxu0 0.0
    %1392 = vmatprep.subr.mxu0 0.0
    %1393 = vmatpush2.msra.mxu0 0.0
    %1394 = vmatprep.subr.mxu0 0.0
    %1395 = vmatpush2.msra.mxu0 0.0
    %1396 = vmatprep.subr.mxu0 0.0
    %1397 = vmatpush2.msra.mxu0 0.0
    %1398 = vmatprep.subr.mxu0 0.0
    %1399 = vmatpush2.msra.mxu0 0.0
    %1400 = vmatprep.subr.mxu0 0.0
    %1401 = vmatpush2.msra.mxu0 0.0
    %1402 = vmatprep.subr.mxu0 0.0
    %1403 = vmatpush2.msra.mxu0 0.0
    %1404 = vmatprep.subr.mxu0 0.0
    %1405 = vmatpush2.msra.mxu0 0.0
    %1406 = vmatprep.subr.mxu0 0.0
    %1407 = vmatpush2.msra.mxu0 0.0
    %1408 = vmatprep.subr.mxu0 0.0
    %1409 = vmatpush2.msra.mxu0 0.0
    %1410 = vmatprep.subr.mxu0 0.0
    %1411 = vmatpush2.msra.mxu0 0.0
    %1412 = vmatprep.subr.mxu0 0.0
    %1413 = vmatpush2.msra.mxu0 0.0
    %1414 = vmatprep.subr.mxu0 0.0
    %1415 = vmatpush2.msra.mxu0 0.0
    %1416 = vmatprep.subr.mxu0 0.0
    %1417 = vmatpush2.msra.mxu0 0.0
    %1418 = vmatprep.subr.mxu0 0.0
    %1419 = vmatpush2.msra.mxu0 0.0
    %1420 = vmatprep.mubr.f32.mxu0 0.0
    %1421 = vmatmul.mubr.f32.gmra.mxu0 %v1278
    %v1422 = vpop.f32.mrf.mxu0
    %v1423 = vadd.f32 0.0, %v1422
    %v1424 = vpop.f32.mrf.mxu0
    %1425 = vdwg.mxu0
    %v1426 = vadd.f32 %v1282, %v1352
    %v1427 = vxor.u32 %v1426, 2147483648
    %v1428 = vmul.f32 %v1427, 1.442695
    %v1429 = vpow.pop %v1428
    %v1430 = vadd.f32 %v1429, 1.0
    %v1431 = vrcp.pop %v1430
    %v1432 = vmul.f32 1.0, %v1431
    %v1433 = vadd.f32 %v1283, %v1354
    %v1434 = vxor.u32 %v1433, 2147483648
    %v1435 = vmul.f32 %v1434, 1.442695
    %v1436 = vpow.pop %v1435
    %v1437 = vadd.f32 %v1436, 1.0
    %v1438 = vrcp.pop %v1437
    %v1439 = vmul.f32 1.0, %v1438
    %v1440 = vadd.f32 %v1423, %v105
    %v1441 = vmul.f32 %v1432, %v1440
    %v1442 = vadd.f32 %v1284, %v1441
    %v1443 = vtanh.pop %v1442
    %v1444 = vsub.f32 %v1278, %v1443
    %v1445 = vmul.f32 %v1439, %v1444
    %v1446 = vadd.f32 %v1443, %v1445
    %s1447 = scalar_lea.vmem [#allocation8], 56
    %1448 = vst [vmem:[%s1447] sm:$0xff] %v1446
    // Predicated region
    $region26: #{tpu_custom_call.1} parent=1 // pred_check
      %p1449 = pneg %p46
    $region27: #{tpu_custom_call.1} parent=1 // pred_check_branch
      %1451 = sbr.rel (%p1449) target = $region29
    $region28: #{tpu_custom_call.1} parent=1 // pred_region
      %1452 = vst [vmem:[#allocation9] sm:$0xff] %v1446
    $region29: #{tpu_custom_call.1} parent=1 // pred_fallthru
      _
    %1453 = vst [vmem:[#allocation2] sm:$0xff] %v1446
    // Predicated region
    $region30: #{tpu_custom_call.1} parent=1 // pred_check
      _
    $region31: #{tpu_custom_call.1} parent=1 // pred_check_branch
      %1455 = sbr.rel (0) target = $region33
    $region32: #{tpu_custom_call.1} parent=1 // pred_region
      %s1457 = ssub.s32 1024, 1024
      %1458 = vsyncadd [#allocation5], %s1457
      %s1459 = sshll.u32 [#allocation8], 4
      %s1460 = int_to_ptr.vmem [resolvable:$true] %s1459
      %1465 = dma.vmem_to_hbm [thread:$0]  %s1460, 1024, %s3, [#allocation5], 128, 128, 8
    $region33: #{tpu_custom_call.1} parent=1 // pred_fallthru
      _
    // Predicated region
    $region34: #{tpu_custom_call.1} parent=1 // pred_check
      _
    $region35: #{tpu_custom_call.1} parent=1 // pred_check_branch
      %1467 = sbr.rel (0) target = $region37
    $region36: #{tpu_custom_call.1} parent=1 // pred_region
      %s1469 = ssub.s32 128, 128
      %1470 = vsyncadd [#allocation10], %s1469
      %s1472 = sshll.u32 [#allocation9], 4
      %s1473 = int_to_ptr.vmem [resolvable:$true] %s1472
      %1475 = dma.vmem_to_hbm [thread:$0]  %s1473, 128, %s4, [#allocation10]
    $region37: #{tpu_custom_call.1} parent=1 // pred_fallthru
      _
    // Predicated region
    $region38: #{tpu_custom_call.1} parent=1 // pred_check
      _
    $region39: #{tpu_custom_call.1} parent=1 // pred_check_branch
      %1477 = sbr.rel (0) target = $region41
    $region40: #{tpu_custom_call.1} parent=1 // pred_region
      %1478 = dma.done [#allocation5], 1024
    $region41: #{tpu_custom_call.1} parent=1 // pred_fallthru
      _
    // Predicated region
    $region42: #{tpu_custom_call.1} parent=1 // pred_check
      _
    $region43: #{tpu_custom_call.1} parent=1 // pred_check_branch
      %1480 = sbr.rel (0) target = $region45
    $region44: #{tpu_custom_call.1} parent=1 // pred_region
      %1481 = dma.done [#allocation10], 128
    $region45: #{tpu_custom_call.1} parent=1 // pred_fallthru
      _
    %1482 = vsyncpa [#allocation4], 1
    %1483 = vsyncpa [#allocation7], 1
    %1484 = vsyncpa [#allocation5], 1
    %1485 = vsyncpa [#allocation10], 1

</llo_original>
